<compile_context>
chip_gen: v5e
topology: v5e:2x2
jax: 0.10.0
libtpu: 0.0.40
codegen_flags: <defaults>
</compile_context>

<pallas_src>
import math

import jax
import jax.numpy as jnp
from jax.experimental import pallas as pl
from jax.experimental.pallas import tpu as pltpu

DIM_C = 256 + 512 + 512         # dim_s_code in Net3.__init__ (LocalMLP dim_component)
DIM_H = 512                     # dim_style // latent_squeeze_ratio
DIM_STYLE = 512
NUM_W_LAYERS = 18
N_TOTAL = NUM_W_LAYERS * DIM_STYLE   # 9216 fused output width
N_BLK_DEFAULT = 2304                 # 4 N-blocks per component; safe on v5e/v6e/v7x
LRELU_SLOPE = 0.01                   # nn.LeakyReLU() default negative_slope

SCALE1 = 1.0 / math.sqrt(DIM_C)      # EqualLinear scale (lr_mul = 1)
SCALE2 = 1.0 / math.sqrt(DIM_H)


def _local_mlp_kernel(x_ref, w1_ref, b1_ref, w2_ref, bias2_ref, o_ref, h_ref):
    """Grid point (i, j): component i, N-block j of the fused 18*512 output.

    h_ref is a per-component VMEM scratch holding lrelu(x*s1 @ w1 + b1); it is
    computed only at j == 0 and reused for all N-blocks of that component
    (hence the j axis must stay "arbitrary").
    """
    @pl.when(pl.program_id(1) == 0)
    def _():
        # EqualLinear #1 (+ LeakyReLU), once per component.
        acc1 = jnp.dot(x_ref[0], w1_ref[0], preferred_element_type=jnp.float32)
        h = acc1 * SCALE1 + b1_ref[0, 0].astype(jnp.float32)
        h = jnp.where(h >= 0, h, LRELU_SLOPE * h)
        h_ref[...] = h.astype(h_ref.dtype)

    # EqualLinear #2 on this N-block; bias2 already contains b2 + latent_avg.
    acc2 = jnp.dot(h_ref[...], w2_ref[0], preferred_element_type=jnp.float32)
    out = acc2 * SCALE2 + bias2_ref[0, 0].astype(jnp.float32)
    o_ref[0] = out.astype(o_ref.dtype)


def net3_cal_style_codes(style_vectors, w1, b1, w2, b2, latent_avg,
                         *, n_blk=N_BLK_DEFAULT):
    """
    Args:
      style_vectors: [bs, num_comp, DIM_C]  (any float dtype)
      w1:            [num_comp, DIM_C, DIM_H]          (EqualLinear #1, in x out)
      b1:            [num_comp, DIM_H]
      w2:            [num_comp, DIM_H, NUM_W_LAYERS*DIM_STYLE]
      b2:            [num_comp, NUM_W_LAYERS*DIM_STYLE]
      latent_avg:    [NUM_W_LAYERS, DIM_STYLE]
    The compute/streaming dtype follows w1.dtype (pass bf16 weights for the
    fast path); accumulation and the output are float32.
    Returns:
      style_codes:   [bs, num_comp, NUM_W_LAYERS, DIM_STYLE] f32
    """
    bs, num_comp, _ = style_vectors.shape
    assert N_TOTAL % n_blk == 0 and n_blk % 128 == 0
    num_n_blocks = N_TOTAL // n_blk
    compute_dtype = w1.dtype

    # Component-major activations; weights in the streaming dtype.
    x_t = jnp.transpose(style_vectors, (1, 0, 2)).astype(compute_dtype)
    w1c = w1.astype(compute_dtype)
    w2c = w2.astype(compute_dtype)
    b1r = b1.astype(jnp.float32).reshape(num_comp, 1, DIM_H)
    # Fold latent_avg into b2 (broadcast over components) -> single fused bias.
    bias2 = (b2.astype(jnp.float32).reshape(num_comp, NUM_W_LAYERS, DIM_STYLE)
             + latent_avg.astype(jnp.float32)[None, :, :]
             ).reshape(num_comp, 1, N_TOTAL)

    out = pl.pallas_call(
        _local_mlp_kernel,
        out_shape=jax.ShapeDtypeStruct((num_comp, bs, N_TOTAL), jnp.float32),
        grid=(num_comp, num_n_blocks),
        in_specs=[
            pl.BlockSpec((1, bs, DIM_C), lambda i, j: (i, 0, 0)),      # x (const in j)
            pl.BlockSpec((1, DIM_C, DIM_H), lambda i, j: (i, 0, 0)),   # w1 (const in j)
            pl.BlockSpec((1, 1, DIM_H), lambda i, j: (i, 0, 0)),       # b1 (const in j)
            pl.BlockSpec((1, DIM_H, n_blk), lambda i, j: (i, 0, j)),   # w2 N-block
            pl.BlockSpec((1, 1, n_blk), lambda i, j: (i, 0, j)),       # b2 + latent_avg
        ],
        out_specs=pl.BlockSpec((1, bs, n_blk), lambda i, j: (i, 0, j)),
        scratch_shapes=[pltpu.VMEM((bs, DIM_H), compute_dtype)],       # hoisted h
        compiler_params=pltpu.CompilerParams(
            # j must be "arbitrary" (h scratch is carried across it); the
            # component axis is the megacore-parallel one.
            dimension_semantics=("parallel", "arbitrary")),
    )(x_t, w1c, b1r, w2c, bias2)

    # [num_comp, bs, 18*512] -> [bs, num_comp, 18, 512]  (tiny wrapper reshape)
    return jnp.transpose(
        out.reshape(num_comp, bs, NUM_W_LAYERS, DIM_STYLE), (1, 0, 2, 3))


def _reference(style_vectors, w1, b1, w2, b2, latent_avg, compute_dtype):
    """Pure-JAX reference mirroring LocalMLP + latent_avg add (and the same
    streaming-dtype quantization as the kernel)."""
    f32 = jnp.float32
    hp = jax.lax.Precision.HIGHEST
    x = style_vectors.astype(compute_dtype).astype(f32)
    w1f = w1.astype(compute_dtype).astype(f32)
    w2f = w2.astype(compute_dtype).astype(f32)
    codes = []
    for i in range(style_vectors.shape[1]):
        h = jnp.dot(x[:, i, :], w1f[i], precision=hp) * SCALE1 + b1[i]
        h = jnp.where(h >= 0, h, LRELU_SLOPE * h)
        h = h.astype(compute_dtype).astype(f32)
        o = jnp.dot(h, w2f[i], precision=hp) * SCALE2 + b2[i]
        codes.append(o.reshape(-1, NUM_W_LAYERS, DIM_STYLE))
    codes = jnp.stack(codes, axis=1)
    return codes + latent_avg[None, None, :, :]


if __name__ == "__main__":
    bs = 2
    num_seg_cls = 4   # opts.num_seg_cls (small for the demo)

    key = jax.random.PRNGKey(0)
    ks = jax.random.split(key, 6)

    style_vectors = jax.random.normal(ks[0], (bs, num_seg_cls, DIM_C), jnp.float32)
    # EqualLinear weights ~ N(0,1); biases small (zeros at torch init — nonzero
    # here so the bias path is exercised).  Weights stored as [in, out].
    w1 = jax.random.normal(ks[1], (num_seg_cls, DIM_C, DIM_H), jnp.float32)
    b1 = 0.1 * jax.random.normal(ks[2], (num_seg_cls, DIM_H), jnp.float32)
    w2 = jax.random.normal(ks[3], (num_seg_cls, DIM_H, NUM_W_LAYERS * DIM_STYLE),
                           jnp.float32)
    b2 = 0.1 * jax.random.normal(ks[4], (num_seg_cls, NUM_W_LAYERS * DIM_STYLE),
                                 jnp.float32)
    latent_avg = 0.1 * jax.random.normal(ks[5], (NUM_W_LAYERS, DIM_STYLE), jnp.float32)

    # --- exact f32 path (correctness check) ---
    codes_f32 = net3_cal_style_codes(style_vectors, w1, b1, w2, b2, latent_avg)
    codes_f32 = jax.block_until_ready(codes_f32)
    ref_f32 = _reference(style_vectors, w1, b1, w2, b2, latent_avg, jnp.float32)
    assert codes_f32.shape == (bs, num_seg_cls, NUM_W_LAYERS, DIM_STYLE)
    assert jnp.allclose(codes_f32, ref_f32, atol=2e-3, rtol=2e-3)

    # --- bf16 streaming path (the production / fast path) ---
    codes_bf16 = net3_cal_style_codes(
        style_vectors,
        w1.astype(jnp.bfloat16), b1,
        w2.astype(jnp.bfloat16), b2,
        latent_avg)
    codes_bf16 = jax.block_until_ready(codes_bf16)
    ref_bf16 = _reference(style_vectors, w1, b1, w2, b2, latent_avg, jnp.bfloat16)
    assert codes_bf16.shape == (bs, num_seg_cls, NUM_W_LAYERS, DIM_STYLE)
    assert jnp.allclose(codes_bf16, ref_bf16, atol=2e-2, rtol=2e-2)

    print("KERNEL_OK")
</pallas_src>

<mosaic_0001>
module attributes {stable_mosaic.version = 11 : i64} {
  func.func @_local_mlp_kernel(%arg0: i32, %arg1: i32, %arg2: memref<1x2x1280xf32, #tpu.memory_space<vmem>>, %arg3: memref<1x1280x512xf32, #tpu.memory_space<vmem>>, %arg4: memref<1x1x512xf32, #tpu.memory_space<vmem>>, %arg5: memref<1x512x2304xf32, #tpu.memory_space<vmem>>, %arg6: memref<1x1x2304xf32, #tpu.memory_space<vmem>>, %arg7: memref<1x2x2304xf32, #tpu.memory_space<vmem>>, %arg8: memref<2x512xf32, #tpu.memory_space<vmem>>) attributes {dimension_semantics = [#tpu.dimension_semantics<parallel>, #tpu.dimension_semantics<arbitrary>], iteration_bounds = array<i64: 4, 4>, scalar_prefetch = 0 : i64, scratch_operands = 1 : i64, tpu.core_type = #tpu.core_type<tc>, window_params = [{transform_indices = @transform_0, window_bounds = array<i64: 1, 2, 1280>}, {transform_indices = @transform_1, window_bounds = array<i64: 1, 1280, 512>}, {transform_indices = @transform_2, window_bounds = array<i64: 1, 1, 512>}, {transform_indices = @transform_3, window_bounds = array<i64: 1, 512, 2304>}, {transform_indices = @transform_4, window_bounds = array<i64: 1, 1, 2304>}, {transform_indices = @transform_5, window_bounds = array<i64: 1, 2, 2304>}]} {
    %c0_i32 = arith.constant 0 : i32
    %0 = arith.cmpi eq, %arg1, %c0_i32 : i32
    %1 = arith.extui %0 : i1 to i32
    %c0_i32_0 = arith.constant 0 : i32
    %2 = arith.cmpi ne, %1, %c0_i32_0 : i32
    scf.if %2 {
      %c0_12 = arith.constant 0 : index
      %c0_13 = arith.constant 0 : index
      %c0_14 = arith.constant 0 : index
      %17 = vector.load %arg2[%c0_12, %c0_13, %c0_14] : memref<1x2x1280xf32, #tpu.memory_space<vmem>>, vector<1x2x1280xf32>
      %18 = vector.shape_cast %17 : vector<1x2x1280xf32> to vector<2x1280xf32>
      %c0_15 = arith.constant 0 : index
      %c0_16 = arith.constant 0 : index
      %c0_17 = arith.constant 0 : index
      %19 = vector.load %arg3[%c0_15, %c0_16, %c0_17] : memref<1x1280x512xf32, #tpu.memory_space<vmem>>, vector<1x1280x512xf32>
      %20 = vector.shape_cast %19 : vector<1x1280x512xf32> to vector<1280x512xf32>
      %cst_18 = arith.constant dense<0.000000e+00> : vector<2x512xf32>
      %21 = tpu.matmul %18, %20, %cst_18 {dimension_numbers = #tpu.dot_dimension_numbers<[1], [0], [0], [1], [0, 0, 1, 1], [], []>} : vector<2x1280xf32>, vector<1280x512xf32>, vector<2x512xf32> -> vector<2x512xf32>
      %cst_19 = arith.constant 0.0279508494 : f32
      %22 = vector.broadcast %cst_19 : f32 to vector<2x512xf32>
      %23 = arith.mulf %21, %22 : vector<2x512xf32>
      %c0_20 = arith.constant 0 : index
      %c0_21 = arith.constant 0 : index
      %c0_22 = arith.constant 0 : index
      %24 = vector.load %arg4[%c0_20, %c0_21, %c0_22] : memref<1x1x512xf32, #tpu.memory_space<vmem>>, vector<1x1x512xf32>
      %25 = vector.shape_cast %24 : vector<1x1x512xf32> to vector<512xf32>
      %26 = vector.shape_cast %25 : vector<512xf32> to vector<1x512xf32>
      %27 = vector.broadcast %26 : vector<1x512xf32> to vector<2x512xf32>
      %28 = arith.addf %23, %27 : vector<2x512xf32>
      %cst_23 = arith.constant 0.000000e+00 : f32
      %29 = vector.broadcast %cst_23 : f32 to vector<2x512xf32>
      %30 = arith.cmpf oge, %28, %29 : vector<2x512xf32>
      %cst_24 = arith.constant 0.00999999977 : f32
      %31 = vector.broadcast %cst_24 : f32 to vector<2x512xf32>
      %32 = arith.mulf %31, %28 : vector<2x512xf32>
      %33 = arith.select %30, %28, %32 : vector<2x512xi1>, vector<2x512xf32>
      %c0_25 = arith.constant 0 : index
      %c0_26 = arith.constant 0 : index
      %34 = vector.load %arg8[%c0_25, %c0_26] : memref<2x512xf32, #tpu.memory_space<vmem>>, vector<2x512xf32>
      tpu.vector_store %arg8[%c0_25, %c0_26], %33 {strides = array<i32>} : memref<2x512xf32, #tpu.memory_space<vmem>>, vector<2x512xf32>,
    } else {
    }
    %c0 = arith.constant 0 : index
    %c0_1 = arith.constant 0 : index
    %3 = vector.load %arg8[%c0, %c0_1] : memref<2x512xf32, #tpu.memory_space<vmem>>, vector<2x512xf32>
    %c0_2 = arith.constant 0 : index
    %c0_3 = arith.constant 0 : index
    %c0_4 = arith.constant 0 : index
    %4 = vector.load %arg5[%c0_2, %c0_3, %c0_4] : memref<1x512x2304xf32, #tpu.memory_space<vmem>>, vector<1x512x2304xf32>
    %5 = vector.shape_cast %4 : vector<1x512x2304xf32> to vector<512x2304xf32>
    %cst = arith.constant dense<0.000000e+00> : vector<2x2304xf32>
    %6 = tpu.matmul %3, %5, %cst {dimension_numbers = #tpu.dot_dimension_numbers<[1], [0], [0], [1], [0, 0, 1, 1], [], []>} : vector<2x512xf32>, vector<512x2304xf32>, vector<2x2304xf32> -> vector<2x2304xf32>
    %cst_5 = arith.constant 0.0441941731 : f32
    %7 = vector.broadcast %cst_5 : f32 to vector<2x2304xf32>
    %8 = arith.mulf %6, %7 : vector<2x2304xf32>
    %c0_6 = arith.constant 0 : index
    %c0_7 = arith.constant 0 : index
    %c0_8 = arith.constant 0 : index
    %9 = vector.load %arg6[%c0_6, %c0_7, %c0_8] : memref<1x1x2304xf32, #tpu.memory_space<vmem>>, vector<1x1x2304xf32>
    %10 = vector.shape_cast %9 : vector<1x1x2304xf32> to vector<2304xf32>
    %11 = vector.shape_cast %10 : vector<2304xf32> to vector<1x2304xf32>
    %12 = vector.broadcast %11 : vector<1x2304xf32> to vector<2x2304xf32>
    %13 = arith.addf %8, %12 : vector<2x2304xf32>
    %c0_9 = arith.constant 0 : index
    %c0_10 = arith.constant 0 : index
    %c0_11 = arith.constant 0 : index
    %14 = vector.load %arg7[%c0_9, %c0_10, %c0_11] : memref<1x2x2304xf32, #tpu.memory_space<vmem>>, vector<1x2x2304xf32>
    %15 = vector.shape_cast %14 : vector<1x2x2304xf32> to vector<2x2304xf32>
    %16 = vector.shape_cast %13 : vector<2x2304xf32> to vector<1x2x2304xf32>
    tpu.vector_store %arg7[%c0_9, %c0_10, %c0_11], %16 {strides = array<i32>} : memref<1x2x2304xf32, #tpu.memory_space<vmem>>, vector<1x2x2304xf32>,
    return
  }
  func.func @transform_0(%arg0: i32, %arg1: i32) -> (i32, i32, i32) {
    %c0_i32 = arith.constant 0 : i32
    %c0_i32_0 = arith.constant 0 : i32
    %c0_i32_1 = arith.constant 0 : i32
    return %arg0, %c0_i32, %c0_i32_0 : i32, i32, i32
  }
  func.func @transform_1(%arg0: i32, %arg1: i32) -> (i32, i32, i32) {
    %c0_i32 = arith.constant 0 : i32
    %c0_i32_0 = arith.constant 0 : i32
    %c0_i32_1 = arith.constant 0 : i32
    return %arg0, %c0_i32, %c0_i32_0 : i32, i32, i32
  }
  func.func @transform_2(%arg0: i32, %arg1: i32) -> (i32, i32, i32) {
    %c0_i32 = arith.constant 0 : i32
    %c0_i32_0 = arith.constant 0 : i32
    %c0_i32_1 = arith.constant 0 : i32
    return %arg0, %c0_i32, %c0_i32_0 : i32, i32, i32
  }
  func.func @transform_3(%arg0: i32, %arg1: i32) -> (i32, i32, i32) {
    %c0_i32 = arith.constant 0 : i32
    %c0_i32_0 = arith.constant 0 : i32
    return %arg0, %c0_i32, %arg1 : i32, i32, i32
  }
  func.func @transform_4(%arg0: i32, %arg1: i32) -> (i32, i32, i32) {
    %c0_i32 = arith.constant 0 : i32
    %c0_i32_0 = arith.constant 0 : i32
    return %arg0, %c0_i32, %arg1 : i32, i32, i32
  }
  func.func @transform_5(%arg0: i32, %arg1: i32) -> (i32, i32, i32) {
    %c0_i32 = arith.constant 0 : i32
    %c0_i32_0 = arith.constant 0 : i32
    return %arg0, %c0_i32, %arg1 : i32, i32, i32
  }
}

</mosaic_0001>

<llo_original>
// kernel: tpu_custom_call.1
$region0: #{tpu_custom_call.1}
  #allocation0 [shape = 'u32[]', space=smem, size = 0x4, offset = 0x4, fixed_abs, tag = 'smem constant byte address 0x4 - core index']
  #allocation1 [shape = 'u32[72,128]{1,0:T(1,128)}', space=vmem, size = 0x9000, scoped, tag = 'internal scratch']
  #allocation2 [shape = 'f32[2,512]{1,0:T(2,128)}', space=vmem, size = 0x1000, scoped, tag = 'scratch operand']
  %s0 = inlined_call_operand.hbm [shape: f32[4,2,1280], index: 0, kind: input, shape index: {}]
  %s1 = inlined_call_operand.hbm [shape: f32[4,1280,512], index: 1, kind: input, shape index: {}]
  %s2 = inlined_call_operand.hbm [shape: f32[4,1,512], index: 2, kind: input, shape index: {}]
  %s3 = inlined_call_operand.hbm [shape: f32[4,512,9216], index: 3, kind: input, shape index: {}]
  %s4 = inlined_call_operand.hbm [shape: f32[4,1,9216], index: 4, kind: input, shape index: {}]
  %s5 = inlined_call_operand.hbm [shape: f32[4,2,9216], index: 5, kind: output, shape index: {}]
  %s6 = sld [smem:[#allocation0]]
  $region77: #{tpu_custom_call.1} parent=0
    _
  %s8 = ssub.s32 1, %s6
  %s9 = scalar_select 0, %s8, %s6
  $region1: #{tpu_custom_call.1} parent=0
    #allocation3 [shape = 'u8[20480]{0}', space=vmem, size = 0x5000, scoped, tag = 'input window, operand 0']
    #allocation4 [shape = 's32[2]{0}', space=sflag, size = 0x8, scoped, tag = 'scoped memory for tpu_custom_call.1']
    #allocation5 [shape = 's32[2]{0}', space=sflag, size = 0x8, scoped, tag = 'scoped memory for tpu_custom_call.1']
    #allocation6 [shape = 'u8[5242880]{0}', space=vmem, size = 0x500000, scoped, tag = 'input window, operand 1']
    #allocation7 [shape = 's32[2]{0}', space=sflag, size = 0x8, scoped, tag = 'scoped memory for tpu_custom_call.1']
    #allocation8 [shape = 'u8[4096]{0}', space=vmem, size = 0x1000, scoped, tag = 'input window, operand 2']
    #allocation9 [shape = 'u8[9437184]{0}', space=vmem, size = 0x900000, scoped, tag = 'input window, operand 3']
    #allocation10 [shape = 's32[2]{0}', space=sflag, size = 0x8, scoped, tag = 'scoped memory for tpu_custom_call.1']
    #allocation11 [shape = 'u8[18432]{0}', space=vmem, size = 0x4800, scoped, tag = 'input window, operand 4']
    #allocation12 [shape = 'u8[36864]{0}', space=vmem, size = 0x9000, scoped, tag = 'output window, operand 0']
    %10 = vsyncpa [#allocation4], 0
    %s11 = scalar_lea.sflag [#allocation4], 1
    %12 = vsyncpa %s11, 0
    %13 = vsyncpa [#allocation7], 0
    %s14 = scalar_lea.sflag [#allocation7], 1
    %15 = vsyncpa %s14, 0
    %16 = vsyncpa [#allocation10], 0
    %s17 = scalar_lea.sflag [#allocation10], 1
    %18 = vsyncpa %s17, 0
    %19 = vsyncpa [#allocation5], 0
    %s20 = scalar_lea.sflag [#allocation5], 1
    %21 = vsyncpa %s20, 0
    loop: start=0, step=1, limit=18
    $region2: #{tpu_custom_call.1} parent=1 // loop_pre_header
      _
    $region3: #{tpu_custom_call.1} parent=1 // loop_header
      %s23 = sphi 0, %s27
      %p24 = scmp.ge.s32.totalorder %s23, 18
      %s30 = sphi 0, %s42
      %s31 = sphi 0, %s38
      %s32 = sphi 0, %s30
      %s33 = sphi 0, %s31
      %s34 = sphi 0, %s32
      %s35 = sphi 0, %s33
      %s45 = sphi 0, %s47
      %s48 = sphi 0, %s45
      %s49 = sphi 0, %s48
      %s65 = sphi 0, %s49
      %s71 = sphi 0, %s73
      %s74 = sphi 0, %s71
      %s75 = sphi 0, %s74
      %s91 = sphi 0, %s75
      %s97 = sphi 0, %s99
      %s100 = sphi 0, %s97
      %s101 = sphi 0, %s100
      %s117 = sphi 0, %s101
      %s125 = sphi 0, %s127
      %s128 = sphi 0, %s125
      %s129 = sphi 0, %s128
      %s145 = sphi 0, %s129
      %s153 = sphi 0, %s155
      %s156 = sphi 0, %s153
      %s157 = sphi 0, %s156
      %s173 = sphi 0, %s157
      %s181 = sphi 0, %s183
      %s184 = sphi 0, %s181
      %s185 = sphi 0, %s184
      %s201 = sphi 0, %s185
    $region4: #{tpu_custom_call.1} parent=1 // loop_header_branch
      %26 = sbr.rel (%p24) target = $region8
    $region5: #{tpu_custom_call.1} parent=1 // loop_body
      %s28 = ssub.s32 %s23, 1
      %s29 = ssub.s32 %s23, 2
      %s36 = sadd.s32 1, %s31
      %p37 = scmp.ge.s32.totalorder %s36, 4
      %s38 = scalar_select %p37, 0, %s36
      %s39 = sadd.s32 1, %s30
      %s40 = scalar_select %p37, %s39, %s30
      %p41 = scmp.ge.s32.totalorder %s40, 4
      %s42 = scalar_select %p41, 0, %s40
      %s43 = ssub.s32 %s30, %s42
      %p44 = scmp.eq.s32.totalorder %s43, 0
      %s46 = sadd.s32 %s45, 1
      %s47 = scalar_select %p44, %s45, %s46
      %p50 = pneg %p44
      %p51 = scmp.eq.s32.totalorder %s23, 15
      %p52 = por %p50, %p51
      %p53 = scmp.ne.s32.totalorder %s45, %s48
      %p54 = scmp.eq.s32.totalorder %s23, 0
      %p55 = por %p53, %p54
      %p56 = scmp.ne.s32.totalorder %s45, %s48
      %p57 = scmp.eq.s32.totalorder %s28, 15
      %p58 = por %p56, %p57
      %p59 = scmp.ne.s32.totalorder %s48, %s49
      %p60 = scmp.eq.s32.totalorder %s28, 0
      %p61 = por %p59, %p60
      %p62 = scmp.ne.s32.totalorder %s48, %s49
      %p63 = scmp.eq.s32.totalorder %s29, 15
      %p64 = por %p62, %p63
      %p66 = scmp.ne.s32.totalorder %s49, %s65
      %p67 = scmp.eq.s32.totalorder %s29, 0
      %p68 = por %p66, %p67
      %s69 = ssub.s32 %s30, %s42
      %p70 = scmp.eq.s32.totalorder %s69, 0
      %s72 = sadd.s32 %s71, 1
      %s73 = scalar_select %p70, %s71, %s72
      %p76 = pneg %p70
      %p77 = scmp.eq.s32.totalorder %s23, 15
      %p78 = por %p76, %p77
      %p79 = scmp.ne.s32.totalorder %s71, %s74
      %p80 = scmp.eq.s32.totalorder %s23, 0
      %p81 = por %p79, %p80
      %p82 = scmp.ne.s32.totalorder %s71, %s74
      %p83 = scmp.eq.s32.totalorder %s28, 15
      %p84 = por %p82, %p83
      %p85 = scmp.ne.s32.totalorder %s74, %s75
      %p86 = scmp.eq.s32.totalorder %s28, 0
      %p87 = por %p85, %p86
      %p88 = scmp.ne.s32.totalorder %s74, %s75
      %p89 = scmp.eq.s32.totalorder %s29, 15
      %p90 = por %p88, %p89
      %p92 = scmp.ne.s32.totalorder %s75, %s91
      %p93 = scmp.eq.s32.totalorder %s29, 0
      %p94 = por %p92, %p93
      %s95 = ssub.s32 %s30, %s42
      %p96 = scmp.eq.s32.totalorder %s95, 0
      %s98 = sadd.s32 %s97, 1
      %s99 = scalar_select %p96, %s97, %s98
      %p102 = pneg %p96
      %p103 = scmp.eq.s32.totalorder %s23, 15
      %p104 = por %p102, %p103
      %p105 = scmp.ne.s32.totalorder %s97, %s100
      %p106 = scmp.eq.s32.totalorder %s23, 0
      %p107 = por %p105, %p106
      %p108 = scmp.ne.s32.totalorder %s97, %s100
      %p109 = scmp.eq.s32.totalorder %s28, 15
      %p110 = por %p108, %p109
      %p111 = scmp.ne.s32.totalorder %s100, %s101
      %p112 = scmp.eq.s32.totalorder %s28, 0
      %p113 = por %p111, %p112
      %p114 = scmp.ne.s32.totalorder %s100, %s101
      %p115 = scmp.eq.s32.totalorder %s29, 15
      %p116 = por %p114, %p115
      %p118 = scmp.ne.s32.totalorder %s101, %s117
      %p119 = scmp.eq.s32.totalorder %s29, 0
      %p120 = por %p118, %p119
      %s121 = ssub.s32 %s30, %s42
      %s122 = ssub.s32 %s31, %s38
      %s123 = sor.u32 %s121, %s122
      %p124 = scmp.eq.s32.totalorder %s123, 0
      %s126 = sadd.s32 %s125, 1
      %s127 = scalar_select %p124, %s125, %s126
      %p130 = pneg %p124
      %p131 = scmp.eq.s32.totalorder %s23, 15
      %p132 = por %p130, %p131
      %p133 = scmp.ne.s32.totalorder %s125, %s128
      %p134 = scmp.eq.s32.totalorder %s23, 0
      %p135 = por %p133, %p134
      %p136 = scmp.ne.s32.totalorder %s125, %s128
      %p137 = scmp.eq.s32.totalorder %s28, 15
      %p138 = por %p136, %p137
      %p139 = scmp.ne.s32.totalorder %s128, %s129
      %p140 = scmp.eq.s32.totalorder %s28, 0
      %p141 = por %p139, %p140
      %p142 = scmp.ne.s32.totalorder %s128, %s129
      %p143 = scmp.eq.s32.totalorder %s29, 15
      %p144 = por %p142, %p143
      %p146 = scmp.ne.s32.totalorder %s129, %s145
      %p147 = scmp.eq.s32.totalorder %s29, 0
      %p148 = por %p146, %p147
      %s149 = ssub.s32 %s30, %s42
      %s150 = ssub.s32 %s31, %s38
      %s151 = sor.u32 %s149, %s150
      %p152 = scmp.eq.s32.totalorder %s151, 0
      %s154 = sadd.s32 %s153, 1
      %s155 = scalar_select %p152, %s153, %s154
      %p158 = pneg %p152
      %p159 = scmp.eq.s32.totalorder %s23, 15
      %p160 = por %p158, %p159
      %p161 = scmp.ne.s32.totalorder %s153, %s156
      %p162 = scmp.eq.s32.totalorder %s23, 0
      %p163 = por %p161, %p162
      %p164 = scmp.ne.s32.totalorder %s153, %s156
      %p165 = scmp.eq.s32.totalorder %s28, 15
      %p166 = por %p164, %p165
      %p167 = scmp.ne.s32.totalorder %s156, %s157
      %p168 = scmp.eq.s32.totalorder %s28, 0
      %p169 = por %p167, %p168
      %p170 = scmp.ne.s32.totalorder %s156, %s157
      %p171 = scmp.eq.s32.totalorder %s29, 15
      %p172 = por %p170, %p171
      %p174 = scmp.ne.s32.totalorder %s157, %s173
      %p175 = scmp.eq.s32.totalorder %s29, 0
      %p176 = por %p174, %p175
      %s177 = ssub.s32 %s30, %s42
      %s178 = ssub.s32 %s31, %s38
      %s179 = sor.u32 %s177, %s178
      %p180 = scmp.eq.s32.totalorder %s179, 0
      %s182 = sadd.s32 %s181, 1
      %s183 = scalar_select %p180, %s181, %s182
      %p186 = pneg %p180
      %p187 = scmp.eq.s32.totalorder %s23, 15
      %p188 = por %p186, %p187
      %p189 = scmp.ne.s32.totalorder %s181, %s184
      %p190 = scmp.eq.s32.totalorder %s23, 0
      %p191 = por %p189, %p190
      %p192 = scmp.ne.s32.totalorder %s181, %s184
      %p193 = scmp.eq.s32.totalorder %s28, 15
      %p194 = por %p192, %p193
      %p195 = scmp.ne.s32.totalorder %s184, %s185
      %p196 = scmp.eq.s32.totalorder %s28, 0
      %p197 = por %p195, %p196
      %p198 = scmp.ne.s32.totalorder %s184, %s185
      %p199 = scmp.eq.s32.totalorder %s29, 15
      %p200 = por %p198, %p199
      %p202 = scmp.ne.s32.totalorder %s185, %s201
      %p203 = scmp.eq.s32.totalorder %s29, 0
      %p204 = por %p202, %p203
      %p205 = scmp.le.s32.totalorder 1, %s23
      %p206 = scmp.lt.s32.totalorder %s23, 17
      %p207 = pnand %p205, %p206
      %p208 = pneg %p207
      // Predicated region
      $region9: #{tpu_custom_call.1} parent=5 // pred_check
        _
      $region10: #{tpu_custom_call.1} parent=5 // pred_check_branch
        %210 = sbr.rel (%p207) target = $region12
      $region11: #{tpu_custom_call.1} parent=5 // pred_region
        %s211 = ssub.s32 %s23, 1
      $region12: #{tpu_custom_call.1} parent=5 // pred_fallthru
        _
      %p212 = scmp.lt.s32.totalorder %s23, 16
      // Predicated region
      $region13: #{tpu_custom_call.1} parent=5 // pred_check
        %p213 = pneg %p212
      $region14: #{tpu_custom_call.1} parent=5 // pred_check_branch
        %215 = sbr.rel (%p213) target = $region16
      $region15: #{tpu_custom_call.1} parent=5 // pred_region
        // Predicated region
        $region17: #{tpu_custom_call.1} parent=15 // pred_check
          %p216 = pneg %p55
        $region18: #{tpu_custom_call.1} parent=15 // pred_check_branch
          %218 = sbr.rel (%p216) target = $region20
        $region19: #{tpu_custom_call.1} parent=15 // pred_region
          %s219 = sand.u32 %s45, 1
          %s220 = scalar_lea.sflag [#allocation4], %s219
          %s221 = sand.u32 %s45, 1
          %s222 = smul.addr %s221, 20
          %s223 = scalar_lea.vmem [#allocation3], %s222
          %225 = vsyncadd %s220, 0
          %s226 = smul.addr %s30, 10
          %s227 = smul.addr %s226, 2
          %s228 = scalar_lea.hbm %s0, %s227
          %s230 = sshll.u32 %s228, 4
          %s231 = int_to_ptr.hbm [resolvable:$true] %s230
          %s232 = sshll.u32 %s223, 4
          %s233 = int_to_ptr.vmem [resolvable:$true] %s232
          %235 = dma.hbm_to_vmem [thread:$0]  %s231, 320, %s233, %s220
        $region20: #{tpu_custom_call.1} parent=15 // pred_fallthru
          _
        // Predicated region
        $region21: #{tpu_custom_call.1} parent=15 // pred_check
          %p236 = pneg %p81
        $region22: #{tpu_custom_call.1} parent=15 // pred_check_branch
          %238 = sbr.rel (%p236) target = $region24
        $region23: #{tpu_custom_call.1} parent=15 // pred_region
          %s239 = sand.u32 %s23, 1
          %s240 = scalar_lea.sflag [#allocation7], %s239
          %s241 = sand.u32 %s71, 1
          %s242 = smul.addr %s241, 5120
          %s243 = scalar_lea.vmem [#allocation6], %s242
          %245 = vsyncadd %s240, 0
          %s246 = smul.addr %s30, 640
          %s247 = smul.addr %s246, 8
          %s248 = scalar_lea.hbm %s1, %s247
          %s249 = sshll.u32 %s248, 4
          %s250 = int_to_ptr.hbm [resolvable:$true] %s249
          %s251 = sshll.u32 %s243, 4
          %s252 = int_to_ptr.vmem [resolvable:$true] %s251
          %257 = dma.hbm_to_vmem [thread:$0]  %s250, 81920, %s252, %s240, 512, 512, 32
        $region24: #{tpu_custom_call.1} parent=15 // pred_fallthru
          _
        // Predicated region
        $region25: #{tpu_custom_call.1} parent=15 // pred_check
          %p258 = pneg %p107
        $region26: #{tpu_custom_call.1} parent=15 // pred_check_branch
          %260 = sbr.rel (%p258) target = $region28
        $region27: #{tpu_custom_call.1} parent=15 // pred_region
          %s261 = sand.u32 %s23, 1
          %s262 = scalar_lea.sflag [#allocation7], %s261
          %s263 = sand.u32 %s97, 1
          %s264 = smul.addr %s263, 4
          %s265 = scalar_lea.vmem [#allocation8], %s264
          %267 = vsyncadd %s262, 0
          %s268 = smul.addr %s30, 4
          %s269 = scalar_lea.hbm %s2, %s268
          %s271 = sshll.u32 %s269, 4
          %s272 = int_to_ptr.hbm [resolvable:$true] %s271
          %s273 = sshll.u32 %s265, 4
          %s274 = int_to_ptr.vmem [resolvable:$true] %s273
          %276 = dma.hbm_to_vmem [thread:$0]  %s272, 64, %s274, %s262
        $region28: #{tpu_custom_call.1} parent=15 // pred_fallthru
          _
        // Predicated region
        $region29: #{tpu_custom_call.1} parent=15 // pred_check
          %p277 = pneg %p135
        $region30: #{tpu_custom_call.1} parent=15 // pred_check_branch
          %279 = sbr.rel (%p277) target = $region32
        $region31: #{tpu_custom_call.1} parent=15 // pred_region
          %s280 = sand.u32 %s23, 1
          %s281 = scalar_lea.sflag [#allocation10], %s280
          %s282 = sand.u32 %s125, 1
          %s283 = smul.addr %s282, 9216
          %s284 = scalar_lea.vmem [#allocation9], %s283
          %s285 = smul.u32 18, %s31
          %287 = vsyncadd %s281, 0
          %s288 = smul.addr %s30, 4608
          %s289 = sadd.s32 %s285, %s288
          %s290 = smul.addr %s289, 8
          %s291 = scalar_lea.hbm %s3, %s290
          %s292 = sshll.u32 %s291, 4
          %s293 = int_to_ptr.hbm [resolvable:$true] %s292
          %s294 = sshll.u32 %s284, 4
          %s295 = int_to_ptr.vmem [resolvable:$true] %s294
          %300 = dma.hbm_to_vmem [thread:$0]  %s293, 147456, %s295, %s281, 9216, 2304, 144
        $region32: #{tpu_custom_call.1} parent=15 // pred_fallthru
          _
        // Predicated region
        $region33: #{tpu_custom_call.1} parent=15 // pred_check
          %p301 = pneg %p163
        $region34: #{tpu_custom_call.1} parent=15 // pred_check_branch
          %303 = sbr.rel (%p301) target = $region36
        $region35: #{tpu_custom_call.1} parent=15 // pred_region
          %s304 = sand.u32 %s23, 1
          %s305 = scalar_lea.sflag [#allocation10], %s304
          %s306 = sand.u32 %s153, 1
          %s307 = smul.addr %s306, 18
          %s308 = scalar_lea.vmem [#allocation11], %s307
          %s309 = smul.u32 18, %s31
          %311 = vsyncadd %s305, 0
          %s312 = smul.addr %s30, 72
          %s313 = sadd.s32 %s309, %s312
          %s314 = scalar_lea.hbm %s4, %s313
          %s316 = sshll.u32 %s314, 4
          %s317 = int_to_ptr.hbm [resolvable:$true] %s316
          %s318 = sshll.u32 %s308, 4
          %s319 = int_to_ptr.vmem [resolvable:$true] %s318
          %321 = dma.hbm_to_vmem [thread:$0]  %s317, 288, %s319, %s305
        $region36: #{tpu_custom_call.1} parent=15 // pred_fallthru
          _
      $region16: #{tpu_custom_call.1} parent=5 // pred_fallthru
        _
      %p322 = scmp.le.s32.totalorder 1, %s23
      %p323 = scmp.lt.s32.totalorder %s23, 17
      %p324 = pnand %p322, %p323
      %p325 = pneg %p324
      // Predicated region
      $region37: #{tpu_custom_call.1} parent=5 // pred_check
        _
      $region38: #{tpu_custom_call.1} parent=5 // pred_check_branch
        %327 = sbr.rel (%p324) target = $region40
      $region39: #{tpu_custom_call.1} parent=5 // pred_region
        %s328 = ssub.s32 %s23, 1
        %s329 = sand.u32 %s48, 1
        %s330 = scalar_lea.sflag [#allocation4], %s329
        %s331 = sand.u32 %s48, 1
        %s332 = smul.addr %s331, 20
        %s333 = scalar_lea.vmem [#allocation3], %s332
        // Predicated region
        $region41: #{tpu_custom_call.1} parent=39 // pred_check
          %p334 = pneg %p61
        $region42: #{tpu_custom_call.1} parent=39 // pred_check_branch
          %336 = sbr.rel (%p334) target = $region44
        $region43: #{tpu_custom_call.1} parent=39 // pred_region
          %338 = dma.done %s330, 320
        $region44: #{tpu_custom_call.1} parent=39 // pred_fallthru
          _
        %s339 = sand.u32 %s28, 1
        %s340 = scalar_lea.sflag [#allocation7], %s339
        %s341 = sand.u32 %s74, 1
        %s342 = smul.addr %s341, 5120
        %s343 = scalar_lea.vmem [#allocation6], %s342
        // Predicated region
        $region45: #{tpu_custom_call.1} parent=39 // pred_check
          %p344 = pneg %p87
        $region46: #{tpu_custom_call.1} parent=39 // pred_check_branch
          %346 = sbr.rel (%p344) target = $region48
        $region47: #{tpu_custom_call.1} parent=39 // pred_region
          %348 = dma.done %s340, 81920
        $region48: #{tpu_custom_call.1} parent=39 // pred_fallthru
          _
        %s349 = sand.u32 %s28, 1
        %s350 = scalar_lea.sflag [#allocation7], %s349
        %s351 = sand.u32 %s100, 1
        %s352 = smul.addr %s351, 4
        %s353 = scalar_lea.vmem [#allocation8], %s352
        // Predicated region
        $region49: #{tpu_custom_call.1} parent=39 // pred_check
          %p354 = pneg %p113
        $region50: #{tpu_custom_call.1} parent=39 // pred_check_branch
          %356 = sbr.rel (%p354) target = $region52
        $region51: #{tpu_custom_call.1} parent=39 // pred_region
          %358 = dma.done %s350, 64
        $region52: #{tpu_custom_call.1} parent=39 // pred_fallthru
          _
        %s359 = sand.u32 %s28, 1
        %s360 = scalar_lea.sflag [#allocation10], %s359
        %s361 = sand.u32 %s128, 1
        %s362 = smul.addr %s361, 9216
        %s363 = scalar_lea.vmem [#allocation9], %s362
        // Predicated region
        $region53: #{tpu_custom_call.1} parent=39 // pred_check
          %p364 = pneg %p141
        $region54: #{tpu_custom_call.1} parent=39 // pred_check_branch
          %366 = sbr.rel (%p364) target = $region56
        $region55: #{tpu_custom_call.1} parent=39 // pred_region
          %368 = dma.done %s360, 147456
        $region56: #{tpu_custom_call.1} parent=39 // pred_fallthru
          _
        %s369 = sand.u32 %s28, 1
        %s370 = scalar_lea.sflag [#allocation10], %s369
        %s371 = sand.u32 %s156, 1
        %s372 = smul.addr %s371, 18
        %s373 = scalar_lea.vmem [#allocation11], %s372
        // Predicated region
        $region57: #{tpu_custom_call.1} parent=39 // pred_check
          %p374 = pneg %p169
        $region58: #{tpu_custom_call.1} parent=39 // pred_check_branch
          %376 = sbr.rel (%p374) target = $region60
        $region59: #{tpu_custom_call.1} parent=39 // pred_region
          %378 = dma.done %s370, 288
        $region60: #{tpu_custom_call.1} parent=39 // pred_fallthru
          _
        %s379 = sand.u32 %s48, 1
        %s380 = scalar_lea.sflag [#allocation4], %s379
        %s381 = sand.u32 %s48, 1
        %s382 = smul.addr %s381, 20
        %s383 = scalar_lea.vmem [#allocation3], %s382
        %p384 = pneg %p61
        %p385 = pneg %p58
        %s386 = sand.u32 %s28, 1
        %s387 = scalar_lea.sflag [#allocation7], %s386
        %s388 = sand.u32 %s74, 1
        %s389 = smul.addr %s388, 5120
        %s390 = scalar_lea.vmem [#allocation6], %s389
        %p391 = pneg %p87
        %p392 = pneg %p84
        %s393 = sand.u32 %s28, 1
        %s394 = scalar_lea.sflag [#allocation7], %s393
        %s395 = sand.u32 %s100, 1
        %s396 = smul.addr %s395, 4
        %s397 = scalar_lea.vmem [#allocation8], %s396
        %p398 = pneg %p113
        %p399 = pneg %p110
        %s400 = sand.u32 %s28, 1
        %s401 = scalar_lea.sflag [#allocation10], %s400
        %s402 = sand.u32 %s128, 1
        %s403 = smul.addr %s402, 9216
        %s404 = scalar_lea.vmem [#allocation9], %s403
        %p405 = pneg %p141
        %p406 = pneg %p138
        %s407 = sand.u32 %s28, 1
        %s408 = scalar_lea.sflag [#allocation10], %s407
        %s409 = sand.u32 %s156, 1
        %s410 = smul.addr %s409, 18
        %s411 = scalar_lea.vmem [#allocation11], %s410
        %p412 = pneg %p169
        %p413 = pneg %p166
        %p414 = pneg %p197
        %p415 = pneg %p194
        %s416 = sand.u32 %s184, 1
        %s417 = scalar_lea.sflag [#allocation5], %s416
        %s418 = sand.u32 %s184, 1
        %s419 = smul.addr %s418, 36
        %s420 = scalar_lea.vmem [#allocation12], %s419
        %s421 = smul.u32 18, %s33
        %s422 = smul.u32 18, %s33
        %s423 = smul.u32 18, %s33
        %p424 = scmp.eq.s32.totalorder %s33, 0
        // Predicated region
        $region61: #{tpu_custom_call.1} parent=39 // pred_check
          %p425 = pneg %p424
        $region62: #{tpu_custom_call.1} parent=39 // pred_check_branch
          %427 = sbr.rel (%p425) target = $region64
        $region63: #{tpu_custom_call.1} parent=39 // pred_region
          %v428 = vld [vmem:[%s333] sm:$0xff]
          %v429 = vld [vmem:[%s333 + $0x8] sm:$0xff]
          %v430 = vld [vmem:[%s333 + $0x10] sm:$0xf]
          %v431 = vld [vmem:[%s343] sm:$0xff]
          %v432 = vld [vmem:[%s343 + $0x8] sm:$0xff]
          %v433 = vld [vmem:[%s343 + $0x10] sm:$0xff]
          %v434 = vld [vmem:[%s343 + $0x18] sm:$0xff]
          %v435 = vld [vmem:[%s343 + $0x20] sm:$0xff]
          %v436 = vld [vmem:[%s343 + $0x28] sm:$0xff]
          %v437 = vld [vmem:[%s343 + $0x30] sm:$0xff]
          %v438 = vld [vmem:[%s343 + $0x38] sm:$0xff]
          %v439 = vld [vmem:[%s343 + $0x40] sm:$0xff]
          %v440 = vld [vmem:[%s343 + $0x48] sm:$0xff]
          %v441 = vld [vmem:[%s343 + $0x50] sm:$0xff]
          %v442 = vld [vmem:[%s343 + $0x58] sm:$0xff]
          %v443 = vld [vmem:[%s343 + $0x60] sm:$0xff]
          %v444 = vld [vmem:[%s343 + $0x68] sm:$0xff]
          %v445 = vld [vmem:[%s343 + $0x70] sm:$0xff]
          %v446 = vld [vmem:[%s343 + $0x78] sm:$0xff]
          %v447 = vld [vmem:[%s343 + $0x80] sm:$0xff]
          %v448 = vld [vmem:[%s343 + $0x88] sm:$0xff]
          %v449 = vld [vmem:[%s343 + $0x90] sm:$0xff]
          %v450 = vld [vmem:[%s343 + $0x98] sm:$0xff]
          %v451 = vld [vmem:[%s343 + $0xa0] sm:$0xff]
          %v452 = vld [vmem:[%s343 + $0xa8] sm:$0xff]
          %v453 = vld [vmem:[%s343 + $0xb0] sm:$0xff]
          %v454 = vld [vmem:[%s343 + $0xb8] sm:$0xff]
          %v455 = vld [vmem:[%s343 + $0xc0] sm:$0xff]
          %v456 = vld [vmem:[%s343 + $0xc8] sm:$0xff]
          %v457 = vld [vmem:[%s343 + $0xd0] sm:$0xff]
          %v458 = vld [vmem:[%s343 + $0xd8] sm:$0xff]
          %v459 = vld [vmem:[%s343 + $0xe0] sm:$0xff]
          %v460 = vld [vmem:[%s343 + $0xe8] sm:$0xff]
          %v461 = vld [vmem:[%s343 + $0xf0] sm:$0xff]
          %v462 = vld [vmem:[%s343 + $0xf8] sm:$0xff]
          %v463 = vld [vmem:[%s343 + $0x100] sm:$0xff]
          %v464 = vld [vmem:[%s343 + $0x108] sm:$0xff]
          %v465 = vld [vmem:[%s343 + $0x110] sm:$0xff]
          %v466 = vld [vmem:[%s343 + $0x118] sm:$0xff]
          %v467 = vld [vmem:[%s343 + $0x120] sm:$0xff]
          %v468 = vld [vmem:[%s343 + $0x128] sm:$0xff]
          %v469 = vld [vmem:[%s343 + $0x130] sm:$0xff]
          %v470 = vld [vmem:[%s343 + $0x138] sm:$0xff]
          %v471 = vld [vmem:[%s343 + $0x140] sm:$0xff]
          %v472 = vld [vmem:[%s343 + $0x148] sm:$0xff]
          %v473 = vld [vmem:[%s343 + $0x150] sm:$0xff]
          %v474 = vld [vmem:[%s343 + $0x158] sm:$0xff]
          %v475 = vld [vmem:[%s343 + $0x160] sm:$0xff]
          %v476 = vld [vmem:[%s343 + $0x168] sm:$0xff]
          %v477 = vld [vmem:[%s343 + $0x170] sm:$0xff]
          %v478 = vld [vmem:[%s343 + $0x178] sm:$0xff]
          %v479 = vld [vmem:[%s343 + $0x180] sm:$0xff]
          %v480 = vld [vmem:[%s343 + $0x188] sm:$0xff]
          %v481 = vld [vmem:[%s343 + $0x190] sm:$0xff]
          %v482 = vld [vmem:[%s343 + $0x198] sm:$0xff]
          %v483 = vld [vmem:[%s343 + $0x1a0] sm:$0xff]
          %v484 = vld [vmem:[%s343 + $0x1a8] sm:$0xff]
          %v485 = vld [vmem:[%s343 + $0x1b0] sm:$0xff]
          %v486 = vld [vmem:[%s343 + $0x1b8] sm:$0xff]
          %v487 = vld [vmem:[%s343 + $0x1c0] sm:$0xff]
          %v488 = vld [vmem:[%s343 + $0x1c8] sm:$0xff]
          %v489 = vld [vmem:[%s343 + $0x1d0] sm:$0xff]
          %v490 = vld [vmem:[%s343 + $0x1d8] sm:$0xff]
          %v491 = vld [vmem:[%s343 + $0x1e0] sm:$0xff]
          %v492 = vld [vmem:[%s343 + $0x1e8] sm:$0xff]
          %v493 = vld [vmem:[%s343 + $0x1f0] sm:$0xff]
          %v494 = vld [vmem:[%s343 + $0x1f8] sm:$0xff]
          %v495 = vld [vmem:[%s343 + $0x200] sm:$0xff]
          %v496 = vld [vmem:[%s343 + $0x208] sm:$0xff]
          %v497 = vld [vmem:[%s343 + $0x210] sm:$0xff]
          %v498 = vld [vmem:[%s343 + $0x218] sm:$0xff]
          %v499 = vld [vmem:[%s343 + $0x220] sm:$0xff]
          %v500 = vld [vmem:[%s343 + $0x228] sm:$0xff]
          %v501 = vld [vmem:[%s343 + $0x230] sm:$0xff]
          %v502 = vld [vmem:[%s343 + $0x238] sm:$0xff]
          %v503 = vld [vmem:[%s343 + $0x240] sm:$0xff]
          %v504 = vld [vmem:[%s343 + $0x248] sm:$0xff]
          %v505 = vld [vmem:[%s343 + $0x250] sm:$0xff]
          %v506 = vld [vmem:[%s343 + $0x258] sm:$0xff]
          %v507 = vld [vmem:[%s343 + $0x260] sm:$0xff]
          %v508 = vld [vmem:[%s343 + $0x268] sm:$0xff]
          %v509 = vld [vmem:[%s343 + $0x270] sm:$0xff]
          %v510 = vld [vmem:[%s343 + $0x278] sm:$0xff]
          %v511 = vld [vmem:[%s343 + $0x280] sm:$0xff]
          %v512 = vld [vmem:[%s343 + $0x288] sm:$0xff]
          %v513 = vld [vmem:[%s343 + $0x290] sm:$0xff]
          %v514 = vld [vmem:[%s343 + $0x298] sm:$0xff]
          %v515 = vld [vmem:[%s343 + $0x2a0] sm:$0xff]
          %v516 = vld [vmem:[%s343 + $0x2a8] sm:$0xff]
          %v517 = vld [vmem:[%s343 + $0x2b0] sm:$0xff]
          %v518 = vld [vmem:[%s343 + $0x2b8] sm:$0xff]
          %v519 = vld [vmem:[%s343 + $0x2c0] sm:$0xff]
          %v520 = vld [vmem:[%s343 + $0x2c8] sm:$0xff]
          %v521 = vld [vmem:[%s343 + $0x2d0] sm:$0xff]
          %v522 = vld [vmem:[%s343 + $0x2d8] sm:$0xff]
          %v523 = vld [vmem:[%s343 + $0x2e0] sm:$0xff]
          %v524 = vld [vmem:[%s343 + $0x2e8] sm:$0xff]
          %v525 = vld [vmem:[%s343 + $0x2f0] sm:$0xff]
          %v526 = vld [vmem:[%s343 + $0x2f8] sm:$0xff]
          %v527 = vld [vmem:[%s343 + $0x300] sm:$0xff]
          %v528 = vld [vmem:[%s343 + $0x308] sm:$0xff]
          %v529 = vld [vmem:[%s343 + $0x310] sm:$0xff]
          %v530 = vld [vmem:[%s343 + $0x318] sm:$0xff]
          %v531 = vld [vmem:[%s343 + $0x320] sm:$0xff]
          %v532 = vld [vmem:[%s343 + $0x328] sm:$0xff]
          %v533 = vld [vmem:[%s343 + $0x330] sm:$0xff]
          %v534 = vld [vmem:[%s343 + $0x338] sm:$0xff]
          %v535 = vld [vmem:[%s343 + $0x340] sm:$0xff]
          %v536 = vld [vmem:[%s343 + $0x348] sm:$0xff]
          %v537 = vld [vmem:[%s343 + $0x350] sm:$0xff]
          %v538 = vld [vmem:[%s343 + $0x358] sm:$0xff]
          %v539 = vld [vmem:[%s343 + $0x360] sm:$0xff]
          %v540 = vld [vmem:[%s343 + $0x368] sm:$0xff]
          %v541 = vld [vmem:[%s343 + $0x370] sm:$0xff]
          %v542 = vld [vmem:[%s343 + $0x378] sm:$0xff]
          %v543 = vld [vmem:[%s343 + $0x380] sm:$0xff]
          %v544 = vld [vmem:[%s343 + $0x388] sm:$0xff]
          %v545 = vld [vmem:[%s343 + $0x390] sm:$0xff]
          %v546 = vld [vmem:[%s343 + $0x398] sm:$0xff]
          %v547 = vld [vmem:[%s343 + $0x3a0] sm:$0xff]
          %v548 = vld [vmem:[%s343 + $0x3a8] sm:$0xff]
          %v549 = vld [vmem:[%s343 + $0x3b0] sm:$0xff]
          %v550 = vld [vmem:[%s343 + $0x3b8] sm:$0xff]
          %v551 = vld [vmem:[%s343 + $0x3c0] sm:$0xff]
          %v552 = vld [vmem:[%s343 + $0x3c8] sm:$0xff]
          %v553 = vld [vmem:[%s343 + $0x3d0] sm:$0xff]
          %v554 = vld [vmem:[%s343 + $0x3d8] sm:$0xff]
          %v555 = vld [vmem:[%s343 + $0x3e0] sm:$0xff]
          %v556 = vld [vmem:[%s343 + $0x3e8] sm:$0xff]
          %v557 = vld [vmem:[%s343 + $0x3f0] sm:$0xff]
          %v558 = vld [vmem:[%s343 + $0x3f8] sm:$0xff]
          %v559 = vld [vmem:[%s343 + $0x400] sm:$0xff]
          %v560 = vld [vmem:[%s343 + $0x408] sm:$0xff]
          %v561 = vld [vmem:[%s343 + $0x410] sm:$0xff]
          %v562 = vld [vmem:[%s343 + $0x418] sm:$0xff]
          %v563 = vld [vmem:[%s343 + $0x420] sm:$0xff]
          %v564 = vld [vmem:[%s343 + $0x428] sm:$0xff]
          %v565 = vld [vmem:[%s343 + $0x430] sm:$0xff]
          %v566 = vld [vmem:[%s343 + $0x438] sm:$0xff]
          %v567 = vld [vmem:[%s343 + $0x440] sm:$0xff]
          %v568 = vld [vmem:[%s343 + $0x448] sm:$0xff]
          %v569 = vld [vmem:[%s343 + $0x450] sm:$0xff]
          %v570 = vld [vmem:[%s343 + $0x458] sm:$0xff]
          %v571 = vld [vmem:[%s343 + $0x460] sm:$0xff]
          %v572 = vld [vmem:[%s343 + $0x468] sm:$0xff]
          %v573 = vld [vmem:[%s343 + $0x470] sm:$0xff]
          %v574 = vld [vmem:[%s343 + $0x478] sm:$0xff]
          %v575 = vld [vmem:[%s343 + $0x480] sm:$0xff]
          %v576 = vld [vmem:[%s343 + $0x488] sm:$0xff]
          %v577 = vld [vmem:[%s343 + $0x490] sm:$0xff]
          %v578 = vld [vmem:[%s343 + $0x498] sm:$0xff]
          %v579 = vld [vmem:[%s343 + $0x4a0] sm:$0xff]
          %v580 = vld [vmem:[%s343 + $0x4a8] sm:$0xff]
          %v581 = vld [vmem:[%s343 + $0x4b0] sm:$0xff]
          %v582 = vld [vmem:[%s343 + $0x4b8] sm:$0xff]
          %v583 = vld [vmem:[%s343 + $0x4c0] sm:$0xff]
          %v584 = vld [vmem:[%s343 + $0x4c8] sm:$0xff]
          %v585 = vld [vmem:[%s343 + $0x4d0] sm:$0xff]
          %v586 = vld [vmem:[%s343 + $0x4d8] sm:$0xff]
          %v587 = vld [vmem:[%s343 + $0x4e0] sm:$0xff]
          %v588 = vld [vmem:[%s343 + $0x4e8] sm:$0xff]
          %v589 = vld [vmem:[%s343 + $0x4f0] sm:$0xff]
          %v590 = vld [vmem:[%s343 + $0x4f8] sm:$0xff]
          %v591 = vld [vmem:[%s343 + $0x500] sm:$0xff]
          %v592 = vld [vmem:[%s343 + $0x508] sm:$0xff]
          %v593 = vld [vmem:[%s343 + $0x510] sm:$0xff]
          %v594 = vld [vmem:[%s343 + $0x518] sm:$0xff]
          %v595 = vld [vmem:[%s343 + $0x520] sm:$0xff]
          %v596 = vld [vmem:[%s343 + $0x528] sm:$0xff]
          %v597 = vld [vmem:[%s343 + $0x530] sm:$0xff]
          %v598 = vld [vmem:[%s343 + $0x538] sm:$0xff]
          %v599 = vld [vmem:[%s343 + $0x540] sm:$0xff]
          %v600 = vld [vmem:[%s343 + $0x548] sm:$0xff]
          %v601 = vld [vmem:[%s343 + $0x550] sm:$0xff]
          %v602 = vld [vmem:[%s343 + $0x558] sm:$0xff]
          %v603 = vld [vmem:[%s343 + $0x560] sm:$0xff]
          %v604 = vld [vmem:[%s343 + $0x568] sm:$0xff]
          %v605 = vld [vmem:[%s343 + $0x570] sm:$0xff]
          %v606 = vld [vmem:[%s343 + $0x578] sm:$0xff]
          %v607 = vld [vmem:[%s343 + $0x580] sm:$0xff]
          %v608 = vld [vmem:[%s343 + $0x588] sm:$0xff]
          %v609 = vld [vmem:[%s343 + $0x590] sm:$0xff]
          %v610 = vld [vmem:[%s343 + $0x598] sm:$0xff]
          %v611 = vld [vmem:[%s343 + $0x5a0] sm:$0xff]
          %v612 = vld [vmem:[%s343 + $0x5a8] sm:$0xff]
          %v613 = vld [vmem:[%s343 + $0x5b0] sm:$0xff]
          %v614 = vld [vmem:[%s343 + $0x5b8] sm:$0xff]
          %v615 = vld [vmem:[%s343 + $0x5c0] sm:$0xff]
          %v616 = vld [vmem:[%s343 + $0x5c8] sm:$0xff]
          %v617 = vld [vmem:[%s343 + $0x5d0] sm:$0xff]
          %v618 = vld [vmem:[%s343 + $0x5d8] sm:$0xff]
          %v619 = vld [vmem:[%s343 + $0x5e0] sm:$0xff]
          %v620 = vld [vmem:[%s343 + $0x5e8] sm:$0xff]
          %v621 = vld [vmem:[%s343 + $0x5f0] sm:$0xff]
          %v622 = vld [vmem:[%s343 + $0x5f8] sm:$0xff]
          %v623 = vld [vmem:[%s343 + $0x600] sm:$0xff]
          %v624 = vld [vmem:[%s343 + $0x608] sm:$0xff]
          %v625 = vld [vmem:[%s343 + $0x610] sm:$0xff]
          %v626 = vld [vmem:[%s343 + $0x618] sm:$0xff]
          %v627 = vld [vmem:[%s343 + $0x620] sm:$0xff]
          %v628 = vld [vmem:[%s343 + $0x628] sm:$0xff]
          %v629 = vld [vmem:[%s343 + $0x630] sm:$0xff]
          %v630 = vld [vmem:[%s343 + $0x638] sm:$0xff]
          %v631 = vld [vmem:[%s343 + $0x640] sm:$0xff]
          %v632 = vld [vmem:[%s343 + $0x648] sm:$0xff]
          %v633 = vld [vmem:[%s343 + $0x650] sm:$0xff]
          %v634 = vld [vmem:[%s343 + $0x658] sm:$0xff]
          %v635 = vld [vmem:[%s343 + $0x660] sm:$0xff]
          %v636 = vld [vmem:[%s343 + $0x668] sm:$0xff]
          %v637 = vld [vmem:[%s343 + $0x670] sm:$0xff]
          %v638 = vld [vmem:[%s343 + $0x678] sm:$0xff]
          %v639 = vld [vmem:[%s343 + $0x680] sm:$0xff]
          %v640 = vld [vmem:[%s343 + $0x688] sm:$0xff]
          %v641 = vld [vmem:[%s343 + $0x690] sm:$0xff]
          %v642 = vld [vmem:[%s343 + $0x698] sm:$0xff]
          %v643 = vld [vmem:[%s343 + $0x6a0] sm:$0xff]
          %v644 = vld [vmem:[%s343 + $0x6a8] sm:$0xff]
          %v645 = vld [vmem:[%s343 + $0x6b0] sm:$0xff]
          %v646 = vld [vmem:[%s343 + $0x6b8] sm:$0xff]
          %v647 = vld [vmem:[%s343 + $0x6c0] sm:$0xff]
          %v648 = vld [vmem:[%s343 + $0x6c8] sm:$0xff]
          %v649 = vld [vmem:[%s343 + $0x6d0] sm:$0xff]
          %v650 = vld [vmem:[%s343 + $0x6d8] sm:$0xff]
          %v651 = vld [vmem:[%s343 + $0x6e0] sm:$0xff]
          %v652 = vld [vmem:[%s343 + $0x6e8] sm:$0xff]
          %v653 = vld [vmem:[%s343 + $0x6f0] sm:$0xff]
          %v654 = vld [vmem:[%s343 + $0x6f8] sm:$0xff]
          %v655 = vld [vmem:[%s343 + $0x700] sm:$0xff]
          %v656 = vld [vmem:[%s343 + $0x708] sm:$0xff]
          %v657 = vld [vmem:[%s343 + $0x710] sm:$0xff]
          %v658 = vld [vmem:[%s343 + $0x718] sm:$0xff]
          %v659 = vld [vmem:[%s343 + $0x720] sm:$0xff]
          %v660 = vld [vmem:[%s343 + $0x728] sm:$0xff]
          %v661 = vld [vmem:[%s343 + $0x730] sm:$0xff]
          %v662 = vld [vmem:[%s343 + $0x738] sm:$0xff]
          %v663 = vld [vmem:[%s343 + $0x740] sm:$0xff]
          %v664 = vld [vmem:[%s343 + $0x748] sm:$0xff]
          %v665 = vld [vmem:[%s343 + $0x750] sm:$0xff]
          %v666 = vld [vmem:[%s343 + $0x758] sm:$0xff]
          %v667 = vld [vmem:[%s343 + $0x760] sm:$0xff]
          %v668 = vld [vmem:[%s343 + $0x768] sm:$0xff]
          %v669 = vld [vmem:[%s343 + $0x770] sm:$0xff]
          %v670 = vld [vmem:[%s343 + $0x778] sm:$0xff]
          %v671 = vld [vmem:[%s343 + $0x780] sm:$0xff]
          %v672 = vld [vmem:[%s343 + $0x788] sm:$0xff]
          %v673 = vld [vmem:[%s343 + $0x790] sm:$0xff]
          %v674 = vld [vmem:[%s343 + $0x798] sm:$0xff]
          %v675 = vld [vmem:[%s343 + $0x7a0] sm:$0xff]
          %v676 = vld [vmem:[%s343 + $0x7a8] sm:$0xff]
          %v677 = vld [vmem:[%s343 + $0x7b0] sm:$0xff]
          %v678 = vld [vmem:[%s343 + $0x7b8] sm:$0xff]
          %v679 = vld [vmem:[%s343 + $0x7c0] sm:$0xff]
          %v680 = vld [vmem:[%s343 + $0x7c8] sm:$0xff]
          %v681 = vld [vmem:[%s343 + $0x7d0] sm:$0xff]
          %v682 = vld [vmem:[%s343 + $0x7d8] sm:$0xff]
          %v683 = vld [vmem:[%s343 + $0x7e0] sm:$0xff]
          %v684 = vld [vmem:[%s343 + $0x7e8] sm:$0xff]
          %v685 = vld [vmem:[%s343 + $0x7f0] sm:$0xff]
          %v686 = vld [vmem:[%s343 + $0x7f8] sm:$0xff]
          %v687 = vld [vmem:[%s343 + $0x800] sm:$0xff]
          %v688 = vld [vmem:[%s343 + $0x808] sm:$0xff]
          %v689 = vld [vmem:[%s343 + $0x810] sm:$0xff]
          %v690 = vld [vmem:[%s343 + $0x818] sm:$0xff]
          %v691 = vld [vmem:[%s343 + $0x820] sm:$0xff]
          %v692 = vld [vmem:[%s343 + $0x828] sm:$0xff]
          %v693 = vld [vmem:[%s343 + $0x830] sm:$0xff]
          %v694 = vld [vmem:[%s343 + $0x838] sm:$0xff]
          %v695 = vld [vmem:[%s343 + $0x840] sm:$0xff]
          %v696 = vld [vmem:[%s343 + $0x848] sm:$0xff]
          %v697 = vld [vmem:[%s343 + $0x850] sm:$0xff]
          %v698 = vld [vmem:[%s343 + $0x858] sm:$0xff]
          %v699 = vld [vmem:[%s343 + $0x860] sm:$0xff]
          %v700 = vld [vmem:[%s343 + $0x868] sm:$0xff]
          %v701 = vld [vmem:[%s343 + $0x870] sm:$0xff]
          %v702 = vld [vmem:[%s343 + $0x878] sm:$0xff]
          %v703 = vld [vmem:[%s343 + $0x880] sm:$0xff]
          %v704 = vld [vmem:[%s343 + $0x888] sm:$0xff]
          %v705 = vld [vmem:[%s343 + $0x890] sm:$0xff]
          %v706 = vld [vmem:[%s343 + $0x898] sm:$0xff]
          %v707 = vld [vmem:[%s343 + $0x8a0] sm:$0xff]
          %v708 = vld [vmem:[%s343 + $0x8a8] sm:$0xff]
          %v709 = vld [vmem:[%s343 + $0x8b0] sm:$0xff]
          %v710 = vld [vmem:[%s343 + $0x8b8] sm:$0xff]
          %v711 = vld [vmem:[%s343 + $0x8c0] sm:$0xff]
          %v712 = vld [vmem:[%s343 + $0x8c8] sm:$0xff]
          %v713 = vld [vmem:[%s343 + $0x8d0] sm:$0xff]
          %v714 = vld [vmem:[%s343 + $0x8d8] sm:$0xff]
          %v715 = vld [vmem:[%s343 + $0x8e0] sm:$0xff]
          %v716 = vld [vmem:[%s343 + $0x8e8] sm:$0xff]
          %v717 = vld [vmem:[%s343 + $0x8f0] sm:$0xff]
          %v718 = vld [vmem:[%s343 + $0x8f8] sm:$0xff]
          %v719 = vld [vmem:[%s343 + $0x900] sm:$0xff]
          %v720 = vld [vmem:[%s343 + $0x908] sm:$0xff]
          %v721 = vld [vmem:[%s343 + $0x910] sm:$0xff]
          %v722 = vld [vmem:[%s343 + $0x918] sm:$0xff]
          %v723 = vld [vmem:[%s343 + $0x920] sm:$0xff]
          %v724 = vld [vmem:[%s343 + $0x928] sm:$0xff]
          %v725 = vld [vmem:[%s343 + $0x930] sm:$0xff]
          %v726 = vld [vmem:[%s343 + $0x938] sm:$0xff]
          %v727 = vld [vmem:[%s343 + $0x940] sm:$0xff]
          %v728 = vld [vmem:[%s343 + $0x948] sm:$0xff]
          %v729 = vld [vmem:[%s343 + $0x950] sm:$0xff]
          %v730 = vld [vmem:[%s343 + $0x958] sm:$0xff]
          %v731 = vld [vmem:[%s343 + $0x960] sm:$0xff]
          %v732 = vld [vmem:[%s343 + $0x968] sm:$0xff]
          %v733 = vld [vmem:[%s343 + $0x970] sm:$0xff]
          %v734 = vld [vmem:[%s343 + $0x978] sm:$0xff]
          %v735 = vld [vmem:[%s343 + $0x980] sm:$0xff]
          %v736 = vld [vmem:[%s343 + $0x988] sm:$0xff]
          %v737 = vld [vmem:[%s343 + $0x990] sm:$0xff]
          %v738 = vld [vmem:[%s343 + $0x998] sm:$0xff]
          %v739 = vld [vmem:[%s343 + $0x9a0] sm:$0xff]
          %v740 = vld [vmem:[%s343 + $0x9a8] sm:$0xff]
          %v741 = vld [vmem:[%s343 + $0x9b0] sm:$0xff]
          %v742 = vld [vmem:[%s343 + $0x9b8] sm:$0xff]
          %v743 = vld [vmem:[%s343 + $0x9c0] sm:$0xff]
          %v744 = vld [vmem:[%s343 + $0x9c8] sm:$0xff]
          %v745 = vld [vmem:[%s343 + $0x9d0] sm:$0xff]
          %v746 = vld [vmem:[%s343 + $0x9d8] sm:$0xff]
          %v747 = vld [vmem:[%s343 + $0x9e0] sm:$0xff]
          %v748 = vld [vmem:[%s343 + $0x9e8] sm:$0xff]
          %v749 = vld [vmem:[%s343 + $0x9f0] sm:$0xff]
          %v750 = vld [vmem:[%s343 + $0x9f8] sm:$0xff]
          %v751 = vld [vmem:[%s343 + $0xa00] sm:$0xff]
          %v752 = vld [vmem:[%s343 + $0xa08] sm:$0xff]
          %v753 = vld [vmem:[%s343 + $0xa10] sm:$0xff]
          %v754 = vld [vmem:[%s343 + $0xa18] sm:$0xff]
          %v755 = vld [vmem:[%s343 + $0xa20] sm:$0xff]
          %v756 = vld [vmem:[%s343 + $0xa28] sm:$0xff]
          %v757 = vld [vmem:[%s343 + $0xa30] sm:$0xff]
          %v758 = vld [vmem:[%s343 + $0xa38] sm:$0xff]
          %v759 = vld [vmem:[%s343 + $0xa40] sm:$0xff]
          %v760 = vld [vmem:[%s343 + $0xa48] sm:$0xff]
          %v761 = vld [vmem:[%s343 + $0xa50] sm:$0xff]
          %v762 = vld [vmem:[%s343 + $0xa58] sm:$0xff]
          %v763 = vld [vmem:[%s343 + $0xa60] sm:$0xff]
          %v764 = vld [vmem:[%s343 + $0xa68] sm:$0xff]
          %v765 = vld [vmem:[%s343 + $0xa70] sm:$0xff]
          %v766 = vld [vmem:[%s343 + $0xa78] sm:$0xff]
          %v767 = vld [vmem:[%s343 + $0xa80] sm:$0xff]
          %v768 = vld [vmem:[%s343 + $0xa88] sm:$0xff]
          %v769 = vld [vmem:[%s343 + $0xa90] sm:$0xff]
          %v770 = vld [vmem:[%s343 + $0xa98] sm:$0xff]
          %v771 = vld [vmem:[%s343 + $0xaa0] sm:$0xff]
          %v772 = vld [vmem:[%s343 + $0xaa8] sm:$0xff]
          %v773 = vld [vmem:[%s343 + $0xab0] sm:$0xff]
          %v774 = vld [vmem:[%s343 + $0xab8] sm:$0xff]
          %v775 = vld [vmem:[%s343 + $0xac0] sm:$0xff]
          %v776 = vld [vmem:[%s343 + $0xac8] sm:$0xff]
          %v777 = vld [vmem:[%s343 + $0xad0] sm:$0xff]
          %v778 = vld [vmem:[%s343 + $0xad8] sm:$0xff]
          %v779 = vld [vmem:[%s343 + $0xae0] sm:$0xff]
          %v780 = vld [vmem:[%s343 + $0xae8] sm:$0xff]
          %v781 = vld [vmem:[%s343 + $0xaf0] sm:$0xff]
          %v782 = vld [vmem:[%s343 + $0xaf8] sm:$0xff]
          %v783 = vld [vmem:[%s343 + $0xb00] sm:$0xff]
          %v784 = vld [vmem:[%s343 + $0xb08] sm:$0xff]
          %v785 = vld [vmem:[%s343 + $0xb10] sm:$0xff]
          %v786 = vld [vmem:[%s343 + $0xb18] sm:$0xff]
          %v787 = vld [vmem:[%s343 + $0xb20] sm:$0xff]
          %v788 = vld [vmem:[%s343 + $0xb28] sm:$0xff]
          %v789 = vld [vmem:[%s343 + $0xb30] sm:$0xff]
          %v790 = vld [vmem:[%s343 + $0xb38] sm:$0xff]
          %v791 = vld [vmem:[%s343 + $0xb40] sm:$0xff]
          %v792 = vld [vmem:[%s343 + $0xb48] sm:$0xff]
          %v793 = vld [vmem:[%s343 + $0xb50] sm:$0xff]
          %v794 = vld [vmem:[%s343 + $0xb58] sm:$0xff]
          %v795 = vld [vmem:[%s343 + $0xb60] sm:$0xff]
          %v796 = vld [vmem:[%s343 + $0xb68] sm:$0xff]
          %v797 = vld [vmem:[%s343 + $0xb70] sm:$0xff]
          %v798 = vld [vmem:[%s343 + $0xb78] sm:$0xff]
          %v799 = vld [vmem:[%s343 + $0xb80] sm:$0xff]
          %v800 = vld [vmem:[%s343 + $0xb88] sm:$0xff]
          %v801 = vld [vmem:[%s343 + $0xb90] sm:$0xff]
          %v802 = vld [vmem:[%s343 + $0xb98] sm:$0xff]
          %v803 = vld [vmem:[%s343 + $0xba0] sm:$0xff]
          %v804 = vld [vmem:[%s343 + $0xba8] sm:$0xff]
          %v805 = vld [vmem:[%s343 + $0xbb0] sm:$0xff]
          %v806 = vld [vmem:[%s343 + $0xbb8] sm:$0xff]
          %v807 = vld [vmem:[%s343 + $0xbc0] sm:$0xff]
          %v808 = vld [vmem:[%s343 + $0xbc8] sm:$0xff]
          %v809 = vld [vmem:[%s343 + $0xbd0] sm:$0xff]
          %v810 = vld [vmem:[%s343 + $0xbd8] sm:$0xff]
          %v811 = vld [vmem:[%s343 + $0xbe0] sm:$0xff]
          %v812 = vld [vmem:[%s343 + $0xbe8] sm:$0xff]
          %v813 = vld [vmem:[%s343 + $0xbf0] sm:$0xff]
          %v814 = vld [vmem:[%s343 + $0xbf8] sm:$0xff]
          %v815 = vld [vmem:[%s343 + $0xc00] sm:$0xff]
          %v816 = vld [vmem:[%s343 + $0xc08] sm:$0xff]
          %v817 = vld [vmem:[%s343 + $0xc10] sm:$0xff]
          %v818 = vld [vmem:[%s343 + $0xc18] sm:$0xff]
          %v819 = vld [vmem:[%s343 + $0xc20] sm:$0xff]
          %v820 = vld [vmem:[%s343 + $0xc28] sm:$0xff]
          %v821 = vld [vmem:[%s343 + $0xc30] sm:$0xff]
          %v822 = vld [vmem:[%s343 + $0xc38] sm:$0xff]
          %v823 = vld [vmem:[%s343 + $0xc40] sm:$0xff]
          %v824 = vld [vmem:[%s343 + $0xc48] sm:$0xff]
          %v825 = vld [vmem:[%s343 + $0xc50] sm:$0xff]
          %v826 = vld [vmem:[%s343 + $0xc58] sm:$0xff]
          %v827 = vld [vmem:[%s343 + $0xc60] sm:$0xff]
          %v828 = vld [vmem:[%s343 + $0xc68] sm:$0xff]
          %v829 = vld [vmem:[%s343 + $0xc70] sm:$0xff]
          %v830 = vld [vmem:[%s343 + $0xc78] sm:$0xff]
          %v831 = vld [vmem:[%s343 + $0xc80] sm:$0xff]
          %v832 = vld [vmem:[%s343 + $0xc88] sm:$0xff]
          %v833 = vld [vmem:[%s343 + $0xc90] sm:$0xff]
          %v834 = vld [vmem:[%s343 + $0xc98] sm:$0xff]
          %v835 = vld [vmem:[%s343 + $0xca0] sm:$0xff]
          %v836 = vld [vmem:[%s343 + $0xca8] sm:$0xff]
          %v837 = vld [vmem:[%s343 + $0xcb0] sm:$0xff]
          %v838 = vld [vmem:[%s343 + $0xcb8] sm:$0xff]
          %v839 = vld [vmem:[%s343 + $0xcc0] sm:$0xff]
          %v840 = vld [vmem:[%s343 + $0xcc8] sm:$0xff]
          %v841 = vld [vmem:[%s343 + $0xcd0] sm:$0xff]
          %v842 = vld [vmem:[%s343 + $0xcd8] sm:$0xff]
          %v843 = vld [vmem:[%s343 + $0xce0] sm:$0xff]
          %v844 = vld [vmem:[%s343 + $0xce8] sm:$0xff]
          %v845 = vld [vmem:[%s343 + $0xcf0] sm:$0xff]
          %v846 = vld [vmem:[%s343 + $0xcf8] sm:$0xff]
          %v847 = vld [vmem:[%s343 + $0xd00] sm:$0xff]
          %v848 = vld [vmem:[%s343 + $0xd08] sm:$0xff]
          %v849 = vld [vmem:[%s343 + $0xd10] sm:$0xff]
          %v850 = vld [vmem:[%s343 + $0xd18] sm:$0xff]
          %v851 = vld [vmem:[%s343 + $0xd20] sm:$0xff]
          %v852 = vld [vmem:[%s343 + $0xd28] sm:$0xff]
          %v853 = vld [vmem:[%s343 + $0xd30] sm:$0xff]
          %v854 = vld [vmem:[%s343 + $0xd38] sm:$0xff]
          %v855 = vld [vmem:[%s343 + $0xd40] sm:$0xff]
          %v856 = vld [vmem:[%s343 + $0xd48] sm:$0xff]
          %v857 = vld [vmem:[%s343 + $0xd50] sm:$0xff]
          %v858 = vld [vmem:[%s343 + $0xd58] sm:$0xff]
          %v859 = vld [vmem:[%s343 + $0xd60] sm:$0xff]
          %v860 = vld [vmem:[%s343 + $0xd68] sm:$0xff]
          %v861 = vld [vmem:[%s343 + $0xd70] sm:$0xff]
          %v862 = vld [vmem:[%s343 + $0xd78] sm:$0xff]
          %v863 = vld [vmem:[%s343 + $0xd80] sm:$0xff]
          %v864 = vld [vmem:[%s343 + $0xd88] sm:$0xff]
          %v865 = vld [vmem:[%s343 + $0xd90] sm:$0xff]
          %v866 = vld [vmem:[%s343 + $0xd98] sm:$0xff]
          %v867 = vld [vmem:[%s343 + $0xda0] sm:$0xff]
          %v868 = vld [vmem:[%s343 + $0xda8] sm:$0xff]
          %v869 = vld [vmem:[%s343 + $0xdb0] sm:$0xff]
          %v870 = vld [vmem:[%s343 + $0xdb8] sm:$0xff]
          %v871 = vld [vmem:[%s343 + $0xdc0] sm:$0xff]
          %v872 = vld [vmem:[%s343 + $0xdc8] sm:$0xff]
          %v873 = vld [vmem:[%s343 + $0xdd0] sm:$0xff]
          %v874 = vld [vmem:[%s343 + $0xdd8] sm:$0xff]
          %v875 = vld [vmem:[%s343 + $0xde0] sm:$0xff]
          %v876 = vld [vmem:[%s343 + $0xde8] sm:$0xff]
          %v877 = vld [vmem:[%s343 + $0xdf0] sm:$0xff]
          %v878 = vld [vmem:[%s343 + $0xdf8] sm:$0xff]
          %v879 = vld [vmem:[%s343 + $0xe00] sm:$0xff]
          %v880 = vld [vmem:[%s343 + $0xe08] sm:$0xff]
          %v881 = vld [vmem:[%s343 + $0xe10] sm:$0xff]
          %v882 = vld [vmem:[%s343 + $0xe18] sm:$0xff]
          %v883 = vld [vmem:[%s343 + $0xe20] sm:$0xff]
          %v884 = vld [vmem:[%s343 + $0xe28] sm:$0xff]
          %v885 = vld [vmem:[%s343 + $0xe30] sm:$0xff]
          %v886 = vld [vmem:[%s343 + $0xe38] sm:$0xff]
          %v887 = vld [vmem:[%s343 + $0xe40] sm:$0xff]
          %v888 = vld [vmem:[%s343 + $0xe48] sm:$0xff]
          %v889 = vld [vmem:[%s343 + $0xe50] sm:$0xff]
          %v890 = vld [vmem:[%s343 + $0xe58] sm:$0xff]
          %v891 = vld [vmem:[%s343 + $0xe60] sm:$0xff]
          %v892 = vld [vmem:[%s343 + $0xe68] sm:$0xff]
          %v893 = vld [vmem:[%s343 + $0xe70] sm:$0xff]
          %v894 = vld [vmem:[%s343 + $0xe78] sm:$0xff]
          %v895 = vld [vmem:[%s343 + $0xe80] sm:$0xff]
          %v896 = vld [vmem:[%s343 + $0xe88] sm:$0xff]
          %v897 = vld [vmem:[%s343 + $0xe90] sm:$0xff]
          %v898 = vld [vmem:[%s343 + $0xe98] sm:$0xff]
          %v899 = vld [vmem:[%s343 + $0xea0] sm:$0xff]
          %v900 = vld [vmem:[%s343 + $0xea8] sm:$0xff]
          %v901 = vld [vmem:[%s343 + $0xeb0] sm:$0xff]
          %v902 = vld [vmem:[%s343 + $0xeb8] sm:$0xff]
          %v903 = vld [vmem:[%s343 + $0xec0] sm:$0xff]
          %v904 = vld [vmem:[%s343 + $0xec8] sm:$0xff]
          %v905 = vld [vmem:[%s343 + $0xed0] sm:$0xff]
          %v906 = vld [vmem:[%s343 + $0xed8] sm:$0xff]
          %v907 = vld [vmem:[%s343 + $0xee0] sm:$0xff]
          %v908 = vld [vmem:[%s343 + $0xee8] sm:$0xff]
          %v909 = vld [vmem:[%s343 + $0xef0] sm:$0xff]
          %v910 = vld [vmem:[%s343 + $0xef8] sm:$0xff]
          %v911 = vld [vmem:[%s343 + $0xf00] sm:$0xff]
          %v912 = vld [vmem:[%s343 + $0xf08] sm:$0xff]
          %v913 = vld [vmem:[%s343 + $0xf10] sm:$0xff]
          %v914 = vld [vmem:[%s343 + $0xf18] sm:$0xff]
          %v915 = vld [vmem:[%s343 + $0xf20] sm:$0xff]
          %v916 = vld [vmem:[%s343 + $0xf28] sm:$0xff]
          %v917 = vld [vmem:[%s343 + $0xf30] sm:$0xff]
          %v918 = vld [vmem:[%s343 + $0xf38] sm:$0xff]
          %v919 = vld [vmem:[%s343 + $0xf40] sm:$0xff]
          %v920 = vld [vmem:[%s343 + $0xf48] sm:$0xff]
          %v921 = vld [vmem:[%s343 + $0xf50] sm:$0xff]
          %v922 = vld [vmem:[%s343 + $0xf58] sm:$0xff]
          %v923 = vld [vmem:[%s343 + $0xf60] sm:$0xff]
          %v924 = vld [vmem:[%s343 + $0xf68] sm:$0xff]
          %v925 = vld [vmem:[%s343 + $0xf70] sm:$0xff]
          %v926 = vld [vmem:[%s343 + $0xf78] sm:$0xff]
          %v927 = vld [vmem:[%s343 + $0xf80] sm:$0xff]
          %v928 = vld [vmem:[%s343 + $0xf88] sm:$0xff]
          %v929 = vld [vmem:[%s343 + $0xf90] sm:$0xff]
          %v930 = vld [vmem:[%s343 + $0xf98] sm:$0xff]
          %v931 = vld [vmem:[%s343 + $0xfa0] sm:$0xff]
          %v932 = vld [vmem:[%s343 + $0xfa8] sm:$0xff]
          %v933 = vld [vmem:[%s343 + $0xfb0] sm:$0xff]
          %v934 = vld [vmem:[%s343 + $0xfb8] sm:$0xff]
          %v935 = vld [vmem:[%s343 + $0xfc0] sm:$0xff]
          %v936 = vld [vmem:[%s343 + $0xfc8] sm:$0xff]
          %v937 = vld [vmem:[%s343 + $0xfd0] sm:$0xff]
          %v938 = vld [vmem:[%s343 + $0xfd8] sm:$0xff]
          %v939 = vld [vmem:[%s343 + $0xfe0] sm:$0xff]
          %v940 = vld [vmem:[%s343 + $0xfe8] sm:$0xff]
          %v941 = vld [vmem:[%s343 + $0xff0] sm:$0xff]
          %v942 = vld [vmem:[%s343 + $0xff8] sm:$0xff]
          %v943 = vld [vmem:[%s343 + $0x1000] sm:$0xff]
          %v944 = vld [vmem:[%s343 + $0x1008] sm:$0xff]
          %v945 = vld [vmem:[%s343 + $0x1010] sm:$0xff]
          %v946 = vld [vmem:[%s343 + $0x1018] sm:$0xff]
          %v947 = vld [vmem:[%s343 + $0x1020] sm:$0xff]
          %v948 = vld [vmem:[%s343 + $0x1028] sm:$0xff]
          %v949 = vld [vmem:[%s343 + $0x1030] sm:$0xff]
          %v950 = vld [vmem:[%s343 + $0x1038] sm:$0xff]
          %v951 = vld [vmem:[%s343 + $0x1040] sm:$0xff]
          %v952 = vld [vmem:[%s343 + $0x1048] sm:$0xff]
          %v953 = vld [vmem:[%s343 + $0x1050] sm:$0xff]
          %v954 = vld [vmem:[%s343 + $0x1058] sm:$0xff]
          %v955 = vld [vmem:[%s343 + $0x1060] sm:$0xff]
          %v956 = vld [vmem:[%s343 + $0x1068] sm:$0xff]
          %v957 = vld [vmem:[%s343 + $0x1070] sm:$0xff]
          %v958 = vld [vmem:[%s343 + $0x1078] sm:$0xff]
          %v959 = vld [vmem:[%s343 + $0x1080] sm:$0xff]
          %v960 = vld [vmem:[%s343 + $0x1088] sm:$0xff]
          %v961 = vld [vmem:[%s343 + $0x1090] sm:$0xff]
          %v962 = vld [vmem:[%s343 + $0x1098] sm:$0xff]
          %v963 = vld [vmem:[%s343 + $0x10a0] sm:$0xff]
          %v964 = vld [vmem:[%s343 + $0x10a8] sm:$0xff]
          %v965 = vld [vmem:[%s343 + $0x10b0] sm:$0xff]
          %v966 = vld [vmem:[%s343 + $0x10b8] sm:$0xff]
          %v967 = vld [vmem:[%s343 + $0x10c0] sm:$0xff]
          %v968 = vld [vmem:[%s343 + $0x10c8] sm:$0xff]
          %v969 = vld [vmem:[%s343 + $0x10d0] sm:$0xff]
          %v970 = vld [vmem:[%s343 + $0x10d8] sm:$0xff]
          %v971 = vld [vmem:[%s343 + $0x10e0] sm:$0xff]
          %v972 = vld [vmem:[%s343 + $0x10e8] sm:$0xff]
          %v973 = vld [vmem:[%s343 + $0x10f0] sm:$0xff]
          %v974 = vld [vmem:[%s343 + $0x10f8] sm:$0xff]
          %v975 = vld [vmem:[%s343 + $0x1100] sm:$0xff]
          %v976 = vld [vmem:[%s343 + $0x1108] sm:$0xff]
          %v977 = vld [vmem:[%s343 + $0x1110] sm:$0xff]
          %v978 = vld [vmem:[%s343 + $0x1118] sm:$0xff]
          %v979 = vld [vmem:[%s343 + $0x1120] sm:$0xff]
          %v980 = vld [vmem:[%s343 + $0x1128] sm:$0xff]
          %v981 = vld [vmem:[%s343 + $0x1130] sm:$0xff]
          %v982 = vld [vmem:[%s343 + $0x1138] sm:$0xff]
          %v983 = vld [vmem:[%s343 + $0x1140] sm:$0xff]
          %v984 = vld [vmem:[%s343 + $0x1148] sm:$0xff]
          %v985 = vld [vmem:[%s343 + $0x1150] sm:$0xff]
          %v986 = vld [vmem:[%s343 + $0x1158] sm:$0xff]
          %v987 = vld [vmem:[%s343 + $0x1160] sm:$0xff]
          %v988 = vld [vmem:[%s343 + $0x1168] sm:$0xff]
          %v989 = vld [vmem:[%s343 + $0x1170] sm:$0xff]
          %v990 = vld [vmem:[%s343 + $0x1178] sm:$0xff]
          %v991 = vld [vmem:[%s343 + $0x1180] sm:$0xff]
          %v992 = vld [vmem:[%s343 + $0x1188] sm:$0xff]
          %v993 = vld [vmem:[%s343 + $0x1190] sm:$0xff]
          %v994 = vld [vmem:[%s343 + $0x1198] sm:$0xff]
          %v995 = vld [vmem:[%s343 + $0x11a0] sm:$0xff]
          %v996 = vld [vmem:[%s343 + $0x11a8] sm:$0xff]
          %v997 = vld [vmem:[%s343 + $0x11b0] sm:$0xff]
          %v998 = vld [vmem:[%s343 + $0x11b8] sm:$0xff]
          %v999 = vld [vmem:[%s343 + $0x11c0] sm:$0xff]
          %v1000 = vld [vmem:[%s343 + $0x11c8] sm:$0xff]
          %v1001 = vld [vmem:[%s343 + $0x11d0] sm:$0xff]
          %v1002 = vld [vmem:[%s343 + $0x11d8] sm:$0xff]
          %v1003 = vld [vmem:[%s343 + $0x11e0] sm:$0xff]
          %v1004 = vld [vmem:[%s343 + $0x11e8] sm:$0xff]
          %v1005 = vld [vmem:[%s343 + $0x11f0] sm:$0xff]
          %v1006 = vld [vmem:[%s343 + $0x11f8] sm:$0xff]
          %v1007 = vld [vmem:[%s343 + $0x1200] sm:$0xff]
          %v1008 = vld [vmem:[%s343 + $0x1208] sm:$0xff]
          %v1009 = vld [vmem:[%s343 + $0x1210] sm:$0xff]
          %v1010 = vld [vmem:[%s343 + $0x1218] sm:$0xff]
          %v1011 = vld [vmem:[%s343 + $0x1220] sm:$0xff]
          %v1012 = vld [vmem:[%s343 + $0x1228] sm:$0xff]
          %v1013 = vld [vmem:[%s343 + $0x1230] sm:$0xff]
          %v1014 = vld [vmem:[%s343 + $0x1238] sm:$0xff]
          %v1015 = vld [vmem:[%s343 + $0x1240] sm:$0xff]
          %v1016 = vld [vmem:[%s343 + $0x1248] sm:$0xff]
          %v1017 = vld [vmem:[%s343 + $0x1250] sm:$0xff]
          %v1018 = vld [vmem:[%s343 + $0x1258] sm:$0xff]
          %v1019 = vld [vmem:[%s343 + $0x1260] sm:$0xff]
          %v1020 = vld [vmem:[%s343 + $0x1268] sm:$0xff]
          %v1021 = vld [vmem:[%s343 + $0x1270] sm:$0xff]
          %v1022 = vld [vmem:[%s343 + $0x1278] sm:$0xff]
          %v1023 = vld [vmem:[%s343 + $0x1280] sm:$0xff]
          %v1024 = vld [vmem:[%s343 + $0x1288] sm:$0xff]
          %v1025 = vld [vmem:[%s343 + $0x1290] sm:$0xff]
          %v1026 = vld [vmem:[%s343 + $0x1298] sm:$0xff]
          %v1027 = vld [vmem:[%s343 + $0x12a0] sm:$0xff]
          %v1028 = vld [vmem:[%s343 + $0x12a8] sm:$0xff]
          %v1029 = vld [vmem:[%s343 + $0x12b0] sm:$0xff]
          %v1030 = vld [vmem:[%s343 + $0x12b8] sm:$0xff]
          %v1031 = vld [vmem:[%s343 + $0x12c0] sm:$0xff]
          %v1032 = vld [vmem:[%s343 + $0x12c8] sm:$0xff]
          %v1033 = vld [vmem:[%s343 + $0x12d0] sm:$0xff]
          %v1034 = vld [vmem:[%s343 + $0x12d8] sm:$0xff]
          %v1035 = vld [vmem:[%s343 + $0x12e0] sm:$0xff]
          %v1036 = vld [vmem:[%s343 + $0x12e8] sm:$0xff]
          %v1037 = vld [vmem:[%s343 + $0x12f0] sm:$0xff]
          %v1038 = vld [vmem:[%s343 + $0x12f8] sm:$0xff]
          %v1039 = vld [vmem:[%s343 + $0x1300] sm:$0xff]
          %v1040 = vld [vmem:[%s343 + $0x1308] sm:$0xff]
          %v1041 = vld [vmem:[%s343 + $0x1310] sm:$0xff]
          %v1042 = vld [vmem:[%s343 + $0x1318] sm:$0xff]
          %v1043 = vld [vmem:[%s343 + $0x1320] sm:$0xff]
          %v1044 = vld [vmem:[%s343 + $0x1328] sm:$0xff]
          %v1045 = vld [vmem:[%s343 + $0x1330] sm:$0xff]
          %v1046 = vld [vmem:[%s343 + $0x1338] sm:$0xff]
          %v1047 = vld [vmem:[%s343 + $0x1340] sm:$0xff]
          %v1048 = vld [vmem:[%s343 + $0x1348] sm:$0xff]
          %v1049 = vld [vmem:[%s343 + $0x1350] sm:$0xff]
          %v1050 = vld [vmem:[%s343 + $0x1358] sm:$0xff]
          %v1051 = vld [vmem:[%s343 + $0x1360] sm:$0xff]
          %v1052 = vld [vmem:[%s343 + $0x1368] sm:$0xff]
          %v1053 = vld [vmem:[%s343 + $0x1370] sm:$0xff]
          %v1054 = vld [vmem:[%s343 + $0x1378] sm:$0xff]
          %v1055 = vld [vmem:[%s343 + $0x1380] sm:$0xff]
          %v1056 = vld [vmem:[%s343 + $0x1388] sm:$0xff]
          %v1057 = vld [vmem:[%s343 + $0x1390] sm:$0xff]
          %v1058 = vld [vmem:[%s343 + $0x1398] sm:$0xff]
          %v1059 = vld [vmem:[%s343 + $0x13a0] sm:$0xff]
          %v1060 = vld [vmem:[%s343 + $0x13a8] sm:$0xff]
          %v1061 = vld [vmem:[%s343 + $0x13b0] sm:$0xff]
          %v1062 = vld [vmem:[%s343 + $0x13b8] sm:$0xff]
          %v1063 = vld [vmem:[%s343 + $0x13c0] sm:$0xff]
          %v1064 = vld [vmem:[%s343 + $0x13c8] sm:$0xff]
          %v1065 = vld [vmem:[%s343 + $0x13d0] sm:$0xff]
          %v1066 = vld [vmem:[%s343 + $0x13d8] sm:$0xff]
          %v1067 = vld [vmem:[%s343 + $0x13e0] sm:$0xff]
          %v1068 = vld [vmem:[%s343 + $0x13e8] sm:$0xff]
          %v1069 = vld [vmem:[%s343 + $0x13f0] sm:$0xff]
          %v1070 = vld [vmem:[%s343 + $0x13f8] sm:$0xff]
          %1074 = vst [vmem:[#allocation1] ss:$4 sm:$0xff] %v428
          %s1075 = scalar_lea.vmem [#allocation1], 32
          %1076 = vst [vmem:[%s1075] ss:$4 sm:$0xff] %v429
          %v1077 = vld.sshfl [vmem:[#allocation1] sm:$0xff pattern:$0x73625140]
          %v1078 = vld.sshfl [vmem:[#allocation1 + $0x8] sm:$0xff pattern:$0x73625140]
          %v1079 = vld.sshfl [vmem:[#allocation1 + $0x10] sm:$0xff pattern:$0x73625140]
          %v1080 = vld.sshfl [vmem:[#allocation1 + $0x18] sm:$0xff pattern:$0x73625140]
          %v1081 = vld.sshfl [vmem:[#allocation1 + $0x20] sm:$0xff pattern:$0x73625140]
          %v1082 = vld.sshfl [vmem:[#allocation1 + $0x28] sm:$0xff pattern:$0x73625140]
          %v1083 = vld.sshfl [vmem:[#allocation1 + $0x30] sm:$0xff pattern:$0x73625140]
          %v1084 = vld.sshfl [vmem:[#allocation1 + $0x38] sm:$0xff pattern:$0x73625140]
          %1085 = vst [vmem:[#allocation1] ss:$4 sm:$0xff] %v430
          %v1086 = vld.sshfl [vmem:[#allocation1] sm:$0xff pattern:$0x73625140]
          %v1087 = vld.sshfl [vmem:[#allocation1 + $0x8] sm:$0xff pattern:$0x73625140]
          %1098 = vmatpush.msra.mxu0 %v491
          %1099 = vmatpush.msra.mxu0 %v487
          %1100 = vmatpush.msra.mxu0 %v483
          %1101 = vmatpush.msra.mxu0 %v479
          %1102 = vmatpush.msra.mxu0 %v475
          %1103 = vmatpush.msra.mxu0 %v471
          %1104 = vmatpush.msra.mxu0 %v467
          %1105 = vmatpush.msra.mxu0 %v463
          %1106 = vmatpush.msra.mxu0 %v459
          %1107 = vmatpush.msra.mxu0 %v455
          %1108 = vmatpush.msra.mxu0 %v451
          %1109 = vmatpush.msra.mxu0 %v447
          %1110 = vmatpush.msra.mxu0 %v443
          %1111 = vmatpush.msra.mxu0 %v439
          %1112 = vmatpush.msra.mxu0 %v435
          %1113 = vmatpush.msra.mxu0 %v431
          %1114 = vmatmul.f32.gmra.mxu0 %v1077
          %v1115 = vpop.f32.mrf.mxu0
          %v1116 = vadd.f32 0.0, %v1115
          %1117 = vdwg.mxu0
          %1118 = vmatpush.msra.mxu0 %v555
          %1119 = vmatpush.msra.mxu0 %v551
          %1120 = vmatpush.msra.mxu0 %v547
          %1121 = vmatpush.msra.mxu0 %v543
          %1122 = vmatpush.msra.mxu0 %v539
          %1123 = vmatpush.msra.mxu0 %v535
          %1124 = vmatpush.msra.mxu0 %v531
          %1125 = vmatpush.msra.mxu0 %v527
          %1126 = vmatpush.msra.mxu0 %v523
          %1127 = vmatpush.msra.mxu0 %v519
          %1128 = vmatpush.msra.mxu0 %v515
          %1129 = vmatpush.msra.mxu0 %v511
          %1130 = vmatpush.msra.mxu0 %v507
          %1131 = vmatpush.msra.mxu0 %v503
          %1132 = vmatpush.msra.mxu0 %v499
          %1133 = vmatpush.msra.mxu0 %v495
          %1134 = vmatmul.f32.gmra.mxu0 %v1078
          %v1135 = vpop.f32.mrf.mxu0
          %v1136 = vadd.f32 %v1116, %v1135
          %1137 = vdwg.mxu0
          %1138 = vmatpush.msra.mxu0 %v619
          %1139 = vmatpush.msra.mxu0 %v615
          %1140 = vmatpush.msra.mxu0 %v611
          %1141 = vmatpush.msra.mxu0 %v607
          %1142 = vmatpush.msra.mxu0 %v603
          %1143 = vmatpush.msra.mxu0 %v599
          %1144 = vmatpush.msra.mxu0 %v595
          %1145 = vmatpush.msra.mxu0 %v591
          %1146 = vmatpush.msra.mxu0 %v587
          %1147 = vmatpush.msra.mxu0 %v583
          %1148 = vmatpush.msra.mxu0 %v579
          %1149 = vmatpush.msra.mxu0 %v575
          %1150 = vmatpush.msra.mxu0 %v571
          %1151 = vmatpush.msra.mxu0 %v567
          %1152 = vmatpush.msra.mxu0 %v563
          %1153 = vmatpush.msra.mxu0 %v559
          %1154 = vmatmul.f32.gmra.mxu0 %v1079
          %v1155 = vpop.f32.mrf.mxu0
          %v1156 = vadd.f32 %v1136, %v1155
          %1157 = vdwg.mxu0
          %1158 = vmatpush.msra.mxu0 %v683
          %1159 = vmatpush.msra.mxu0 %v679
          %1160 = vmatpush.msra.mxu0 %v675
          %1161 = vmatpush.msra.mxu0 %v671
          %1162 = vmatpush.msra.mxu0 %v667
          %1163 = vmatpush.msra.mxu0 %v663
          %1164 = vmatpush.msra.mxu0 %v659
          %1165 = vmatpush.msra.mxu0 %v655
          %1166 = vmatpush.msra.mxu0 %v651
          %1167 = vmatpush.msra.mxu0 %v647
          %1168 = vmatpush.msra.mxu0 %v643
          %1169 = vmatpush.msra.mxu0 %v639
          %1170 = vmatpush.msra.mxu0 %v635
          %1171 = vmatpush.msra.mxu0 %v631
          %1172 = vmatpush.msra.mxu0 %v627
          %1173 = vmatpush.msra.mxu0 %v623
          %1174 = vmatmul.f32.gmra.mxu0 %v1080
          %v1175 = vpop.f32.mrf.mxu0
          %v1176 = vadd.f32 %v1156, %v1175
          %1177 = vdwg.mxu0
          %1178 = vmatpush.msra.mxu0 %v747
          %1179 = vmatpush.msra.mxu0 %v743
          %1180 = vmatpush.msra.mxu0 %v739
          %1181 = vmatpush.msra.mxu0 %v735
          %1182 = vmatpush.msra.mxu0 %v731
          %1183 = vmatpush.msra.mxu0 %v727
          %1184 = vmatpush.msra.mxu0 %v723
          %1185 = vmatpush.msra.mxu0 %v719
          %1186 = vmatpush.msra.mxu0 %v715
          %1187 = vmatpush.msra.mxu0 %v711
          %1188 = vmatpush.msra.mxu0 %v707
          %1189 = vmatpush.msra.mxu0 %v703
          %1190 = vmatpush.msra.mxu0 %v699
          %1191 = vmatpush.msra.mxu0 %v695
          %1192 = vmatpush.msra.mxu0 %v691
          %1193 = vmatpush.msra.mxu0 %v687
          %1194 = vmatmul.f32.gmra.mxu0 %v1081
          %v1195 = vpop.f32.mrf.mxu0
          %v1196 = vadd.f32 %v1176, %v1195
          %1197 = vdwg.mxu0
          %1198 = vmatpush.msra.mxu0 %v811
          %1199 = vmatpush.msra.mxu0 %v807
          %1200 = vmatpush.msra.mxu0 %v803
          %1201 = vmatpush.msra.mxu0 %v799
          %1202 = vmatpush.msra.mxu0 %v795
          %1203 = vmatpush.msra.mxu0 %v791
          %1204 = vmatpush.msra.mxu0 %v787
          %1205 = vmatpush.msra.mxu0 %v783
          %1206 = vmatpush.msra.mxu0 %v779
          %1207 = vmatpush.msra.mxu0 %v775
          %1208 = vmatpush.msra.mxu0 %v771
          %1209 = vmatpush.msra.mxu0 %v767
          %1210 = vmatpush.msra.mxu0 %v763
          %1211 = vmatpush.msra.mxu0 %v759
          %1212 = vmatpush.msra.mxu0 %v755
          %1213 = vmatpush.msra.mxu0 %v751
          %1214 = vmatmul.f32.gmra.mxu0 %v1082
          %v1215 = vpop.f32.mrf.mxu0
          %v1216 = vadd.f32 %v1196, %v1215
          %1217 = vdwg.mxu0
          %1218 = vmatpush.msra.mxu0 %v875
          %1219 = vmatpush.msra.mxu0 %v871
          %1220 = vmatpush.msra.mxu0 %v867
          %1221 = vmatpush.msra.mxu0 %v863
          %1222 = vmatpush.msra.mxu0 %v859
          %1223 = vmatpush.msra.mxu0 %v855
          %1224 = vmatpush.msra.mxu0 %v851
          %1225 = vmatpush.msra.mxu0 %v847
          %1226 = vmatpush.msra.mxu0 %v843
          %1227 = vmatpush.msra.mxu0 %v839
          %1228 = vmatpush.msra.mxu0 %v835
          %1229 = vmatpush.msra.mxu0 %v831
          %1230 = vmatpush.msra.mxu0 %v827
          %1231 = vmatpush.msra.mxu0 %v823
          %1232 = vmatpush.msra.mxu0 %v819
          %1233 = vmatpush.msra.mxu0 %v815
          %1234 = vmatmul.f32.gmra.mxu0 %v1083
          %v1235 = vpop.f32.mrf.mxu0
          %v1236 = vadd.f32 %v1216, %v1235
          %1237 = vdwg.mxu0
          %1238 = vmatpush.msra.mxu0 %v939
          %1239 = vmatpush.msra.mxu0 %v935
          %1240 = vmatpush.msra.mxu0 %v931
          %1241 = vmatpush.msra.mxu0 %v927
          %1242 = vmatpush.msra.mxu0 %v923
          %1243 = vmatpush.msra.mxu0 %v919
          %1244 = vmatpush.msra.mxu0 %v915
          %1245 = vmatpush.msra.mxu0 %v911
          %1246 = vmatpush.msra.mxu0 %v907
          %1247 = vmatpush.msra.mxu0 %v903
          %1248 = vmatpush.msra.mxu0 %v899
          %1249 = vmatpush.msra.mxu0 %v895
          %1250 = vmatpush.msra.mxu0 %v891
          %1251 = vmatpush.msra.mxu0 %v887
          %1252 = vmatpush.msra.mxu0 %v883
          %1253 = vmatpush.msra.mxu0 %v879
          %1254 = vmatmul.f32.gmra.mxu0 %v1084
          %v1255 = vpop.f32.mrf.mxu0
          %v1256 = vadd.f32 %v1236, %v1255
          %1257 = vdwg.mxu0
          %1258 = vmatpush.msra.mxu0 %v1003
          %1259 = vmatpush.msra.mxu0 %v999
          %1260 = vmatpush.msra.mxu0 %v995
          %1261 = vmatpush.msra.mxu0 %v991
          %1262 = vmatpush.msra.mxu0 %v987
          %1263 = vmatpush.msra.mxu0 %v983
          %1264 = vmatpush.msra.mxu0 %v979
          %1265 = vmatpush.msra.mxu0 %v975
          %1266 = vmatpush.msra.mxu0 %v971
          %1267 = vmatpush.msra.mxu0 %v967
          %1268 = vmatpush.msra.mxu0 %v963
          %1269 = vmatpush.msra.mxu0 %v959
          %1270 = vmatpush.msra.mxu0 %v955
          %1271 = vmatpush.msra.mxu0 %v951
          %1272 = vmatpush.msra.mxu0 %v947
          %1273 = vmatpush.msra.mxu0 %v943
          %1274 = vmatmul.f32.gmra.mxu0 %v1086
          %v1275 = vpop.f32.mrf.mxu0
          %v1276 = vadd.f32 %v1256, %v1275
          %1277 = vdwg.mxu0
          %1278 = vmatpush.msra.mxu0 %v1067
          %1279 = vmatpush.msra.mxu0 %v1063
          %1280 = vmatpush.msra.mxu0 %v1059
          %1281 = vmatpush.msra.mxu0 %v1055
          %1282 = vmatpush.msra.mxu0 %v1051
          %1283 = vmatpush.msra.mxu0 %v1047
          %1284 = vmatpush.msra.mxu0 %v1043
          %1285 = vmatpush.msra.mxu0 %v1039
          %1286 = vmatpush.msra.mxu0 %v1035
          %1287 = vmatpush.msra.mxu0 %v1031
          %1288 = vmatpush.msra.mxu0 %v1027
          %1289 = vmatpush.msra.mxu0 %v1023
          %1290 = vmatpush.msra.mxu0 %v1019
          %1291 = vmatpush.msra.mxu0 %v1015
          %1292 = vmatpush.msra.mxu0 %v1011
          %1293 = vmatpush.msra.mxu0 %v1007
          %1294 = vmatmul.f32.gmra.mxu0 %v1087
          %v1295 = vpop.f32.mrf.mxu0
          %v1296 = vadd.f32 %v1276, %v1295
          %1297 = vdwg.mxu0
          %1298 = vmatpush.msra.mxu0 %v492
          %1299 = vmatpush.msra.mxu0 %v488
          %1300 = vmatpush.msra.mxu0 %v484
          %1301 = vmatpush.msra.mxu0 %v480
          %1302 = vmatpush.msra.mxu0 %v476
          %1303 = vmatpush.msra.mxu0 %v472
          %1304 = vmatpush.msra.mxu0 %v468
          %1305 = vmatpush.msra.mxu0 %v464
          %1306 = vmatpush.msra.mxu0 %v460
          %1307 = vmatpush.msra.mxu0 %v456
          %1308 = vmatpush.msra.mxu0 %v452
          %1309 = vmatpush.msra.mxu0 %v448
          %1310 = vmatpush.msra.mxu0 %v444
          %1311 = vmatpush.msra.mxu0 %v440
          %1312 = vmatpush.msra.mxu0 %v436
          %1313 = vmatpush.msra.mxu0 %v432
          %1314 = vmatmul.f32.gmra.mxu0 %v1077
          %v1315 = vpop.f32.mrf.mxu0
          %v1316 = vadd.f32 0.0, %v1315
          %1317 = vdwg.mxu0
          %1318 = vmatpush.msra.mxu0 %v556
          %1319 = vmatpush.msra.mxu0 %v552
          %1320 = vmatpush.msra.mxu0 %v548
          %1321 = vmatpush.msra.mxu0 %v544
          %1322 = vmatpush.msra.mxu0 %v540
          %1323 = vmatpush.msra.mxu0 %v536
          %1324 = vmatpush.msra.mxu0 %v532
          %1325 = vmatpush.msra.mxu0 %v528
          %1326 = vmatpush.msra.mxu0 %v524
          %1327 = vmatpush.msra.mxu0 %v520
          %1328 = vmatpush.msra.mxu0 %v516
          %1329 = vmatpush.msra.mxu0 %v512
          %1330 = vmatpush.msra.mxu0 %v508
          %1331 = vmatpush.msra.mxu0 %v504
          %1332 = vmatpush.msra.mxu0 %v500
          %1333 = vmatpush.msra.mxu0 %v496
          %1334 = vmatmul.f32.gmra.mxu0 %v1078
          %v1335 = vpop.f32.mrf.mxu0
          %v1336 = vadd.f32 %v1316, %v1335
          %1337 = vdwg.mxu0
          %1338 = vmatpush.msra.mxu0 %v620
          %1339 = vmatpush.msra.mxu0 %v616
          %1340 = vmatpush.msra.mxu0 %v612
          %1341 = vmatpush.msra.mxu0 %v608
          %1342 = vmatpush.msra.mxu0 %v604
          %1343 = vmatpush.msra.mxu0 %v600
          %1344 = vmatpush.msra.mxu0 %v596
          %1345 = vmatpush.msra.mxu0 %v592
          %1346 = vmatpush.msra.mxu0 %v588
          %1347 = vmatpush.msra.mxu0 %v584
          %1348 = vmatpush.msra.mxu0 %v580
          %1349 = vmatpush.msra.mxu0 %v576
          %1350 = vmatpush.msra.mxu0 %v572
          %1351 = vmatpush.msra.mxu0 %v568
          %1352 = vmatpush.msra.mxu0 %v564
          %1353 = vmatpush.msra.mxu0 %v560
          %1354 = vmatmul.f32.gmra.mxu0 %v1079
          %v1355 = vpop.f32.mrf.mxu0
          %v1356 = vadd.f32 %v1336, %v1355
          %1357 = vdwg.mxu0
          %1358 = vmatpush.msra.mxu0 %v684
          %1359 = vmatpush.msra.mxu0 %v680
          %1360 = vmatpush.msra.mxu0 %v676
          %1361 = vmatpush.msra.mxu0 %v672
          %1362 = vmatpush.msra.mxu0 %v668
          %1363 = vmatpush.msra.mxu0 %v664
          %1364 = vmatpush.msra.mxu0 %v660
          %1365 = vmatpush.msra.mxu0 %v656
          %1366 = vmatpush.msra.mxu0 %v652
          %1367 = vmatpush.msra.mxu0 %v648
          %1368 = vmatpush.msra.mxu0 %v644
          %1369 = vmatpush.msra.mxu0 %v640
          %1370 = vmatpush.msra.mxu0 %v636
          %1371 = vmatpush.msra.mxu0 %v632
          %1372 = vmatpush.msra.mxu0 %v628
          %1373 = vmatpush.msra.mxu0 %v624
          %1374 = vmatmul.f32.gmra.mxu0 %v1080
          %v1375 = vpop.f32.mrf.mxu0
          %v1376 = vadd.f32 %v1356, %v1375
          %1377 = vdwg.mxu0
          %1378 = vmatpush.msra.mxu0 %v748
          %1379 = vmatpush.msra.mxu0 %v744
          %1380 = vmatpush.msra.mxu0 %v740
          %1381 = vmatpush.msra.mxu0 %v736
          %1382 = vmatpush.msra.mxu0 %v732
          %1383 = vmatpush.msra.mxu0 %v728
          %1384 = vmatpush.msra.mxu0 %v724
          %1385 = vmatpush.msra.mxu0 %v720
          %1386 = vmatpush.msra.mxu0 %v716
          %1387 = vmatpush.msra.mxu0 %v712
          %1388 = vmatpush.msra.mxu0 %v708
          %1389 = vmatpush.msra.mxu0 %v704
          %1390 = vmatpush.msra.mxu0 %v700
          %1391 = vmatpush.msra.mxu0 %v696
          %1392 = vmatpush.msra.mxu0 %v692
          %1393 = vmatpush.msra.mxu0 %v688
          %1394 = vmatmul.f32.gmra.mxu0 %v1081
          %v1395 = vpop.f32.mrf.mxu0
          %v1396 = vadd.f32 %v1376, %v1395
          %1397 = vdwg.mxu0
          %1398 = vmatpush.msra.mxu0 %v812
          %1399 = vmatpush.msra.mxu0 %v808
          %1400 = vmatpush.msra.mxu0 %v804
          %1401 = vmatpush.msra.mxu0 %v800
          %1402 = vmatpush.msra.mxu0 %v796
          %1403 = vmatpush.msra.mxu0 %v792
          %1404 = vmatpush.msra.mxu0 %v788
          %1405 = vmatpush.msra.mxu0 %v784
          %1406 = vmatpush.msra.mxu0 %v780
          %1407 = vmatpush.msra.mxu0 %v776
          %1408 = vmatpush.msra.mxu0 %v772
          %1409 = vmatpush.msra.mxu0 %v768
          %1410 = vmatpush.msra.mxu0 %v764
          %1411 = vmatpush.msra.mxu0 %v760
          %1412 = vmatpush.msra.mxu0 %v756
          %1413 = vmatpush.msra.mxu0 %v752
          %1414 = vmatmul.f32.gmra.mxu0 %v1082
          %v1415 = vpop.f32.mrf.mxu0
          %v1416 = vadd.f32 %v1396, %v1415
          %1417 = vdwg.mxu0
          %1418 = vmatpush.msra.mxu0 %v876
          %1419 = vmatpush.msra.mxu0 %v872
          %1420 = vmatpush.msra.mxu0 %v868
          %1421 = vmatpush.msra.mxu0 %v864
          %1422 = vmatpush.msra.mxu0 %v860
          %1423 = vmatpush.msra.mxu0 %v856
          %1424 = vmatpush.msra.mxu0 %v852
          %1425 = vmatpush.msra.mxu0 %v848
          %1426 = vmatpush.msra.mxu0 %v844
          %1427 = vmatpush.msra.mxu0 %v840
          %1428 = vmatpush.msra.mxu0 %v836
          %1429 = vmatpush.msra.mxu0 %v832
          %1430 = vmatpush.msra.mxu0 %v828
          %1431 = vmatpush.msra.mxu0 %v824
          %1432 = vmatpush.msra.mxu0 %v820
          %1433 = vmatpush.msra.mxu0 %v816
          %1434 = vmatmul.f32.gmra.mxu0 %v1083
          %v1435 = vpop.f32.mrf.mxu0
          %v1436 = vadd.f32 %v1416, %v1435
          %1437 = vdwg.mxu0
          %1438 = vmatpush.msra.mxu0 %v940
          %1439 = vmatpush.msra.mxu0 %v936
          %1440 = vmatpush.msra.mxu0 %v932
          %1441 = vmatpush.msra.mxu0 %v928
          %1442 = vmatpush.msra.mxu0 %v924
          %1443 = vmatpush.msra.mxu0 %v920
          %1444 = vmatpush.msra.mxu0 %v916
          %1445 = vmatpush.msra.mxu0 %v912
          %1446 = vmatpush.msra.mxu0 %v908
          %1447 = vmatpush.msra.mxu0 %v904
          %1448 = vmatpush.msra.mxu0 %v900
          %1449 = vmatpush.msra.mxu0 %v896
          %1450 = vmatpush.msra.mxu0 %v892
          %1451 = vmatpush.msra.mxu0 %v888
          %1452 = vmatpush.msra.mxu0 %v884
          %1453 = vmatpush.msra.mxu0 %v880
          %1454 = vmatmul.f32.gmra.mxu0 %v1084
          %v1455 = vpop.f32.mrf.mxu0
          %v1456 = vadd.f32 %v1436, %v1455
          %1457 = vdwg.mxu0
          %1458 = vmatpush.msra.mxu0 %v1004
          %1459 = vmatpush.msra.mxu0 %v1000
          %1460 = vmatpush.msra.mxu0 %v996
          %1461 = vmatpush.msra.mxu0 %v992
          %1462 = vmatpush.msra.mxu0 %v988
          %1463 = vmatpush.msra.mxu0 %v984
          %1464 = vmatpush.msra.mxu0 %v980
          %1465 = vmatpush.msra.mxu0 %v976
          %1466 = vmatpush.msra.mxu0 %v972
          %1467 = vmatpush.msra.mxu0 %v968
          %1468 = vmatpush.msra.mxu0 %v964
          %1469 = vmatpush.msra.mxu0 %v960
          %1470 = vmatpush.msra.mxu0 %v956
          %1471 = vmatpush.msra.mxu0 %v952
          %1472 = vmatpush.msra.mxu0 %v948
          %1473 = vmatpush.msra.mxu0 %v944
          %1474 = vmatmul.f32.gmra.mxu0 %v1086
          %v1475 = vpop.f32.mrf.mxu0
          %v1476 = vadd.f32 %v1456, %v1475
          %1477 = vdwg.mxu0
          %1478 = vmatpush.msra.mxu0 %v1068
          %1479 = vmatpush.msra.mxu0 %v1064
          %1480 = vmatpush.msra.mxu0 %v1060
          %1481 = vmatpush.msra.mxu0 %v1056
          %1482 = vmatpush.msra.mxu0 %v1052
          %1483 = vmatpush.msra.mxu0 %v1048
          %1484 = vmatpush.msra.mxu0 %v1044
          %1485 = vmatpush.msra.mxu0 %v1040
          %1486 = vmatpush.msra.mxu0 %v1036
          %1487 = vmatpush.msra.mxu0 %v1032
          %1488 = vmatpush.msra.mxu0 %v1028
          %1489 = vmatpush.msra.mxu0 %v1024
          %1490 = vmatpush.msra.mxu0 %v1020
          %1491 = vmatpush.msra.mxu0 %v1016
          %1492 = vmatpush.msra.mxu0 %v1012
          %1493 = vmatpush.msra.mxu0 %v1008
          %1494 = vmatmul.f32.gmra.mxu0 %v1087
          %v1495 = vpop.f32.mrf.mxu0
          %v1496 = vadd.f32 %v1476, %v1495
          %1497 = vdwg.mxu0
          %1498 = vmatpush.msra.mxu0 %v493
          %1499 = vmatpush.msra.mxu0 %v489
          %1500 = vmatpush.msra.mxu0 %v485
          %1501 = vmatpush.msra.mxu0 %v481
          %1502 = vmatpush.msra.mxu0 %v477
          %1503 = vmatpush.msra.mxu0 %v473
          %1504 = vmatpush.msra.mxu0 %v469
          %1505 = vmatpush.msra.mxu0 %v465
          %1506 = vmatpush.msra.mxu0 %v461
          %1507 = vmatpush.msra.mxu0 %v457
          %1508 = vmatpush.msra.mxu0 %v453
          %1509 = vmatpush.msra.mxu0 %v449
          %1510 = vmatpush.msra.mxu0 %v445
          %1511 = vmatpush.msra.mxu0 %v441
          %1512 = vmatpush.msra.mxu0 %v437
          %1513 = vmatpush.msra.mxu0 %v433
          %1514 = vmatmul.f32.gmra.mxu0 %v1077
          %v1515 = vpop.f32.mrf.mxu0
          %v1516 = vadd.f32 0.0, %v1515
          %1517 = vdwg.mxu0
          %1518 = vmatpush.msra.mxu0 %v557
          %1519 = vmatpush.msra.mxu0 %v553
          %1520 = vmatpush.msra.mxu0 %v549
          %1521 = vmatpush.msra.mxu0 %v545
          %1522 = vmatpush.msra.mxu0 %v541
          %1523 = vmatpush.msra.mxu0 %v537
          %1524 = vmatpush.msra.mxu0 %v533
          %1525 = vmatpush.msra.mxu0 %v529
          %1526 = vmatpush.msra.mxu0 %v525
          %1527 = vmatpush.msra.mxu0 %v521
          %1528 = vmatpush.msra.mxu0 %v517
          %1529 = vmatpush.msra.mxu0 %v513
          %1530 = vmatpush.msra.mxu0 %v509
          %1531 = vmatpush.msra.mxu0 %v505
          %1532 = vmatpush.msra.mxu0 %v501
          %1533 = vmatpush.msra.mxu0 %v497
          %1534 = vmatmul.f32.gmra.mxu0 %v1078
          %v1535 = vpop.f32.mrf.mxu0
          %v1536 = vadd.f32 %v1516, %v1535
          %1537 = vdwg.mxu0
          %1538 = vmatpush.msra.mxu0 %v621
          %1539 = vmatpush.msra.mxu0 %v617
          %1540 = vmatpush.msra.mxu0 %v613
          %1541 = vmatpush.msra.mxu0 %v609
          %1542 = vmatpush.msra.mxu0 %v605
          %1543 = vmatpush.msra.mxu0 %v601
          %1544 = vmatpush.msra.mxu0 %v597
          %1545 = vmatpush.msra.mxu0 %v593
          %1546 = vmatpush.msra.mxu0 %v589
          %1547 = vmatpush.msra.mxu0 %v585
          %1548 = vmatpush.msra.mxu0 %v581
          %1549 = vmatpush.msra.mxu0 %v577
          %1550 = vmatpush.msra.mxu0 %v573
          %1551 = vmatpush.msra.mxu0 %v569
          %1552 = vmatpush.msra.mxu0 %v565
          %1553 = vmatpush.msra.mxu0 %v561
          %1554 = vmatmul.f32.gmra.mxu0 %v1079
          %v1555 = vpop.f32.mrf.mxu0
          %v1556 = vadd.f32 %v1536, %v1555
          %1557 = vdwg.mxu0
          %1558 = vmatpush.msra.mxu0 %v685
          %1559 = vmatpush.msra.mxu0 %v681
          %1560 = vmatpush.msra.mxu0 %v677
          %1561 = vmatpush.msra.mxu0 %v673
          %1562 = vmatpush.msra.mxu0 %v669
          %1563 = vmatpush.msra.mxu0 %v665
          %1564 = vmatpush.msra.mxu0 %v661
          %1565 = vmatpush.msra.mxu0 %v657
          %1566 = vmatpush.msra.mxu0 %v653
          %1567 = vmatpush.msra.mxu0 %v649
          %1568 = vmatpush.msra.mxu0 %v645
          %1569 = vmatpush.msra.mxu0 %v641
          %1570 = vmatpush.msra.mxu0 %v637
          %1571 = vmatpush.msra.mxu0 %v633
          %1572 = vmatpush.msra.mxu0 %v629
          %1573 = vmatpush.msra.mxu0 %v625
          %1574 = vmatmul.f32.gmra.mxu0 %v1080
          %v1575 = vpop.f32.mrf.mxu0
          %v1576 = vadd.f32 %v1556, %v1575
          %1577 = vdwg.mxu0
          %1578 = vmatpush.msra.mxu0 %v749
          %1579 = vmatpush.msra.mxu0 %v745
          %1580 = vmatpush.msra.mxu0 %v741
          %1581 = vmatpush.msra.mxu0 %v737
          %1582 = vmatpush.msra.mxu0 %v733
          %1583 = vmatpush.msra.mxu0 %v729
          %1584 = vmatpush.msra.mxu0 %v725
          %1585 = vmatpush.msra.mxu0 %v721
          %1586 = vmatpush.msra.mxu0 %v717
          %1587 = vmatpush.msra.mxu0 %v713
          %1588 = vmatpush.msra.mxu0 %v709
          %1589 = vmatpush.msra.mxu0 %v705
          %1590 = vmatpush.msra.mxu0 %v701
          %1591 = vmatpush.msra.mxu0 %v697
          %1592 = vmatpush.msra.mxu0 %v693
          %1593 = vmatpush.msra.mxu0 %v689
          %1594 = vmatmul.f32.gmra.mxu0 %v1081
          %v1595 = vpop.f32.mrf.mxu0
          %v1596 = vadd.f32 %v1576, %v1595
          %1597 = vdwg.mxu0
          %1598 = vmatpush.msra.mxu0 %v813
          %1599 = vmatpush.msra.mxu0 %v809
          %1600 = vmatpush.msra.mxu0 %v805
          %1601 = vmatpush.msra.mxu0 %v801
          %1602 = vmatpush.msra.mxu0 %v797
          %1603 = vmatpush.msra.mxu0 %v793
          %1604 = vmatpush.msra.mxu0 %v789
          %1605 = vmatpush.msra.mxu0 %v785
          %1606 = vmatpush.msra.mxu0 %v781
          %1607 = vmatpush.msra.mxu0 %v777
          %1608 = vmatpush.msra.mxu0 %v773
          %1609 = vmatpush.msra.mxu0 %v769
          %1610 = vmatpush.msra.mxu0 %v765
          %1611 = vmatpush.msra.mxu0 %v761
          %1612 = vmatpush.msra.mxu0 %v757
          %1613 = vmatpush.msra.mxu0 %v753
          %1614 = vmatmul.f32.gmra.mxu0 %v1082
          %v1615 = vpop.f32.mrf.mxu0
          %v1616 = vadd.f32 %v1596, %v1615
          %1617 = vdwg.mxu0
          %1618 = vmatpush.msra.mxu0 %v877
          %1619 = vmatpush.msra.mxu0 %v873
          %1620 = vmatpush.msra.mxu0 %v869
          %1621 = vmatpush.msra.mxu0 %v865
          %1622 = vmatpush.msra.mxu0 %v861
          %1623 = vmatpush.msra.mxu0 %v857
          %1624 = vmatpush.msra.mxu0 %v853
          %1625 = vmatpush.msra.mxu0 %v849
          %1626 = vmatpush.msra.mxu0 %v845
          %1627 = vmatpush.msra.mxu0 %v841
          %1628 = vmatpush.msra.mxu0 %v837
          %1629 = vmatpush.msra.mxu0 %v833
          %1630 = vmatpush.msra.mxu0 %v829
          %1631 = vmatpush.msra.mxu0 %v825
          %1632 = vmatpush.msra.mxu0 %v821
          %1633 = vmatpush.msra.mxu0 %v817
          %1634 = vmatmul.f32.gmra.mxu0 %v1083
          %v1635 = vpop.f32.mrf.mxu0
          %v1636 = vadd.f32 %v1616, %v1635
          %1637 = vdwg.mxu0
          %1638 = vmatpush.msra.mxu0 %v941
          %1639 = vmatpush.msra.mxu0 %v937
          %1640 = vmatpush.msra.mxu0 %v933
          %1641 = vmatpush.msra.mxu0 %v929
          %1642 = vmatpush.msra.mxu0 %v925
          %1643 = vmatpush.msra.mxu0 %v921
          %1644 = vmatpush.msra.mxu0 %v917
          %1645 = vmatpush.msra.mxu0 %v913
          %1646 = vmatpush.msra.mxu0 %v909
          %1647 = vmatpush.msra.mxu0 %v905
          %1648 = vmatpush.msra.mxu0 %v901
          %1649 = vmatpush.msra.mxu0 %v897
          %1650 = vmatpush.msra.mxu0 %v893
          %1651 = vmatpush.msra.mxu0 %v889
          %1652 = vmatpush.msra.mxu0 %v885
          %1653 = vmatpush.msra.mxu0 %v881
          %1654 = vmatmul.f32.gmra.mxu0 %v1084
          %v1655 = vpop.f32.mrf.mxu0
          %v1656 = vadd.f32 %v1636, %v1655
          %1657 = vdwg.mxu0
          %1658 = vmatpush.msra.mxu0 %v1005
          %1659 = vmatpush.msra.mxu0 %v1001
          %1660 = vmatpush.msra.mxu0 %v997
          %1661 = vmatpush.msra.mxu0 %v993
          %1662 = vmatpush.msra.mxu0 %v989
          %1663 = vmatpush.msra.mxu0 %v985
          %1664 = vmatpush.msra.mxu0 %v981
          %1665 = vmatpush.msra.mxu0 %v977
          %1666 = vmatpush.msra.mxu0 %v973
          %1667 = vmatpush.msra.mxu0 %v969
          %1668 = vmatpush.msra.mxu0 %v965
          %1669 = vmatpush.msra.mxu0 %v961
          %1670 = vmatpush.msra.mxu0 %v957
          %1671 = vmatpush.msra.mxu0 %v953
          %1672 = vmatpush.msra.mxu0 %v949
          %1673 = vmatpush.msra.mxu0 %v945
          %1674 = vmatmul.f32.gmra.mxu0 %v1086
          %v1675 = vpop.f32.mrf.mxu0
          %v1676 = vadd.f32 %v1656, %v1675
          %1677 = vdwg.mxu0
          %1678 = vmatpush.msra.mxu0 %v1069
          %1679 = vmatpush.msra.mxu0 %v1065
          %1680 = vmatpush.msra.mxu0 %v1061
          %1681 = vmatpush.msra.mxu0 %v1057
          %1682 = vmatpush.msra.mxu0 %v1053
          %1683 = vmatpush.msra.mxu0 %v1049
          %1684 = vmatpush.msra.mxu0 %v1045
          %1685 = vmatpush.msra.mxu0 %v1041
          %1686 = vmatpush.msra.mxu0 %v1037
          %1687 = vmatpush.msra.mxu0 %v1033
          %1688 = vmatpush.msra.mxu0 %v1029
          %1689 = vmatpush.msra.mxu0 %v1025
          %1690 = vmatpush.msra.mxu0 %v1021
          %1691 = vmatpush.msra.mxu0 %v1017
          %1692 = vmatpush.msra.mxu0 %v1013
          %1693 = vmatpush.msra.mxu0 %v1009
          %1694 = vmatmul.f32.gmra.mxu0 %v1087
          %v1695 = vpop.f32.mrf.mxu0
          %v1696 = vadd.f32 %v1676, %v1695
          %1697 = vdwg.mxu0
          %1698 = vmatpush.msra.mxu0 %v494
          %1699 = vmatpush.msra.mxu0 %v490
          %1700 = vmatpush.msra.mxu0 %v486
          %1701 = vmatpush.msra.mxu0 %v482
          %1702 = vmatpush.msra.mxu0 %v478
          %1703 = vmatpush.msra.mxu0 %v474
          %1704 = vmatpush.msra.mxu0 %v470
          %1705 = vmatpush.msra.mxu0 %v466
          %1706 = vmatpush.msra.mxu0 %v462
          %1707 = vmatpush.msra.mxu0 %v458
          %1708 = vmatpush.msra.mxu0 %v454
          %1709 = vmatpush.msra.mxu0 %v450
          %1710 = vmatpush.msra.mxu0 %v446
          %1711 = vmatpush.msra.mxu0 %v442
          %1712 = vmatpush.msra.mxu0 %v438
          %1713 = vmatpush.msra.mxu0 %v434
          %1714 = vmatmul.f32.gmra.mxu0 %v1077
          %v1715 = vpop.f32.mrf.mxu0
          %v1716 = vadd.f32 0.0, %v1715
          %1717 = vdwg.mxu0
          %1718 = vmatpush.msra.mxu0 %v558
          %1719 = vmatpush.msra.mxu0 %v554
          %1720 = vmatpush.msra.mxu0 %v550
          %1721 = vmatpush.msra.mxu0 %v546
          %1722 = vmatpush.msra.mxu0 %v542
          %1723 = vmatpush.msra.mxu0 %v538
          %1724 = vmatpush.msra.mxu0 %v534
          %1725 = vmatpush.msra.mxu0 %v530
          %1726 = vmatpush.msra.mxu0 %v526
          %1727 = vmatpush.msra.mxu0 %v522
          %1728 = vmatpush.msra.mxu0 %v518
          %1729 = vmatpush.msra.mxu0 %v514
          %1730 = vmatpush.msra.mxu0 %v510
          %1731 = vmatpush.msra.mxu0 %v506
          %1732 = vmatpush.msra.mxu0 %v502
          %1733 = vmatpush.msra.mxu0 %v498
          %1734 = vmatmul.f32.gmra.mxu0 %v1078
          %v1735 = vpop.f32.mrf.mxu0
          %v1736 = vadd.f32 %v1716, %v1735
          %1737 = vdwg.mxu0
          %1738 = vmatpush.msra.mxu0 %v622
          %1739 = vmatpush.msra.mxu0 %v618
          %1740 = vmatpush.msra.mxu0 %v614
          %1741 = vmatpush.msra.mxu0 %v610
          %1742 = vmatpush.msra.mxu0 %v606
          %1743 = vmatpush.msra.mxu0 %v602
          %1744 = vmatpush.msra.mxu0 %v598
          %1745 = vmatpush.msra.mxu0 %v594
          %1746 = vmatpush.msra.mxu0 %v590
          %1747 = vmatpush.msra.mxu0 %v586
          %1748 = vmatpush.msra.mxu0 %v582
          %1749 = vmatpush.msra.mxu0 %v578
          %1750 = vmatpush.msra.mxu0 %v574
          %1751 = vmatpush.msra.mxu0 %v570
          %1752 = vmatpush.msra.mxu0 %v566
          %1753 = vmatpush.msra.mxu0 %v562
          %1754 = vmatmul.f32.gmra.mxu0 %v1079
          %v1755 = vpop.f32.mrf.mxu0
          %v1756 = vadd.f32 %v1736, %v1755
          %1757 = vdwg.mxu0
          %1758 = vmatpush.msra.mxu0 %v686
          %1759 = vmatpush.msra.mxu0 %v682
          %1760 = vmatpush.msra.mxu0 %v678
          %1761 = vmatpush.msra.mxu0 %v674
          %1762 = vmatpush.msra.mxu0 %v670
          %1763 = vmatpush.msra.mxu0 %v666
          %1764 = vmatpush.msra.mxu0 %v662
          %1765 = vmatpush.msra.mxu0 %v658
          %1766 = vmatpush.msra.mxu0 %v654
          %1767 = vmatpush.msra.mxu0 %v650
          %1768 = vmatpush.msra.mxu0 %v646
          %1769 = vmatpush.msra.mxu0 %v642
          %1770 = vmatpush.msra.mxu0 %v638
          %1771 = vmatpush.msra.mxu0 %v634
          %1772 = vmatpush.msra.mxu0 %v630
          %1773 = vmatpush.msra.mxu0 %v626
          %1774 = vmatmul.f32.gmra.mxu0 %v1080
          %v1775 = vpop.f32.mrf.mxu0
          %v1776 = vadd.f32 %v1756, %v1775
          %1777 = vdwg.mxu0
          %1778 = vmatpush.msra.mxu0 %v750
          %1779 = vmatpush.msra.mxu0 %v746
          %1780 = vmatpush.msra.mxu0 %v742
          %1781 = vmatpush.msra.mxu0 %v738
          %1782 = vmatpush.msra.mxu0 %v734
          %1783 = vmatpush.msra.mxu0 %v730
          %1784 = vmatpush.msra.mxu0 %v726
          %1785 = vmatpush.msra.mxu0 %v722
          %1786 = vmatpush.msra.mxu0 %v718
          %1787 = vmatpush.msra.mxu0 %v714
          %1788 = vmatpush.msra.mxu0 %v710
          %1789 = vmatpush.msra.mxu0 %v706
          %1790 = vmatpush.msra.mxu0 %v702
          %1791 = vmatpush.msra.mxu0 %v698
          %1792 = vmatpush.msra.mxu0 %v694
          %1793 = vmatpush.msra.mxu0 %v690
          %1794 = vmatmul.f32.gmra.mxu0 %v1081
          %v1795 = vpop.f32.mrf.mxu0
          %v1796 = vadd.f32 %v1776, %v1795
          %1797 = vdwg.mxu0
          %1798 = vmatpush.msra.mxu0 %v814
          %1799 = vmatpush.msra.mxu0 %v810
          %1800 = vmatpush.msra.mxu0 %v806
          %1801 = vmatpush.msra.mxu0 %v802
          %1802 = vmatpush.msra.mxu0 %v798
          %1803 = vmatpush.msra.mxu0 %v794
          %1804 = vmatpush.msra.mxu0 %v790
          %1805 = vmatpush.msra.mxu0 %v786
          %1806 = vmatpush.msra.mxu0 %v782
          %1807 = vmatpush.msra.mxu0 %v778
          %1808 = vmatpush.msra.mxu0 %v774
          %1809 = vmatpush.msra.mxu0 %v770
          %1810 = vmatpush.msra.mxu0 %v766
          %1811 = vmatpush.msra.mxu0 %v762
          %1812 = vmatpush.msra.mxu0 %v758
          %1813 = vmatpush.msra.mxu0 %v754
          %1814 = vmatmul.f32.gmra.mxu0 %v1082
          %v1815 = vpop.f32.mrf.mxu0
          %v1816 = vadd.f32 %v1796, %v1815
          %1817 = vdwg.mxu0
          %1818 = vmatpush.msra.mxu0 %v878
          %1819 = vmatpush.msra.mxu0 %v874
          %1820 = vmatpush.msra.mxu0 %v870
          %1821 = vmatpush.msra.mxu0 %v866
          %1822 = vmatpush.msra.mxu0 %v862
          %1823 = vmatpush.msra.mxu0 %v858
          %1824 = vmatpush.msra.mxu0 %v854
          %1825 = vmatpush.msra.mxu0 %v850
          %1826 = vmatpush.msra.mxu0 %v846
          %1827 = vmatpush.msra.mxu0 %v842
          %1828 = vmatpush.msra.mxu0 %v838
          %1829 = vmatpush.msra.mxu0 %v834
          %1830 = vmatpush.msra.mxu0 %v830
          %1831 = vmatpush.msra.mxu0 %v826
          %1832 = vmatpush.msra.mxu0 %v822
          %1833 = vmatpush.msra.mxu0 %v818
          %1834 = vmatmul.f32.gmra.mxu0 %v1083
          %v1835 = vpop.f32.mrf.mxu0
          %v1836 = vadd.f32 %v1816, %v1835
          %1837 = vdwg.mxu0
          %1838 = vmatpush.msra.mxu0 %v942
          %1839 = vmatpush.msra.mxu0 %v938
          %1840 = vmatpush.msra.mxu0 %v934
          %1841 = vmatpush.msra.mxu0 %v930
          %1842 = vmatpush.msra.mxu0 %v926
          %1843 = vmatpush.msra.mxu0 %v922
          %1844 = vmatpush.msra.mxu0 %v918
          %1845 = vmatpush.msra.mxu0 %v914
          %1846 = vmatpush.msra.mxu0 %v910
          %1847 = vmatpush.msra.mxu0 %v906
          %1848 = vmatpush.msra.mxu0 %v902
          %1849 = vmatpush.msra.mxu0 %v898
          %1850 = vmatpush.msra.mxu0 %v894
          %1851 = vmatpush.msra.mxu0 %v890
          %1852 = vmatpush.msra.mxu0 %v886
          %1853 = vmatpush.msra.mxu0 %v882
          %1854 = vmatmul.f32.gmra.mxu0 %v1084
          %v1855 = vpop.f32.mrf.mxu0
          %v1856 = vadd.f32 %v1836, %v1855
          %1857 = vdwg.mxu0
          %1858 = vmatpush.msra.mxu0 %v1006
          %1859 = vmatpush.msra.mxu0 %v1002
          %1860 = vmatpush.msra.mxu0 %v998
          %1861 = vmatpush.msra.mxu0 %v994
          %1862 = vmatpush.msra.mxu0 %v990
          %1863 = vmatpush.msra.mxu0 %v986
          %1864 = vmatpush.msra.mxu0 %v982
          %1865 = vmatpush.msra.mxu0 %v978
          %1866 = vmatpush.msra.mxu0 %v974
          %1867 = vmatpush.msra.mxu0 %v970
          %1868 = vmatpush.msra.mxu0 %v966
          %1869 = vmatpush.msra.mxu0 %v962
          %1870 = vmatpush.msra.mxu0 %v958
          %1871 = vmatpush.msra.mxu0 %v954
          %1872 = vmatpush.msra.mxu0 %v950
          %1873 = vmatpush.msra.mxu0 %v946
          %1874 = vmatmul.f32.gmra.mxu0 %v1086
          %v1875 = vpop.f32.mrf.mxu0
          %v1876 = vadd.f32 %v1856, %v1875
          %1877 = vdwg.mxu0
          %1878 = vmatpush.msra.mxu0 %v1070
          %1879 = vmatpush.msra.mxu0 %v1066
          %1880 = vmatpush.msra.mxu0 %v1062
          %1881 = vmatpush.msra.mxu0 %v1058
          %1882 = vmatpush.msra.mxu0 %v1054
          %1883 = vmatpush.msra.mxu0 %v1050
          %1884 = vmatpush.msra.mxu0 %v1046
          %1885 = vmatpush.msra.mxu0 %v1042
          %1886 = vmatpush.msra.mxu0 %v1038
          %1887 = vmatpush.msra.mxu0 %v1034
          %1888 = vmatpush.msra.mxu0 %v1030
          %1889 = vmatpush.msra.mxu0 %v1026
          %1890 = vmatpush.msra.mxu0 %v1022
          %1891 = vmatpush.msra.mxu0 %v1018
          %1892 = vmatpush.msra.mxu0 %v1014
          %1893 = vmatpush.msra.mxu0 %v1010
          %1894 = vmatmul.f32.gmra.mxu0 %v1087
          %v1895 = vpop.f32.mrf.mxu0
          %v1896 = vadd.f32 %v1876, %v1895
          %1897 = vdwg.mxu0
          %v1898 = vmul.f32 %v1296, 0.02795085
          %v1899 = vmul.f32 %v1496, 0.02795085
          %v1900 = vmul.f32 %v1696, 0.02795085
          %v1901 = vmul.f32 %v1896, 0.02795085
          %v1902 = vld [vmem:[%s353] sm:$0xf]
          %v1904 = vperm.slane %v1902, 0
          %v1905 = vperm.slane %v1902, 1
          %v1906 = vperm.slane %v1902, 2
          %v1907 = vperm.slane %v1902, 3
          %v1912 = vadd.f32 %v1898, %v1904
          %v1913 = vadd.f32 %v1899, %v1905
          %v1914 = vadd.f32 %v1900, %v1906
          %v1915 = vadd.f32 %v1901, %v1907
          %vm1916 = vcmp.ge.f32.partialorder %v1912, 0.0
          %vm1917 = vcmp.ge.f32.partialorder %v1913, 0.0
          %vm1918 = vcmp.ge.f32.partialorder %v1914, 0.0
          %vm1919 = vcmp.ge.f32.partialorder %v1915, 0.0
          %v1920 = vmul.f32 %v1912, 0.01
          %v1921 = vmul.f32 %v1913, 0.01
          %v1922 = vmul.f32 %v1914, 0.01
          %v1923 = vmul.f32 %v1915, 0.01
          %v1924 = vsel %vm1916, %v1912, %v1920
          %v1925 = vsel %vm1917, %v1913, %v1921
          %v1926 = vsel %vm1918, %v1914, %v1922
          %v1927 = vsel %vm1919, %v1915, %v1923
          %v1932 = vrot.slane %v1925, 6
          %v1933 = vrot.slane %v1926, 4
          %v1934 = vrot.slane %v1927, 2
          %vm1935 = vcmask 1041408
          %v1936 = vsel %vm1935, %v1924, %v1932
          %vm1937 = vcmask 1045508
          %v1938 = vsel %vm1937, %v1933, %v1934
          %vm1939 = vcmask 1043456
          %v1940 = vsel %vm1939, %v1936, %v1938
          %1942 = vst [vmem:[#allocation2] sm:$0xff] %v1940
        $region64: #{tpu_custom_call.1} parent=39 // pred_fallthru
          _
        %v1943 = vld [vmem:[#allocation2] sm:$0xff]
        %v1944 = vld [vmem:[%s363] sm:$0xff]
        %v1945 = vld [vmem:[%s363 + $0x8] sm:$0xff]
        %v1946 = vld [vmem:[%s363 + $0x10] sm:$0xff]
        %v1947 = vld [vmem:[%s363 + $0x18] sm:$0xff]
        %v1948 = vld [vmem:[%s363 + $0x20] sm:$0xff]
        %v1949 = vld [vmem:[%s363 + $0x28] sm:$0xff]
        %v1950 = vld [vmem:[%s363 + $0x30] sm:$0xff]
        %v1951 = vld [vmem:[%s363 + $0x38] sm:$0xff]
        %v1952 = vld [vmem:[%s363 + $0x40] sm:$0xff]
        %v1953 = vld [vmem:[%s363 + $0x48] sm:$0xff]
        %v1954 = vld [vmem:[%s363 + $0x50] sm:$0xff]
        %v1955 = vld [vmem:[%s363 + $0x58] sm:$0xff]
        %v1956 = vld [vmem:[%s363 + $0x60] sm:$0xff]
        %v1957 = vld [vmem:[%s363 + $0x68] sm:$0xff]
        %v1958 = vld [vmem:[%s363 + $0x70] sm:$0xff]
        %v1959 = vld [vmem:[%s363 + $0x78] sm:$0xff]
        %v1960 = vld [vmem:[%s363 + $0x80] sm:$0xff]
        %v1961 = vld [vmem:[%s363 + $0x88] sm:$0xff]
        %v1962 = vld [vmem:[%s363 + $0x90] sm:$0xff]
        %v1963 = vld [vmem:[%s363 + $0x98] sm:$0xff]
        %v1964 = vld [vmem:[%s363 + $0xa0] sm:$0xff]
        %v1965 = vld [vmem:[%s363 + $0xa8] sm:$0xff]
        %v1966 = vld [vmem:[%s363 + $0xb0] sm:$0xff]
        %v1967 = vld [vmem:[%s363 + $0xb8] sm:$0xff]
        %v1968 = vld [vmem:[%s363 + $0xc0] sm:$0xff]
        %v1969 = vld [vmem:[%s363 + $0xc8] sm:$0xff]
        %v1970 = vld [vmem:[%s363 + $0xd0] sm:$0xff]
        %v1971 = vld [vmem:[%s363 + $0xd8] sm:$0xff]
        %v1972 = vld [vmem:[%s363 + $0xe0] sm:$0xff]
        %v1973 = vld [vmem:[%s363 + $0xe8] sm:$0xff]
        %v1974 = vld [vmem:[%s363 + $0xf0] sm:$0xff]
        %v1975 = vld [vmem:[%s363 + $0xf8] sm:$0xff]
        %v1976 = vld [vmem:[%s363 + $0x100] sm:$0xff]
        %v1977 = vld [vmem:[%s363 + $0x108] sm:$0xff]
        %v1978 = vld [vmem:[%s363 + $0x110] sm:$0xff]
        %v1979 = vld [vmem:[%s363 + $0x118] sm:$0xff]
        %v1980 = vld [vmem:[%s363 + $0x120] sm:$0xff]
        %v1981 = vld [vmem:[%s363 + $0x128] sm:$0xff]
        %v1982 = vld [vmem:[%s363 + $0x130] sm:$0xff]
        %v1983 = vld [vmem:[%s363 + $0x138] sm:$0xff]
        %v1984 = vld [vmem:[%s363 + $0x140] sm:$0xff]
        %v1985 = vld [vmem:[%s363 + $0x148] sm:$0xff]
        %v1986 = vld [vmem:[%s363 + $0x150] sm:$0xff]
        %v1987 = vld [vmem:[%s363 + $0x158] sm:$0xff]
        %v1988 = vld [vmem:[%s363 + $0x160] sm:$0xff]
        %v1989 = vld [vmem:[%s363 + $0x168] sm:$0xff]
        %v1990 = vld [vmem:[%s363 + $0x170] sm:$0xff]
        %v1991 = vld [vmem:[%s363 + $0x178] sm:$0xff]
        %v1992 = vld [vmem:[%s363 + $0x180] sm:$0xff]
        %v1993 = vld [vmem:[%s363 + $0x188] sm:$0xff]
        %v1994 = vld [vmem:[%s363 + $0x190] sm:$0xff]
        %v1995 = vld [vmem:[%s363 + $0x198] sm:$0xff]
        %v1996 = vld [vmem:[%s363 + $0x1a0] sm:$0xff]
        %v1997 = vld [vmem:[%s363 + $0x1a8] sm:$0xff]
        %v1998 = vld [vmem:[%s363 + $0x1b0] sm:$0xff]
        %v1999 = vld [vmem:[%s363 + $0x1b8] sm:$0xff]
        %v2000 = vld [vmem:[%s363 + $0x1c0] sm:$0xff]
        %v2001 = vld [vmem:[%s363 + $0x1c8] sm:$0xff]
        %v2002 = vld [vmem:[%s363 + $0x1d0] sm:$0xff]
        %v2003 = vld [vmem:[%s363 + $0x1d8] sm:$0xff]
        %v2004 = vld [vmem:[%s363 + $0x1e0] sm:$0xff]
        %v2005 = vld [vmem:[%s363 + $0x1e8] sm:$0xff]
        %v2006 = vld [vmem:[%s363 + $0x1f0] sm:$0xff]
        %v2007 = vld [vmem:[%s363 + $0x1f8] sm:$0xff]
        %v2008 = vld [vmem:[%s363 + $0x200] sm:$0xff]
        %v2009 = vld [vmem:[%s363 + $0x208] sm:$0xff]
        %v2010 = vld [vmem:[%s363 + $0x210] sm:$0xff]
        %v2011 = vld [vmem:[%s363 + $0x218] sm:$0xff]
        %v2012 = vld [vmem:[%s363 + $0x220] sm:$0xff]
        %v2013 = vld [vmem:[%s363 + $0x228] sm:$0xff]
        %v2014 = vld [vmem:[%s363 + $0x230] sm:$0xff]
        %v2015 = vld [vmem:[%s363 + $0x238] sm:$0xff]
        %v2016 = vld [vmem:[%s363 + $0x240] sm:$0xff]
        %v2017 = vld [vmem:[%s363 + $0x248] sm:$0xff]
        %v2018 = vld [vmem:[%s363 + $0x250] sm:$0xff]
        %v2019 = vld [vmem:[%s363 + $0x258] sm:$0xff]
        %v2020 = vld [vmem:[%s363 + $0x260] sm:$0xff]
        %v2021 = vld [vmem:[%s363 + $0x268] sm:$0xff]
        %v2022 = vld [vmem:[%s363 + $0x270] sm:$0xff]
        %v2023 = vld [vmem:[%s363 + $0x278] sm:$0xff]
        %v2024 = vld [vmem:[%s363 + $0x280] sm:$0xff]
        %v2025 = vld [vmem:[%s363 + $0x288] sm:$0xff]
        %v2026 = vld [vmem:[%s363 + $0x290] sm:$0xff]
        %v2027 = vld [vmem:[%s363 + $0x298] sm:$0xff]
        %v2028 = vld [vmem:[%s363 + $0x2a0] sm:$0xff]
        %v2029 = vld [vmem:[%s363 + $0x2a8] sm:$0xff]
        %v2030 = vld [vmem:[%s363 + $0x2b0] sm:$0xff]
        %v2031 = vld [vmem:[%s363 + $0x2b8] sm:$0xff]
        %v2032 = vld [vmem:[%s363 + $0x2c0] sm:$0xff]
        %v2033 = vld [vmem:[%s363 + $0x2c8] sm:$0xff]
        %v2034 = vld [vmem:[%s363 + $0x2d0] sm:$0xff]
        %v2035 = vld [vmem:[%s363 + $0x2d8] sm:$0xff]
        %v2036 = vld [vmem:[%s363 + $0x2e0] sm:$0xff]
        %v2037 = vld [vmem:[%s363 + $0x2e8] sm:$0xff]
        %v2038 = vld [vmem:[%s363 + $0x2f0] sm:$0xff]
        %v2039 = vld [vmem:[%s363 + $0x2f8] sm:$0xff]
        %v2040 = vld [vmem:[%s363 + $0x300] sm:$0xff]
        %v2041 = vld [vmem:[%s363 + $0x308] sm:$0xff]
        %v2042 = vld [vmem:[%s363 + $0x310] sm:$0xff]
        %v2043 = vld [vmem:[%s363 + $0x318] sm:$0xff]
        %v2044 = vld [vmem:[%s363 + $0x320] sm:$0xff]
        %v2045 = vld [vmem:[%s363 + $0x328] sm:$0xff]
        %v2046 = vld [vmem:[%s363 + $0x330] sm:$0xff]
        %v2047 = vld [vmem:[%s363 + $0x338] sm:$0xff]
        %v2048 = vld [vmem:[%s363 + $0x340] sm:$0xff]
        %v2049 = vld [vmem:[%s363 + $0x348] sm:$0xff]
        %v2050 = vld [vmem:[%s363 + $0x350] sm:$0xff]
        %v2051 = vld [vmem:[%s363 + $0x358] sm:$0xff]
        %v2052 = vld [vmem:[%s363 + $0x360] sm:$0xff]
        %v2053 = vld [vmem:[%s363 + $0x368] sm:$0xff]
        %v2054 = vld [vmem:[%s363 + $0x370] sm:$0xff]
        %v2055 = vld [vmem:[%s363 + $0x378] sm:$0xff]
        %v2056 = vld [vmem:[%s363 + $0x380] sm:$0xff]
        %v2057 = vld [vmem:[%s363 + $0x388] sm:$0xff]
        %v2058 = vld [vmem:[%s363 + $0x390] sm:$0xff]
        %v2059 = vld [vmem:[%s363 + $0x398] sm:$0xff]
        %v2060 = vld [vmem:[%s363 + $0x3a0] sm:$0xff]
        %v2061 = vld [vmem:[%s363 + $0x3a8] sm:$0xff]
        %v2062 = vld [vmem:[%s363 + $0x3b0] sm:$0xff]
        %v2063 = vld [vmem:[%s363 + $0x3b8] sm:$0xff]
        %v2064 = vld [vmem:[%s363 + $0x3c0] sm:$0xff]
        %v2065 = vld [vmem:[%s363 + $0x3c8] sm:$0xff]
        %v2066 = vld [vmem:[%s363 + $0x3d0] sm:$0xff]
        %v2067 = vld [vmem:[%s363 + $0x3d8] sm:$0xff]
        %v2068 = vld [vmem:[%s363 + $0x3e0] sm:$0xff]
        %v2069 = vld [vmem:[%s363 + $0x3e8] sm:$0xff]
        %v2070 = vld [vmem:[%s363 + $0x3f0] sm:$0xff]
        %v2071 = vld [vmem:[%s363 + $0x3f8] sm:$0xff]
        %v2072 = vld [vmem:[%s363 + $0x400] sm:$0xff]
        %v2073 = vld [vmem:[%s363 + $0x408] sm:$0xff]
        %v2074 = vld [vmem:[%s363 + $0x410] sm:$0xff]
        %v2075 = vld [vmem:[%s363 + $0x418] sm:$0xff]
        %v2076 = vld [vmem:[%s363 + $0x420] sm:$0xff]
        %v2077 = vld [vmem:[%s363 + $0x428] sm:$0xff]
        %v2078 = vld [vmem:[%s363 + $0x430] sm:$0xff]
        %v2079 = vld [vmem:[%s363 + $0x438] sm:$0xff]
        %v2080 = vld [vmem:[%s363 + $0x440] sm:$0xff]
        %v2081 = vld [vmem:[%s363 + $0x448] sm:$0xff]
        %v2082 = vld [vmem:[%s363 + $0x450] sm:$0xff]
        %v2083 = vld [vmem:[%s363 + $0x458] sm:$0xff]
        %v2084 = vld [vmem:[%s363 + $0x460] sm:$0xff]
        %v2085 = vld [vmem:[%s363 + $0x468] sm:$0xff]
        %v2086 = vld [vmem:[%s363 + $0x470] sm:$0xff]
        %v2087 = vld [vmem:[%s363 + $0x478] sm:$0xff]
        %v2088 = vld [vmem:[%s363 + $0x480] sm:$0xff]
        %v2089 = vld [vmem:[%s363 + $0x488] sm:$0xff]
        %v2090 = vld [vmem:[%s363 + $0x490] sm:$0xff]
        %v2091 = vld [vmem:[%s363 + $0x498] sm:$0xff]
        %v2092 = vld [vmem:[%s363 + $0x4a0] sm:$0xff]
        %v2093 = vld [vmem:[%s363 + $0x4a8] sm:$0xff]
        %v2094 = vld [vmem:[%s363 + $0x4b0] sm:$0xff]
        %v2095 = vld [vmem:[%s363 + $0x4b8] sm:$0xff]
        %v2096 = vld [vmem:[%s363 + $0x4c0] sm:$0xff]
        %v2097 = vld [vmem:[%s363 + $0x4c8] sm:$0xff]
        %v2098 = vld [vmem:[%s363 + $0x4d0] sm:$0xff]
        %v2099 = vld [vmem:[%s363 + $0x4d8] sm:$0xff]
        %v2100 = vld [vmem:[%s363 + $0x4e0] sm:$0xff]
        %v2101 = vld [vmem:[%s363 + $0x4e8] sm:$0xff]
        %v2102 = vld [vmem:[%s363 + $0x4f0] sm:$0xff]
        %v2103 = vld [vmem:[%s363 + $0x4f8] sm:$0xff]
        %v2104 = vld [vmem:[%s363 + $0x500] sm:$0xff]
        %v2105 = vld [vmem:[%s363 + $0x508] sm:$0xff]
        %v2106 = vld [vmem:[%s363 + $0x510] sm:$0xff]
        %v2107 = vld [vmem:[%s363 + $0x518] sm:$0xff]
        %v2108 = vld [vmem:[%s363 + $0x520] sm:$0xff]
        %v2109 = vld [vmem:[%s363 + $0x528] sm:$0xff]
        %v2110 = vld [vmem:[%s363 + $0x530] sm:$0xff]
        %v2111 = vld [vmem:[%s363 + $0x538] sm:$0xff]
        %v2112 = vld [vmem:[%s363 + $0x540] sm:$0xff]
        %v2113 = vld [vmem:[%s363 + $0x548] sm:$0xff]
        %v2114 = vld [vmem:[%s363 + $0x550] sm:$0xff]
        %v2115 = vld [vmem:[%s363 + $0x558] sm:$0xff]
        %v2116 = vld [vmem:[%s363 + $0x560] sm:$0xff]
        %v2117 = vld [vmem:[%s363 + $0x568] sm:$0xff]
        %v2118 = vld [vmem:[%s363 + $0x570] sm:$0xff]
        %v2119 = vld [vmem:[%s363 + $0x578] sm:$0xff]
        %v2120 = vld [vmem:[%s363 + $0x580] sm:$0xff]
        %v2121 = vld [vmem:[%s363 + $0x588] sm:$0xff]
        %v2122 = vld [vmem:[%s363 + $0x590] sm:$0xff]
        %v2123 = vld [vmem:[%s363 + $0x598] sm:$0xff]
        %v2124 = vld [vmem:[%s363 + $0x5a0] sm:$0xff]
        %v2125 = vld [vmem:[%s363 + $0x5a8] sm:$0xff]
        %v2126 = vld [vmem:[%s363 + $0x5b0] sm:$0xff]
        %v2127 = vld [vmem:[%s363 + $0x5b8] sm:$0xff]
        %v2128 = vld [vmem:[%s363 + $0x5c0] sm:$0xff]
        %v2129 = vld [vmem:[%s363 + $0x5c8] sm:$0xff]
        %v2130 = vld [vmem:[%s363 + $0x5d0] sm:$0xff]
        %v2131 = vld [vmem:[%s363 + $0x5d8] sm:$0xff]
        %v2132 = vld [vmem:[%s363 + $0x5e0] sm:$0xff]
        %v2133 = vld [vmem:[%s363 + $0x5e8] sm:$0xff]
        %v2134 = vld [vmem:[%s363 + $0x5f0] sm:$0xff]
        %v2135 = vld [vmem:[%s363 + $0x5f8] sm:$0xff]
        %v2136 = vld [vmem:[%s363 + $0x600] sm:$0xff]
        %v2137 = vld [vmem:[%s363 + $0x608] sm:$0xff]
        %v2138 = vld [vmem:[%s363 + $0x610] sm:$0xff]
        %v2139 = vld [vmem:[%s363 + $0x618] sm:$0xff]
        %v2140 = vld [vmem:[%s363 + $0x620] sm:$0xff]
        %v2141 = vld [vmem:[%s363 + $0x628] sm:$0xff]
        %v2142 = vld [vmem:[%s363 + $0x630] sm:$0xff]
        %v2143 = vld [vmem:[%s363 + $0x638] sm:$0xff]
        %v2144 = vld [vmem:[%s363 + $0x640] sm:$0xff]
        %v2145 = vld [vmem:[%s363 + $0x648] sm:$0xff]
        %v2146 = vld [vmem:[%s363 + $0x650] sm:$0xff]
        %v2147 = vld [vmem:[%s363 + $0x658] sm:$0xff]
        %v2148 = vld [vmem:[%s363 + $0x660] sm:$0xff]
        %v2149 = vld [vmem:[%s363 + $0x668] sm:$0xff]
        %v2150 = vld [vmem:[%s363 + $0x670] sm:$0xff]
        %v2151 = vld [vmem:[%s363 + $0x678] sm:$0xff]
        %v2152 = vld [vmem:[%s363 + $0x680] sm:$0xff]
        %v2153 = vld [vmem:[%s363 + $0x688] sm:$0xff]
        %v2154 = vld [vmem:[%s363 + $0x690] sm:$0xff]
        %v2155 = vld [vmem:[%s363 + $0x698] sm:$0xff]
        %v2156 = vld [vmem:[%s363 + $0x6a0] sm:$0xff]
        %v2157 = vld [vmem:[%s363 + $0x6a8] sm:$0xff]
        %v2158 = vld [vmem:[%s363 + $0x6b0] sm:$0xff]
        %v2159 = vld [vmem:[%s363 + $0x6b8] sm:$0xff]
        %v2160 = vld [vmem:[%s363 + $0x6c0] sm:$0xff]
        %v2161 = vld [vmem:[%s363 + $0x6c8] sm:$0xff]
        %v2162 = vld [vmem:[%s363 + $0x6d0] sm:$0xff]
        %v2163 = vld [vmem:[%s363 + $0x6d8] sm:$0xff]
        %v2164 = vld [vmem:[%s363 + $0x6e0] sm:$0xff]
        %v2165 = vld [vmem:[%s363 + $0x6e8] sm:$0xff]
        %v2166 = vld [vmem:[%s363 + $0x6f0] sm:$0xff]
        %v2167 = vld [vmem:[%s363 + $0x6f8] sm:$0xff]
        %v2168 = vld [vmem:[%s363 + $0x700] sm:$0xff]
        %v2169 = vld [vmem:[%s363 + $0x708] sm:$0xff]
        %v2170 = vld [vmem:[%s363 + $0x710] sm:$0xff]
        %v2171 = vld [vmem:[%s363 + $0x718] sm:$0xff]
        %v2172 = vld [vmem:[%s363 + $0x720] sm:$0xff]
        %v2173 = vld [vmem:[%s363 + $0x728] sm:$0xff]
        %v2174 = vld [vmem:[%s363 + $0x730] sm:$0xff]
        %v2175 = vld [vmem:[%s363 + $0x738] sm:$0xff]
        %v2176 = vld [vmem:[%s363 + $0x740] sm:$0xff]
        %v2177 = vld [vmem:[%s363 + $0x748] sm:$0xff]
        %v2178 = vld [vmem:[%s363 + $0x750] sm:$0xff]
        %v2179 = vld [vmem:[%s363 + $0x758] sm:$0xff]
        %v2180 = vld [vmem:[%s363 + $0x760] sm:$0xff]
        %v2181 = vld [vmem:[%s363 + $0x768] sm:$0xff]
        %v2182 = vld [vmem:[%s363 + $0x770] sm:$0xff]
        %v2183 = vld [vmem:[%s363 + $0x778] sm:$0xff]
        %v2184 = vld [vmem:[%s363 + $0x780] sm:$0xff]
        %v2185 = vld [vmem:[%s363 + $0x788] sm:$0xff]
        %v2186 = vld [vmem:[%s363 + $0x790] sm:$0xff]
        %v2187 = vld [vmem:[%s363 + $0x798] sm:$0xff]
        %v2188 = vld [vmem:[%s363 + $0x7a0] sm:$0xff]
        %v2189 = vld [vmem:[%s363 + $0x7a8] sm:$0xff]
        %v2190 = vld [vmem:[%s363 + $0x7b0] sm:$0xff]
        %v2191 = vld [vmem:[%s363 + $0x7b8] sm:$0xff]
        %v2192 = vld [vmem:[%s363 + $0x7c0] sm:$0xff]
        %v2193 = vld [vmem:[%s363 + $0x7c8] sm:$0xff]
        %v2194 = vld [vmem:[%s363 + $0x7d0] sm:$0xff]
        %v2195 = vld [vmem:[%s363 + $0x7d8] sm:$0xff]
        %v2196 = vld [vmem:[%s363 + $0x7e0] sm:$0xff]
        %v2197 = vld [vmem:[%s363 + $0x7e8] sm:$0xff]
        %v2198 = vld [vmem:[%s363 + $0x7f0] sm:$0xff]
        %v2199 = vld [vmem:[%s363 + $0x7f8] sm:$0xff]
        %v2200 = vld [vmem:[%s363 + $0x800] sm:$0xff]
        %v2201 = vld [vmem:[%s363 + $0x808] sm:$0xff]
        %v2202 = vld [vmem:[%s363 + $0x810] sm:$0xff]
        %v2203 = vld [vmem:[%s363 + $0x818] sm:$0xff]
        %v2204 = vld [vmem:[%s363 + $0x820] sm:$0xff]
        %v2205 = vld [vmem:[%s363 + $0x828] sm:$0xff]
        %v2206 = vld [vmem:[%s363 + $0x830] sm:$0xff]
        %v2207 = vld [vmem:[%s363 + $0x838] sm:$0xff]
        %v2208 = vld [vmem:[%s363 + $0x840] sm:$0xff]
        %v2209 = vld [vmem:[%s363 + $0x848] sm:$0xff]
        %v2210 = vld [vmem:[%s363 + $0x850] sm:$0xff]
        %v2211 = vld [vmem:[%s363 + $0x858] sm:$0xff]
        %v2212 = vld [vmem:[%s363 + $0x860] sm:$0xff]
        %v2213 = vld [vmem:[%s363 + $0x868] sm:$0xff]
        %v2214 = vld [vmem:[%s363 + $0x870] sm:$0xff]
        %v2215 = vld [vmem:[%s363 + $0x878] sm:$0xff]
        %v2216 = vld [vmem:[%s363 + $0x880] sm:$0xff]
        %v2217 = vld [vmem:[%s363 + $0x888] sm:$0xff]
        %v2218 = vld [vmem:[%s363 + $0x890] sm:$0xff]
        %v2219 = vld [vmem:[%s363 + $0x898] sm:$0xff]
        %v2220 = vld [vmem:[%s363 + $0x8a0] sm:$0xff]
        %v2221 = vld [vmem:[%s363 + $0x8a8] sm:$0xff]
        %v2222 = vld [vmem:[%s363 + $0x8b0] sm:$0xff]
        %v2223 = vld [vmem:[%s363 + $0x8b8] sm:$0xff]
        %v2224 = vld [vmem:[%s363 + $0x8c0] sm:$0xff]
        %v2225 = vld [vmem:[%s363 + $0x8c8] sm:$0xff]
        %v2226 = vld [vmem:[%s363 + $0x8d0] sm:$0xff]
        %v2227 = vld [vmem:[%s363 + $0x8d8] sm:$0xff]
        %v2228 = vld [vmem:[%s363 + $0x8e0] sm:$0xff]
        %v2229 = vld [vmem:[%s363 + $0x8e8] sm:$0xff]
        %v2230 = vld [vmem:[%s363 + $0x8f0] sm:$0xff]
        %v2231 = vld [vmem:[%s363 + $0x8f8] sm:$0xff]
        %v2232 = vld [vmem:[%s363 + $0x900] sm:$0xff]
        %v2233 = vld [vmem:[%s363 + $0x908] sm:$0xff]
        %v2234 = vld [vmem:[%s363 + $0x910] sm:$0xff]
        %v2235 = vld [vmem:[%s363 + $0x918] sm:$0xff]
        %v2236 = vld [vmem:[%s363 + $0x920] sm:$0xff]
        %v2237 = vld [vmem:[%s363 + $0x928] sm:$0xff]
        %v2238 = vld [vmem:[%s363 + $0x930] sm:$0xff]
        %v2239 = vld [vmem:[%s363 + $0x938] sm:$0xff]
        %v2240 = vld [vmem:[%s363 + $0x940] sm:$0xff]
        %v2241 = vld [vmem:[%s363 + $0x948] sm:$0xff]
        %v2242 = vld [vmem:[%s363 + $0x950] sm:$0xff]
        %v2243 = vld [vmem:[%s363 + $0x958] sm:$0xff]
        %v2244 = vld [vmem:[%s363 + $0x960] sm:$0xff]
        %v2245 = vld [vmem:[%s363 + $0x968] sm:$0xff]
        %v2246 = vld [vmem:[%s363 + $0x970] sm:$0xff]
        %v2247 = vld [vmem:[%s363 + $0x978] sm:$0xff]
        %v2248 = vld [vmem:[%s363 + $0x980] sm:$0xff]
        %v2249 = vld [vmem:[%s363 + $0x988] sm:$0xff]
        %v2250 = vld [vmem:[%s363 + $0x990] sm:$0xff]
        %v2251 = vld [vmem:[%s363 + $0x998] sm:$0xff]
        %v2252 = vld [vmem:[%s363 + $0x9a0] sm:$0xff]
        %v2253 = vld [vmem:[%s363 + $0x9a8] sm:$0xff]
        %v2254 = vld [vmem:[%s363 + $0x9b0] sm:$0xff]
        %v2255 = vld [vmem:[%s363 + $0x9b8] sm:$0xff]
        %v2256 = vld [vmem:[%s363 + $0x9c0] sm:$0xff]
        %v2257 = vld [vmem:[%s363 + $0x9c8] sm:$0xff]
        %v2258 = vld [vmem:[%s363 + $0x9d0] sm:$0xff]
        %v2259 = vld [vmem:[%s363 + $0x9d8] sm:$0xff]
        %v2260 = vld [vmem:[%s363 + $0x9e0] sm:$0xff]
        %v2261 = vld [vmem:[%s363 + $0x9e8] sm:$0xff]
        %v2262 = vld [vmem:[%s363 + $0x9f0] sm:$0xff]
        %v2263 = vld [vmem:[%s363 + $0x9f8] sm:$0xff]
        %v2264 = vld [vmem:[%s363 + $0xa00] sm:$0xff]
        %v2265 = vld [vmem:[%s363 + $0xa08] sm:$0xff]
        %v2266 = vld [vmem:[%s363 + $0xa10] sm:$0xff]
        %v2267 = vld [vmem:[%s363 + $0xa18] sm:$0xff]
        %v2268 = vld [vmem:[%s363 + $0xa20] sm:$0xff]
        %v2269 = vld [vmem:[%s363 + $0xa28] sm:$0xff]
        %v2270 = vld [vmem:[%s363 + $0xa30] sm:$0xff]
        %v2271 = vld [vmem:[%s363 + $0xa38] sm:$0xff]
        %v2272 = vld [vmem:[%s363 + $0xa40] sm:$0xff]
        %v2273 = vld [vmem:[%s363 + $0xa48] sm:$0xff]
        %v2274 = vld [vmem:[%s363 + $0xa50] sm:$0xff]
        %v2275 = vld [vmem:[%s363 + $0xa58] sm:$0xff]
        %v2276 = vld [vmem:[%s363 + $0xa60] sm:$0xff]
        %v2277 = vld [vmem:[%s363 + $0xa68] sm:$0xff]
        %v2278 = vld [vmem:[%s363 + $0xa70] sm:$0xff]
        %v2279 = vld [vmem:[%s363 + $0xa78] sm:$0xff]
        %v2280 = vld [vmem:[%s363 + $0xa80] sm:$0xff]
        %v2281 = vld [vmem:[%s363 + $0xa88] sm:$0xff]
        %v2282 = vld [vmem:[%s363 + $0xa90] sm:$0xff]
        %v2283 = vld [vmem:[%s363 + $0xa98] sm:$0xff]
        %v2284 = vld [vmem:[%s363 + $0xaa0] sm:$0xff]
        %v2285 = vld [vmem:[%s363 + $0xaa8] sm:$0xff]
        %v2286 = vld [vmem:[%s363 + $0xab0] sm:$0xff]
        %v2287 = vld [vmem:[%s363 + $0xab8] sm:$0xff]
        %v2288 = vld [vmem:[%s363 + $0xac0] sm:$0xff]
        %v2289 = vld [vmem:[%s363 + $0xac8] sm:$0xff]
        %v2290 = vld [vmem:[%s363 + $0xad0] sm:$0xff]
        %v2291 = vld [vmem:[%s363 + $0xad8] sm:$0xff]
        %v2292 = vld [vmem:[%s363 + $0xae0] sm:$0xff]
        %v2293 = vld [vmem:[%s363 + $0xae8] sm:$0xff]
        %v2294 = vld [vmem:[%s363 + $0xaf0] sm:$0xff]
        %v2295 = vld [vmem:[%s363 + $0xaf8] sm:$0xff]
        %v2296 = vld [vmem:[%s363 + $0xb00] sm:$0xff]
        %v2297 = vld [vmem:[%s363 + $0xb08] sm:$0xff]
        %v2298 = vld [vmem:[%s363 + $0xb10] sm:$0xff]
        %v2299 = vld [vmem:[%s363 + $0xb18] sm:$0xff]
        %v2300 = vld [vmem:[%s363 + $0xb20] sm:$0xff]
        %v2301 = vld [vmem:[%s363 + $0xb28] sm:$0xff]
        %v2302 = vld [vmem:[%s363 + $0xb30] sm:$0xff]
        %v2303 = vld [vmem:[%s363 + $0xb38] sm:$0xff]
        %v2304 = vld [vmem:[%s363 + $0xb40] sm:$0xff]
        %v2305 = vld [vmem:[%s363 + $0xb48] sm:$0xff]
        %v2306 = vld [vmem:[%s363 + $0xb50] sm:$0xff]
        %v2307 = vld [vmem:[%s363 + $0xb58] sm:$0xff]
        %v2308 = vld [vmem:[%s363 + $0xb60] sm:$0xff]
        %v2309 = vld [vmem:[%s363 + $0xb68] sm:$0xff]
        %v2310 = vld [vmem:[%s363 + $0xb70] sm:$0xff]
        %v2311 = vld [vmem:[%s363 + $0xb78] sm:$0xff]
        %v2312 = vld [vmem:[%s363 + $0xb80] sm:$0xff]
        %v2313 = vld [vmem:[%s363 + $0xb88] sm:$0xff]
        %v2314 = vld [vmem:[%s363 + $0xb90] sm:$0xff]
        %v2315 = vld [vmem:[%s363 + $0xb98] sm:$0xff]
        %v2316 = vld [vmem:[%s363 + $0xba0] sm:$0xff]
        %v2317 = vld [vmem:[%s363 + $0xba8] sm:$0xff]
        %v2318 = vld [vmem:[%s363 + $0xbb0] sm:$0xff]
        %v2319 = vld [vmem:[%s363 + $0xbb8] sm:$0xff]
        %v2320 = vld [vmem:[%s363 + $0xbc0] sm:$0xff]
        %v2321 = vld [vmem:[%s363 + $0xbc8] sm:$0xff]
        %v2322 = vld [vmem:[%s363 + $0xbd0] sm:$0xff]
        %v2323 = vld [vmem:[%s363 + $0xbd8] sm:$0xff]
        %v2324 = vld [vmem:[%s363 + $0xbe0] sm:$0xff]
        %v2325 = vld [vmem:[%s363 + $0xbe8] sm:$0xff]
        %v2326 = vld [vmem:[%s363 + $0xbf0] sm:$0xff]
        %v2327 = vld [vmem:[%s363 + $0xbf8] sm:$0xff]
        %v2328 = vld [vmem:[%s363 + $0xc00] sm:$0xff]
        %v2329 = vld [vmem:[%s363 + $0xc08] sm:$0xff]
        %v2330 = vld [vmem:[%s363 + $0xc10] sm:$0xff]
        %v2331 = vld [vmem:[%s363 + $0xc18] sm:$0xff]
        %v2332 = vld [vmem:[%s363 + $0xc20] sm:$0xff]
        %v2333 = vld [vmem:[%s363 + $0xc28] sm:$0xff]
        %v2334 = vld [vmem:[%s363 + $0xc30] sm:$0xff]
        %v2335 = vld [vmem:[%s363 + $0xc38] sm:$0xff]
        %v2336 = vld [vmem:[%s363 + $0xc40] sm:$0xff]
        %v2337 = vld [vmem:[%s363 + $0xc48] sm:$0xff]
        %v2338 = vld [vmem:[%s363 + $0xc50] sm:$0xff]
        %v2339 = vld [vmem:[%s363 + $0xc58] sm:$0xff]
        %v2340 = vld [vmem:[%s363 + $0xc60] sm:$0xff]
        %v2341 = vld [vmem:[%s363 + $0xc68] sm:$0xff]
        %v2342 = vld [vmem:[%s363 + $0xc70] sm:$0xff]
        %v2343 = vld [vmem:[%s363 + $0xc78] sm:$0xff]
        %v2344 = vld [vmem:[%s363 + $0xc80] sm:$0xff]
        %v2345 = vld [vmem:[%s363 + $0xc88] sm:$0xff]
        %v2346 = vld [vmem:[%s363 + $0xc90] sm:$0xff]
        %v2347 = vld [vmem:[%s363 + $0xc98] sm:$0xff]
        %v2348 = vld [vmem:[%s363 + $0xca0] sm:$0xff]
        %v2349 = vld [vmem:[%s363 + $0xca8] sm:$0xff]
        %v2350 = vld [vmem:[%s363 + $0xcb0] sm:$0xff]
        %v2351 = vld [vmem:[%s363 + $0xcb8] sm:$0xff]
        %v2352 = vld [vmem:[%s363 + $0xcc0] sm:$0xff]
        %v2353 = vld [vmem:[%s363 + $0xcc8] sm:$0xff]
        %v2354 = vld [vmem:[%s363 + $0xcd0] sm:$0xff]
        %v2355 = vld [vmem:[%s363 + $0xcd8] sm:$0xff]
        %v2356 = vld [vmem:[%s363 + $0xce0] sm:$0xff]
        %v2357 = vld [vmem:[%s363 + $0xce8] sm:$0xff]
        %v2358 = vld [vmem:[%s363 + $0xcf0] sm:$0xff]
        %v2359 = vld [vmem:[%s363 + $0xcf8] sm:$0xff]
        %v2360 = vld [vmem:[%s363 + $0xd00] sm:$0xff]
        %v2361 = vld [vmem:[%s363 + $0xd08] sm:$0xff]
        %v2362 = vld [vmem:[%s363 + $0xd10] sm:$0xff]
        %v2363 = vld [vmem:[%s363 + $0xd18] sm:$0xff]
        %v2364 = vld [vmem:[%s363 + $0xd20] sm:$0xff]
        %v2365 = vld [vmem:[%s363 + $0xd28] sm:$0xff]
        %v2366 = vld [vmem:[%s363 + $0xd30] sm:$0xff]
        %v2367 = vld [vmem:[%s363 + $0xd38] sm:$0xff]
        %v2368 = vld [vmem:[%s363 + $0xd40] sm:$0xff]
        %v2369 = vld [vmem:[%s363 + $0xd48] sm:$0xff]
        %v2370 = vld [vmem:[%s363 + $0xd50] sm:$0xff]
        %v2371 = vld [vmem:[%s363 + $0xd58] sm:$0xff]
        %v2372 = vld [vmem:[%s363 + $0xd60] sm:$0xff]
        %v2373 = vld [vmem:[%s363 + $0xd68] sm:$0xff]
        %v2374 = vld [vmem:[%s363 + $0xd70] sm:$0xff]
        %v2375 = vld [vmem:[%s363 + $0xd78] sm:$0xff]
        %v2376 = vld [vmem:[%s363 + $0xd80] sm:$0xff]
        %v2377 = vld [vmem:[%s363 + $0xd88] sm:$0xff]
        %v2378 = vld [vmem:[%s363 + $0xd90] sm:$0xff]
        %v2379 = vld [vmem:[%s363 + $0xd98] sm:$0xff]
        %v2380 = vld [vmem:[%s363 + $0xda0] sm:$0xff]
        %v2381 = vld [vmem:[%s363 + $0xda8] sm:$0xff]
        %v2382 = vld [vmem:[%s363 + $0xdb0] sm:$0xff]
        %v2383 = vld [vmem:[%s363 + $0xdb8] sm:$0xff]
        %v2384 = vld [vmem:[%s363 + $0xdc0] sm:$0xff]
        %v2385 = vld [vmem:[%s363 + $0xdc8] sm:$0xff]
        %v2386 = vld [vmem:[%s363 + $0xdd0] sm:$0xff]
        %v2387 = vld [vmem:[%s363 + $0xdd8] sm:$0xff]
        %v2388 = vld [vmem:[%s363 + $0xde0] sm:$0xff]
        %v2389 = vld [vmem:[%s363 + $0xde8] sm:$0xff]
        %v2390 = vld [vmem:[%s363 + $0xdf0] sm:$0xff]
        %v2391 = vld [vmem:[%s363 + $0xdf8] sm:$0xff]
        %v2392 = vld [vmem:[%s363 + $0xe00] sm:$0xff]
        %v2393 = vld [vmem:[%s363 + $0xe08] sm:$0xff]
        %v2394 = vld [vmem:[%s363 + $0xe10] sm:$0xff]
        %v2395 = vld [vmem:[%s363 + $0xe18] sm:$0xff]
        %v2396 = vld [vmem:[%s363 + $0xe20] sm:$0xff]
        %v2397 = vld [vmem:[%s363 + $0xe28] sm:$0xff]
        %v2398 = vld [vmem:[%s363 + $0xe30] sm:$0xff]
        %v2399 = vld [vmem:[%s363 + $0xe38] sm:$0xff]
        %v2400 = vld [vmem:[%s363 + $0xe40] sm:$0xff]
        %v2401 = vld [vmem:[%s363 + $0xe48] sm:$0xff]
        %v2402 = vld [vmem:[%s363 + $0xe50] sm:$0xff]
        %v2403 = vld [vmem:[%s363 + $0xe58] sm:$0xff]
        %v2404 = vld [vmem:[%s363 + $0xe60] sm:$0xff]
        %v2405 = vld [vmem:[%s363 + $0xe68] sm:$0xff]
        %v2406 = vld [vmem:[%s363 + $0xe70] sm:$0xff]
        %v2407 = vld [vmem:[%s363 + $0xe78] sm:$0xff]
        %v2408 = vld [vmem:[%s363 + $0xe80] sm:$0xff]
        %v2409 = vld [vmem:[%s363 + $0xe88] sm:$0xff]
        %v2410 = vld [vmem:[%s363 + $0xe90] sm:$0xff]
        %v2411 = vld [vmem:[%s363 + $0xe98] sm:$0xff]
        %v2412 = vld [vmem:[%s363 + $0xea0] sm:$0xff]
        %v2413 = vld [vmem:[%s363 + $0xea8] sm:$0xff]
        %v2414 = vld [vmem:[%s363 + $0xeb0] sm:$0xff]
        %v2415 = vld [vmem:[%s363 + $0xeb8] sm:$0xff]
        %v2416 = vld [vmem:[%s363 + $0xec0] sm:$0xff]
        %v2417 = vld [vmem:[%s363 + $0xec8] sm:$0xff]
        %v2418 = vld [vmem:[%s363 + $0xed0] sm:$0xff]
        %v2419 = vld [vmem:[%s363 + $0xed8] sm:$0xff]
        %v2420 = vld [vmem:[%s363 + $0xee0] sm:$0xff]
        %v2421 = vld [vmem:[%s363 + $0xee8] sm:$0xff]
        %v2422 = vld [vmem:[%s363 + $0xef0] sm:$0xff]
        %v2423 = vld [vmem:[%s363 + $0xef8] sm:$0xff]
        %v2424 = vld [vmem:[%s363 + $0xf00] sm:$0xff]
        %v2425 = vld [vmem:[%s363 + $0xf08] sm:$0xff]
        %v2426 = vld [vmem:[%s363 + $0xf10] sm:$0xff]
        %v2427 = vld [vmem:[%s363 + $0xf18] sm:$0xff]
        %v2428 = vld [vmem:[%s363 + $0xf20] sm:$0xff]
        %v2429 = vld [vmem:[%s363 + $0xf28] sm:$0xff]
        %v2430 = vld [vmem:[%s363 + $0xf30] sm:$0xff]
        %v2431 = vld [vmem:[%s363 + $0xf38] sm:$0xff]
        %v2432 = vld [vmem:[%s363 + $0xf40] sm:$0xff]
        %v2433 = vld [vmem:[%s363 + $0xf48] sm:$0xff]
        %v2434 = vld [vmem:[%s363 + $0xf50] sm:$0xff]
        %v2435 = vld [vmem:[%s363 + $0xf58] sm:$0xff]
        %v2436 = vld [vmem:[%s363 + $0xf60] sm:$0xff]
        %v2437 = vld [vmem:[%s363 + $0xf68] sm:$0xff]
        %v2438 = vld [vmem:[%s363 + $0xf70] sm:$0xff]
        %v2439 = vld [vmem:[%s363 + $0xf78] sm:$0xff]
        %v2440 = vld [vmem:[%s363 + $0xf80] sm:$0xff]
        %v2441 = vld [vmem:[%s363 + $0xf88] sm:$0xff]
        %v2442 = vld [vmem:[%s363 + $0xf90] sm:$0xff]
        %v2443 = vld [vmem:[%s363 + $0xf98] sm:$0xff]
        %v2444 = vld [vmem:[%s363 + $0xfa0] sm:$0xff]
        %v2445 = vld [vmem:[%s363 + $0xfa8] sm:$0xff]
        %v2446 = vld [vmem:[%s363 + $0xfb0] sm:$0xff]
        %v2447 = vld [vmem:[%s363 + $0xfb8] sm:$0xff]
        %v2448 = vld [vmem:[%s363 + $0xfc0] sm:$0xff]
        %v2449 = vld [vmem:[%s363 + $0xfc8] sm:$0xff]
        %v2450 = vld [vmem:[%s363 + $0xfd0] sm:$0xff]
        %v2451 = vld [vmem:[%s363 + $0xfd8] sm:$0xff]
        %v2452 = vld [vmem:[%s363 + $0xfe0] sm:$0xff]
        %v2453 = vld [vmem:[%s363 + $0xfe8] sm:$0xff]
        %v2454 = vld [vmem:[%s363 + $0xff0] sm:$0xff]
        %v2455 = vld [vmem:[%s363 + $0xff8] sm:$0xff]
        %v2456 = vld [vmem:[%s363 + $0x1000] sm:$0xff]
        %v2457 = vld [vmem:[%s363 + $0x1008] sm:$0xff]
        %v2458 = vld [vmem:[%s363 + $0x1010] sm:$0xff]
        %v2459 = vld [vmem:[%s363 + $0x1018] sm:$0xff]
        %v2460 = vld [vmem:[%s363 + $0x1020] sm:$0xff]
        %v2461 = vld [vmem:[%s363 + $0x1028] sm:$0xff]
        %v2462 = vld [vmem:[%s363 + $0x1030] sm:$0xff]
        %v2463 = vld [vmem:[%s363 + $0x1038] sm:$0xff]
        %v2464 = vld [vmem:[%s363 + $0x1040] sm:$0xff]
        %v2465 = vld [vmem:[%s363 + $0x1048] sm:$0xff]
        %v2466 = vld [vmem:[%s363 + $0x1050] sm:$0xff]
        %v2467 = vld [vmem:[%s363 + $0x1058] sm:$0xff]
        %v2468 = vld [vmem:[%s363 + $0x1060] sm:$0xff]
        %v2469 = vld [vmem:[%s363 + $0x1068] sm:$0xff]
        %v2470 = vld [vmem:[%s363 + $0x1070] sm:$0xff]
        %v2471 = vld [vmem:[%s363 + $0x1078] sm:$0xff]
        %v2472 = vld [vmem:[%s363 + $0x1080] sm:$0xff]
        %v2473 = vld [vmem:[%s363 + $0x1088] sm:$0xff]
        %v2474 = vld [vmem:[%s363 + $0x1090] sm:$0xff]
        %v2475 = vld [vmem:[%s363 + $0x1098] sm:$0xff]
        %v2476 = vld [vmem:[%s363 + $0x10a0] sm:$0xff]
        %v2477 = vld [vmem:[%s363 + $0x10a8] sm:$0xff]
        %v2478 = vld [vmem:[%s363 + $0x10b0] sm:$0xff]
        %v2479 = vld [vmem:[%s363 + $0x10b8] sm:$0xff]
        %v2480 = vld [vmem:[%s363 + $0x10c0] sm:$0xff]
        %v2481 = vld [vmem:[%s363 + $0x10c8] sm:$0xff]
        %v2482 = vld [vmem:[%s363 + $0x10d0] sm:$0xff]
        %v2483 = vld [vmem:[%s363 + $0x10d8] sm:$0xff]
        %v2484 = vld [vmem:[%s363 + $0x10e0] sm:$0xff]
        %v2485 = vld [vmem:[%s363 + $0x10e8] sm:$0xff]
        %v2486 = vld [vmem:[%s363 + $0x10f0] sm:$0xff]
        %v2487 = vld [vmem:[%s363 + $0x10f8] sm:$0xff]
        %v2488 = vld [vmem:[%s363 + $0x1100] sm:$0xff]
        %v2489 = vld [vmem:[%s363 + $0x1108] sm:$0xff]
        %v2490 = vld [vmem:[%s363 + $0x1110] sm:$0xff]
        %v2491 = vld [vmem:[%s363 + $0x1118] sm:$0xff]
        %v2492 = vld [vmem:[%s363 + $0x1120] sm:$0xff]
        %v2493 = vld [vmem:[%s363 + $0x1128] sm:$0xff]
        %v2494 = vld [vmem:[%s363 + $0x1130] sm:$0xff]
        %v2495 = vld [vmem:[%s363 + $0x1138] sm:$0xff]
        %v2496 = vld [vmem:[%s363 + $0x1140] sm:$0xff]
        %v2497 = vld [vmem:[%s363 + $0x1148] sm:$0xff]
        %v2498 = vld [vmem:[%s363 + $0x1150] sm:$0xff]
        %v2499 = vld [vmem:[%s363 + $0x1158] sm:$0xff]
        %v2500 = vld [vmem:[%s363 + $0x1160] sm:$0xff]
        %v2501 = vld [vmem:[%s363 + $0x1168] sm:$0xff]
        %v2502 = vld [vmem:[%s363 + $0x1170] sm:$0xff]
        %v2503 = vld [vmem:[%s363 + $0x1178] sm:$0xff]
        %v2504 = vld [vmem:[%s363 + $0x1180] sm:$0xff]
        %v2505 = vld [vmem:[%s363 + $0x1188] sm:$0xff]
        %v2506 = vld [vmem:[%s363 + $0x1190] sm:$0xff]
        %v2507 = vld [vmem:[%s363 + $0x1198] sm:$0xff]
        %v2508 = vld [vmem:[%s363 + $0x11a0] sm:$0xff]
        %v2509 = vld [vmem:[%s363 + $0x11a8] sm:$0xff]
        %v2510 = vld [vmem:[%s363 + $0x11b0] sm:$0xff]
        %v2511 = vld [vmem:[%s363 + $0x11b8] sm:$0xff]
        %v2512 = vld [vmem:[%s363 + $0x11c0] sm:$0xff]
        %v2513 = vld [vmem:[%s363 + $0x11c8] sm:$0xff]
        %v2514 = vld [vmem:[%s363 + $0x11d0] sm:$0xff]
        %v2515 = vld [vmem:[%s363 + $0x11d8] sm:$0xff]
        %v2516 = vld [vmem:[%s363 + $0x11e0] sm:$0xff]
        %v2517 = vld [vmem:[%s363 + $0x11e8] sm:$0xff]
        %v2518 = vld [vmem:[%s363 + $0x11f0] sm:$0xff]
        %v2519 = vld [vmem:[%s363 + $0x11f8] sm:$0xff]
        %v2520 = vld [vmem:[%s363 + $0x1200] sm:$0xff]
        %v2521 = vld [vmem:[%s363 + $0x1208] sm:$0xff]
        %v2522 = vld [vmem:[%s363 + $0x1210] sm:$0xff]
        %v2523 = vld [vmem:[%s363 + $0x1218] sm:$0xff]
        %v2524 = vld [vmem:[%s363 + $0x1220] sm:$0xff]
        %v2525 = vld [vmem:[%s363 + $0x1228] sm:$0xff]
        %v2526 = vld [vmem:[%s363 + $0x1230] sm:$0xff]
        %v2527 = vld [vmem:[%s363 + $0x1238] sm:$0xff]
        %v2528 = vld [vmem:[%s363 + $0x1240] sm:$0xff]
        %v2529 = vld [vmem:[%s363 + $0x1248] sm:$0xff]
        %v2530 = vld [vmem:[%s363 + $0x1250] sm:$0xff]
        %v2531 = vld [vmem:[%s363 + $0x1258] sm:$0xff]
        %v2532 = vld [vmem:[%s363 + $0x1260] sm:$0xff]
        %v2533 = vld [vmem:[%s363 + $0x1268] sm:$0xff]
        %v2534 = vld [vmem:[%s363 + $0x1270] sm:$0xff]
        %v2535 = vld [vmem:[%s363 + $0x1278] sm:$0xff]
        %v2536 = vld [vmem:[%s363 + $0x1280] sm:$0xff]
        %v2537 = vld [vmem:[%s363 + $0x1288] sm:$0xff]
        %v2538 = vld [vmem:[%s363 + $0x1290] sm:$0xff]
        %v2539 = vld [vmem:[%s363 + $0x1298] sm:$0xff]
        %v2540 = vld [vmem:[%s363 + $0x12a0] sm:$0xff]
        %v2541 = vld [vmem:[%s363 + $0x12a8] sm:$0xff]
        %v2542 = vld [vmem:[%s363 + $0x12b0] sm:$0xff]
        %v2543 = vld [vmem:[%s363 + $0x12b8] sm:$0xff]
        %v2544 = vld [vmem:[%s363 + $0x12c0] sm:$0xff]
        %v2545 = vld [vmem:[%s363 + $0x12c8] sm:$0xff]
        %v2546 = vld [vmem:[%s363 + $0x12d0] sm:$0xff]
        %v2547 = vld [vmem:[%s363 + $0x12d8] sm:$0xff]
        %v2548 = vld [vmem:[%s363 + $0x12e0] sm:$0xff]
        %v2549 = vld [vmem:[%s363 + $0x12e8] sm:$0xff]
        %v2550 = vld [vmem:[%s363 + $0x12f0] sm:$0xff]
        %v2551 = vld [vmem:[%s363 + $0x12f8] sm:$0xff]
        %v2552 = vld [vmem:[%s363 + $0x1300] sm:$0xff]
        %v2553 = vld [vmem:[%s363 + $0x1308] sm:$0xff]
        %v2554 = vld [vmem:[%s363 + $0x1310] sm:$0xff]
        %v2555 = vld [vmem:[%s363 + $0x1318] sm:$0xff]
        %v2556 = vld [vmem:[%s363 + $0x1320] sm:$0xff]
        %v2557 = vld [vmem:[%s363 + $0x1328] sm:$0xff]
        %v2558 = vld [vmem:[%s363 + $0x1330] sm:$0xff]
        %v2559 = vld [vmem:[%s363 + $0x1338] sm:$0xff]
        %v2560 = vld [vmem:[%s363 + $0x1340] sm:$0xff]
        %v2561 = vld [vmem:[%s363 + $0x1348] sm:$0xff]
        %v2562 = vld [vmem:[%s363 + $0x1350] sm:$0xff]
        %v2563 = vld [vmem:[%s363 + $0x1358] sm:$0xff]
        %v2564 = vld [vmem:[%s363 + $0x1360] sm:$0xff]
        %v2565 = vld [vmem:[%s363 + $0x1368] sm:$0xff]
        %v2566 = vld [vmem:[%s363 + $0x1370] sm:$0xff]
        %v2567 = vld [vmem:[%s363 + $0x1378] sm:$0xff]
        %v2568 = vld [vmem:[%s363 + $0x1380] sm:$0xff]
        %v2569 = vld [vmem:[%s363 + $0x1388] sm:$0xff]
        %v2570 = vld [vmem:[%s363 + $0x1390] sm:$0xff]
        %v2571 = vld [vmem:[%s363 + $0x1398] sm:$0xff]
        %v2572 = vld [vmem:[%s363 + $0x13a0] sm:$0xff]
        %v2573 = vld [vmem:[%s363 + $0x13a8] sm:$0xff]
        %v2574 = vld [vmem:[%s363 + $0x13b0] sm:$0xff]
        %v2575 = vld [vmem:[%s363 + $0x13b8] sm:$0xff]
        %v2576 = vld [vmem:[%s363 + $0x13c0] sm:$0xff]
        %v2577 = vld [vmem:[%s363 + $0x13c8] sm:$0xff]
        %v2578 = vld [vmem:[%s363 + $0x13d0] sm:$0xff]
        %v2579 = vld [vmem:[%s363 + $0x13d8] sm:$0xff]
        %v2580 = vld [vmem:[%s363 + $0x13e0] sm:$0xff]
        %v2581 = vld [vmem:[%s363 + $0x13e8] sm:$0xff]
        %v2582 = vld [vmem:[%s363 + $0x13f0] sm:$0xff]
        %v2583 = vld [vmem:[%s363 + $0x13f8] sm:$0xff]
        %v2584 = vld [vmem:[%s363 + $0x1400] sm:$0xff]
        %v2585 = vld [vmem:[%s363 + $0x1408] sm:$0xff]
        %v2586 = vld [vmem:[%s363 + $0x1410] sm:$0xff]
        %v2587 = vld [vmem:[%s363 + $0x1418] sm:$0xff]
        %v2588 = vld [vmem:[%s363 + $0x1420] sm:$0xff]
        %v2589 = vld [vmem:[%s363 + $0x1428] sm:$0xff]
        %v2590 = vld [vmem:[%s363 + $0x1430] sm:$0xff]
        %v2591 = vld [vmem:[%s363 + $0x1438] sm:$0xff]
        %v2592 = vld [vmem:[%s363 + $0x1440] sm:$0xff]
        %v2593 = vld [vmem:[%s363 + $0x1448] sm:$0xff]
        %v2594 = vld [vmem:[%s363 + $0x1450] sm:$0xff]
        %v2595 = vld [vmem:[%s363 + $0x1458] sm:$0xff]
        %v2596 = vld [vmem:[%s363 + $0x1460] sm:$0xff]
        %v2597 = vld [vmem:[%s363 + $0x1468] sm:$0xff]
        %v2598 = vld [vmem:[%s363 + $0x1470] sm:$0xff]
        %v2599 = vld [vmem:[%s363 + $0x1478] sm:$0xff]
        %v2600 = vld [vmem:[%s363 + $0x1480] sm:$0xff]
        %v2601 = vld [vmem:[%s363 + $0x1488] sm:$0xff]
        %v2602 = vld [vmem:[%s363 + $0x1490] sm:$0xff]
        %v2603 = vld [vmem:[%s363 + $0x1498] sm:$0xff]
        %v2604 = vld [vmem:[%s363 + $0x14a0] sm:$0xff]
        %v2605 = vld [vmem:[%s363 + $0x14a8] sm:$0xff]
        %v2606 = vld [vmem:[%s363 + $0x14b0] sm:$0xff]
        %v2607 = vld [vmem:[%s363 + $0x14b8] sm:$0xff]
        %v2608 = vld [vmem:[%s363 + $0x14c0] sm:$0xff]
        %v2609 = vld [vmem:[%s363 + $0x14c8] sm:$0xff]
        %v2610 = vld [vmem:[%s363 + $0x14d0] sm:$0xff]
        %v2611 = vld [vmem:[%s363 + $0x14d8] sm:$0xff]
        %v2612 = vld [vmem:[%s363 + $0x14e0] sm:$0xff]
        %v2613 = vld [vmem:[%s363 + $0x14e8] sm:$0xff]
        %v2614 = vld [vmem:[%s363 + $0x14f0] sm:$0xff]
        %v2615 = vld [vmem:[%s363 + $0x14f8] sm:$0xff]
        %v2616 = vld [vmem:[%s363 + $0x1500] sm:$0xff]
        %v2617 = vld [vmem:[%s363 + $0x1508] sm:$0xff]
        %v2618 = vld [vmem:[%s363 + $0x1510] sm:$0xff]
        %v2619 = vld [vmem:[%s363 + $0x1518] sm:$0xff]
        %v2620 = vld [vmem:[%s363 + $0x1520] sm:$0xff]
        %v2621 = vld [vmem:[%s363 + $0x1528] sm:$0xff]
        %v2622 = vld [vmem:[%s363 + $0x1530] sm:$0xff]
        %v2623 = vld [vmem:[%s363 + $0x1538] sm:$0xff]
        %v2624 = vld [vmem:[%s363 + $0x1540] sm:$0xff]
        %v2625 = vld [vmem:[%s363 + $0x1548] sm:$0xff]
        %v2626 = vld [vmem:[%s363 + $0x1550] sm:$0xff]
        %v2627 = vld [vmem:[%s363 + $0x1558] sm:$0xff]
        %v2628 = vld [vmem:[%s363 + $0x1560] sm:$0xff]
        %v2629 = vld [vmem:[%s363 + $0x1568] sm:$0xff]
        %v2630 = vld [vmem:[%s363 + $0x1570] sm:$0xff]
        %v2631 = vld [vmem:[%s363 + $0x1578] sm:$0xff]
        %v2632 = vld [vmem:[%s363 + $0x1580] sm:$0xff]
        %v2633 = vld [vmem:[%s363 + $0x1588] sm:$0xff]
        %v2634 = vld [vmem:[%s363 + $0x1590] sm:$0xff]
        %v2635 = vld [vmem:[%s363 + $0x1598] sm:$0xff]
        %v2636 = vld [vmem:[%s363 + $0x15a0] sm:$0xff]
        %v2637 = vld [vmem:[%s363 + $0x15a8] sm:$0xff]
        %v2638 = vld [vmem:[%s363 + $0x15b0] sm:$0xff]
        %v2639 = vld [vmem:[%s363 + $0x15b8] sm:$0xff]
        %v2640 = vld [vmem:[%s363 + $0x15c0] sm:$0xff]
        %v2641 = vld [vmem:[%s363 + $0x15c8] sm:$0xff]
        %v2642 = vld [vmem:[%s363 + $0x15d0] sm:$0xff]
        %v2643 = vld [vmem:[%s363 + $0x15d8] sm:$0xff]
        %v2644 = vld [vmem:[%s363 + $0x15e0] sm:$0xff]
        %v2645 = vld [vmem:[%s363 + $0x15e8] sm:$0xff]
        %v2646 = vld [vmem:[%s363 + $0x15f0] sm:$0xff]
        %v2647 = vld [vmem:[%s363 + $0x15f8] sm:$0xff]
        %v2648 = vld [vmem:[%s363 + $0x1600] sm:$0xff]
        %v2649 = vld [vmem:[%s363 + $0x1608] sm:$0xff]
        %v2650 = vld [vmem:[%s363 + $0x1610] sm:$0xff]
        %v2651 = vld [vmem:[%s363 + $0x1618] sm:$0xff]
        %v2652 = vld [vmem:[%s363 + $0x1620] sm:$0xff]
        %v2653 = vld [vmem:[%s363 + $0x1628] sm:$0xff]
        %v2654 = vld [vmem:[%s363 + $0x1630] sm:$0xff]
        %v2655 = vld [vmem:[%s363 + $0x1638] sm:$0xff]
        %v2656 = vld [vmem:[%s363 + $0x1640] sm:$0xff]
        %v2657 = vld [vmem:[%s363 + $0x1648] sm:$0xff]
        %v2658 = vld [vmem:[%s363 + $0x1650] sm:$0xff]
        %v2659 = vld [vmem:[%s363 + $0x1658] sm:$0xff]
        %v2660 = vld [vmem:[%s363 + $0x1660] sm:$0xff]
        %v2661 = vld [vmem:[%s363 + $0x1668] sm:$0xff]
        %v2662 = vld [vmem:[%s363 + $0x1670] sm:$0xff]
        %v2663 = vld [vmem:[%s363 + $0x1678] sm:$0xff]
        %v2664 = vld [vmem:[%s363 + $0x1680] sm:$0xff]
        %v2665 = vld [vmem:[%s363 + $0x1688] sm:$0xff]
        %v2666 = vld [vmem:[%s363 + $0x1690] sm:$0xff]
        %v2667 = vld [vmem:[%s363 + $0x1698] sm:$0xff]
        %v2668 = vld [vmem:[%s363 + $0x16a0] sm:$0xff]
        %v2669 = vld [vmem:[%s363 + $0x16a8] sm:$0xff]
        %v2670 = vld [vmem:[%s363 + $0x16b0] sm:$0xff]
        %v2671 = vld [vmem:[%s363 + $0x16b8] sm:$0xff]
        %v2672 = vld [vmem:[%s363 + $0x16c0] sm:$0xff]
        %v2673 = vld [vmem:[%s363 + $0x16c8] sm:$0xff]
        %v2674 = vld [vmem:[%s363 + $0x16d0] sm:$0xff]
        %v2675 = vld [vmem:[%s363 + $0x16d8] sm:$0xff]
        %v2676 = vld [vmem:[%s363 + $0x16e0] sm:$0xff]
        %v2677 = vld [vmem:[%s363 + $0x16e8] sm:$0xff]
        %v2678 = vld [vmem:[%s363 + $0x16f0] sm:$0xff]
        %v2679 = vld [vmem:[%s363 + $0x16f8] sm:$0xff]
        %v2680 = vld [vmem:[%s363 + $0x1700] sm:$0xff]
        %v2681 = vld [vmem:[%s363 + $0x1708] sm:$0xff]
        %v2682 = vld [vmem:[%s363 + $0x1710] sm:$0xff]
        %v2683 = vld [vmem:[%s363 + $0x1718] sm:$0xff]
        %v2684 = vld [vmem:[%s363 + $0x1720] sm:$0xff]
        %v2685 = vld [vmem:[%s363 + $0x1728] sm:$0xff]
        %v2686 = vld [vmem:[%s363 + $0x1730] sm:$0xff]
        %v2687 = vld [vmem:[%s363 + $0x1738] sm:$0xff]
        %v2688 = vld [vmem:[%s363 + $0x1740] sm:$0xff]
        %v2689 = vld [vmem:[%s363 + $0x1748] sm:$0xff]
        %v2690 = vld [vmem:[%s363 + $0x1750] sm:$0xff]
        %v2691 = vld [vmem:[%s363 + $0x1758] sm:$0xff]
        %v2692 = vld [vmem:[%s363 + $0x1760] sm:$0xff]
        %v2693 = vld [vmem:[%s363 + $0x1768] sm:$0xff]
        %v2694 = vld [vmem:[%s363 + $0x1770] sm:$0xff]
        %v2695 = vld [vmem:[%s363 + $0x1778] sm:$0xff]
        %v2696 = vld [vmem:[%s363 + $0x1780] sm:$0xff]
        %v2697 = vld [vmem:[%s363 + $0x1788] sm:$0xff]
        %v2698 = vld [vmem:[%s363 + $0x1790] sm:$0xff]
        %v2699 = vld [vmem:[%s363 + $0x1798] sm:$0xff]
        %v2700 = vld [vmem:[%s363 + $0x17a0] sm:$0xff]
        %v2701 = vld [vmem:[%s363 + $0x17a8] sm:$0xff]
        %v2702 = vld [vmem:[%s363 + $0x17b0] sm:$0xff]
        %v2703 = vld [vmem:[%s363 + $0x17b8] sm:$0xff]
        %v2704 = vld [vmem:[%s363 + $0x17c0] sm:$0xff]
        %v2705 = vld [vmem:[%s363 + $0x17c8] sm:$0xff]
        %v2706 = vld [vmem:[%s363 + $0x17d0] sm:$0xff]
        %v2707 = vld [vmem:[%s363 + $0x17d8] sm:$0xff]
        %v2708 = vld [vmem:[%s363 + $0x17e0] sm:$0xff]
        %v2709 = vld [vmem:[%s363 + $0x17e8] sm:$0xff]
        %v2710 = vld [vmem:[%s363 + $0x17f0] sm:$0xff]
        %v2711 = vld [vmem:[%s363 + $0x17f8] sm:$0xff]
        %v2712 = vld [vmem:[%s363 + $0x1800] sm:$0xff]
        %v2713 = vld [vmem:[%s363 + $0x1808] sm:$0xff]
        %v2714 = vld [vmem:[%s363 + $0x1810] sm:$0xff]
        %v2715 = vld [vmem:[%s363 + $0x1818] sm:$0xff]
        %v2716 = vld [vmem:[%s363 + $0x1820] sm:$0xff]
        %v2717 = vld [vmem:[%s363 + $0x1828] sm:$0xff]
        %v2718 = vld [vmem:[%s363 + $0x1830] sm:$0xff]
        %v2719 = vld [vmem:[%s363 + $0x1838] sm:$0xff]
        %v2720 = vld [vmem:[%s363 + $0x1840] sm:$0xff]
        %v2721 = vld [vmem:[%s363 + $0x1848] sm:$0xff]
        %v2722 = vld [vmem:[%s363 + $0x1850] sm:$0xff]
        %v2723 = vld [vmem:[%s363 + $0x1858] sm:$0xff]
        %v2724 = vld [vmem:[%s363 + $0x1860] sm:$0xff]
        %v2725 = vld [vmem:[%s363 + $0x1868] sm:$0xff]
        %v2726 = vld [vmem:[%s363 + $0x1870] sm:$0xff]
        %v2727 = vld [vmem:[%s363 + $0x1878] sm:$0xff]
        %v2728 = vld [vmem:[%s363 + $0x1880] sm:$0xff]
        %v2729 = vld [vmem:[%s363 + $0x1888] sm:$0xff]
        %v2730 = vld [vmem:[%s363 + $0x1890] sm:$0xff]
        %v2731 = vld [vmem:[%s363 + $0x1898] sm:$0xff]
        %v2732 = vld [vmem:[%s363 + $0x18a0] sm:$0xff]
        %v2733 = vld [vmem:[%s363 + $0x18a8] sm:$0xff]
        %v2734 = vld [vmem:[%s363 + $0x18b0] sm:$0xff]
        %v2735 = vld [vmem:[%s363 + $0x18b8] sm:$0xff]
        %v2736 = vld [vmem:[%s363 + $0x18c0] sm:$0xff]
        %v2737 = vld [vmem:[%s363 + $0x18c8] sm:$0xff]
        %v2738 = vld [vmem:[%s363 + $0x18d0] sm:$0xff]
        %v2739 = vld [vmem:[%s363 + $0x18d8] sm:$0xff]
        %v2740 = vld [vmem:[%s363 + $0x18e0] sm:$0xff]
        %v2741 = vld [vmem:[%s363 + $0x18e8] sm:$0xff]
        %v2742 = vld [vmem:[%s363 + $0x18f0] sm:$0xff]
        %v2743 = vld [vmem:[%s363 + $0x18f8] sm:$0xff]
        %v2744 = vld [vmem:[%s363 + $0x1900] sm:$0xff]
        %v2745 = vld [vmem:[%s363 + $0x1908] sm:$0xff]
        %v2746 = vld [vmem:[%s363 + $0x1910] sm:$0xff]
        %v2747 = vld [vmem:[%s363 + $0x1918] sm:$0xff]
        %v2748 = vld [vmem:[%s363 + $0x1920] sm:$0xff]
        %v2749 = vld [vmem:[%s363 + $0x1928] sm:$0xff]
        %v2750 = vld [vmem:[%s363 + $0x1930] sm:$0xff]
        %v2751 = vld [vmem:[%s363 + $0x1938] sm:$0xff]
        %v2752 = vld [vmem:[%s363 + $0x1940] sm:$0xff]
        %v2753 = vld [vmem:[%s363 + $0x1948] sm:$0xff]
        %v2754 = vld [vmem:[%s363 + $0x1950] sm:$0xff]
        %v2755 = vld [vmem:[%s363 + $0x1958] sm:$0xff]
        %v2756 = vld [vmem:[%s363 + $0x1960] sm:$0xff]
        %v2757 = vld [vmem:[%s363 + $0x1968] sm:$0xff]
        %v2758 = vld [vmem:[%s363 + $0x1970] sm:$0xff]
        %v2759 = vld [vmem:[%s363 + $0x1978] sm:$0xff]
        %v2760 = vld [vmem:[%s363 + $0x1980] sm:$0xff]
        %v2761 = vld [vmem:[%s363 + $0x1988] sm:$0xff]
        %v2762 = vld [vmem:[%s363 + $0x1990] sm:$0xff]
        %v2763 = vld [vmem:[%s363 + $0x1998] sm:$0xff]
        %v2764 = vld [vmem:[%s363 + $0x19a0] sm:$0xff]
        %v2765 = vld [vmem:[%s363 + $0x19a8] sm:$0xff]
        %v2766 = vld [vmem:[%s363 + $0x19b0] sm:$0xff]
        %v2767 = vld [vmem:[%s363 + $0x19b8] sm:$0xff]
        %v2768 = vld [vmem:[%s363 + $0x19c0] sm:$0xff]
        %v2769 = vld [vmem:[%s363 + $0x19c8] sm:$0xff]
        %v2770 = vld [vmem:[%s363 + $0x19d0] sm:$0xff]
        %v2771 = vld [vmem:[%s363 + $0x19d8] sm:$0xff]
        %v2772 = vld [vmem:[%s363 + $0x19e0] sm:$0xff]
        %v2773 = vld [vmem:[%s363 + $0x19e8] sm:$0xff]
        %v2774 = vld [vmem:[%s363 + $0x19f0] sm:$0xff]
        %v2775 = vld [vmem:[%s363 + $0x19f8] sm:$0xff]
        %v2776 = vld [vmem:[%s363 + $0x1a00] sm:$0xff]
        %v2777 = vld [vmem:[%s363 + $0x1a08] sm:$0xff]
        %v2778 = vld [vmem:[%s363 + $0x1a10] sm:$0xff]
        %v2779 = vld [vmem:[%s363 + $0x1a18] sm:$0xff]
        %v2780 = vld [vmem:[%s363 + $0x1a20] sm:$0xff]
        %v2781 = vld [vmem:[%s363 + $0x1a28] sm:$0xff]
        %v2782 = vld [vmem:[%s363 + $0x1a30] sm:$0xff]
        %v2783 = vld [vmem:[%s363 + $0x1a38] sm:$0xff]
        %v2784 = vld [vmem:[%s363 + $0x1a40] sm:$0xff]
        %v2785 = vld [vmem:[%s363 + $0x1a48] sm:$0xff]
        %v2786 = vld [vmem:[%s363 + $0x1a50] sm:$0xff]
        %v2787 = vld [vmem:[%s363 + $0x1a58] sm:$0xff]
        %v2788 = vld [vmem:[%s363 + $0x1a60] sm:$0xff]
        %v2789 = vld [vmem:[%s363 + $0x1a68] sm:$0xff]
        %v2790 = vld [vmem:[%s363 + $0x1a70] sm:$0xff]
        %v2791 = vld [vmem:[%s363 + $0x1a78] sm:$0xff]
        %v2792 = vld [vmem:[%s363 + $0x1a80] sm:$0xff]
        %v2793 = vld [vmem:[%s363 + $0x1a88] sm:$0xff]
        %v2794 = vld [vmem:[%s363 + $0x1a90] sm:$0xff]
        %v2795 = vld [vmem:[%s363 + $0x1a98] sm:$0xff]
        %v2796 = vld [vmem:[%s363 + $0x1aa0] sm:$0xff]
        %v2797 = vld [vmem:[%s363 + $0x1aa8] sm:$0xff]
        %v2798 = vld [vmem:[%s363 + $0x1ab0] sm:$0xff]
        %v2799 = vld [vmem:[%s363 + $0x1ab8] sm:$0xff]
        %v2800 = vld [vmem:[%s363 + $0x1ac0] sm:$0xff]
        %v2801 = vld [vmem:[%s363 + $0x1ac8] sm:$0xff]
        %v2802 = vld [vmem:[%s363 + $0x1ad0] sm:$0xff]
        %v2803 = vld [vmem:[%s363 + $0x1ad8] sm:$0xff]
        %v2804 = vld [vmem:[%s363 + $0x1ae0] sm:$0xff]
        %v2805 = vld [vmem:[%s363 + $0x1ae8] sm:$0xff]
        %v2806 = vld [vmem:[%s363 + $0x1af0] sm:$0xff]
        %v2807 = vld [vmem:[%s363 + $0x1af8] sm:$0xff]
        %v2808 = vld [vmem:[%s363 + $0x1b00] sm:$0xff]
        %v2809 = vld [vmem:[%s363 + $0x1b08] sm:$0xff]
        %v2810 = vld [vmem:[%s363 + $0x1b10] sm:$0xff]
        %v2811 = vld [vmem:[%s363 + $0x1b18] sm:$0xff]
        %v2812 = vld [vmem:[%s363 + $0x1b20] sm:$0xff]
        %v2813 = vld [vmem:[%s363 + $0x1b28] sm:$0xff]
        %v2814 = vld [vmem:[%s363 + $0x1b30] sm:$0xff]
        %v2815 = vld [vmem:[%s363 + $0x1b38] sm:$0xff]
        %v2816 = vld [vmem:[%s363 + $0x1b40] sm:$0xff]
        %v2817 = vld [vmem:[%s363 + $0x1b48] sm:$0xff]
        %v2818 = vld [vmem:[%s363 + $0x1b50] sm:$0xff]
        %v2819 = vld [vmem:[%s363 + $0x1b58] sm:$0xff]
        %v2820 = vld [vmem:[%s363 + $0x1b60] sm:$0xff]
        %v2821 = vld [vmem:[%s363 + $0x1b68] sm:$0xff]
        %v2822 = vld [vmem:[%s363 + $0x1b70] sm:$0xff]
        %v2823 = vld [vmem:[%s363 + $0x1b78] sm:$0xff]
        %v2824 = vld [vmem:[%s363 + $0x1b80] sm:$0xff]
        %v2825 = vld [vmem:[%s363 + $0x1b88] sm:$0xff]
        %v2826 = vld [vmem:[%s363 + $0x1b90] sm:$0xff]
        %v2827 = vld [vmem:[%s363 + $0x1b98] sm:$0xff]
        %v2828 = vld [vmem:[%s363 + $0x1ba0] sm:$0xff]
        %v2829 = vld [vmem:[%s363 + $0x1ba8] sm:$0xff]
        %v2830 = vld [vmem:[%s363 + $0x1bb0] sm:$0xff]
        %v2831 = vld [vmem:[%s363 + $0x1bb8] sm:$0xff]
        %v2832 = vld [vmem:[%s363 + $0x1bc0] sm:$0xff]
        %v2833 = vld [vmem:[%s363 + $0x1bc8] sm:$0xff]
        %v2834 = vld [vmem:[%s363 + $0x1bd0] sm:$0xff]
        %v2835 = vld [vmem:[%s363 + $0x1bd8] sm:$0xff]
        %v2836 = vld [vmem:[%s363 + $0x1be0] sm:$0xff]
        %v2837 = vld [vmem:[%s363 + $0x1be8] sm:$0xff]
        %v2838 = vld [vmem:[%s363 + $0x1bf0] sm:$0xff]
        %v2839 = vld [vmem:[%s363 + $0x1bf8] sm:$0xff]
        %v2840 = vld [vmem:[%s363 + $0x1c00] sm:$0xff]
        %v2841 = vld [vmem:[%s363 + $0x1c08] sm:$0xff]
        %v2842 = vld [vmem:[%s363 + $0x1c10] sm:$0xff]
        %v2843 = vld [vmem:[%s363 + $0x1c18] sm:$0xff]
        %v2844 = vld [vmem:[%s363 + $0x1c20] sm:$0xff]
        %v2845 = vld [vmem:[%s363 + $0x1c28] sm:$0xff]
        %v2846 = vld [vmem:[%s363 + $0x1c30] sm:$0xff]
        %v2847 = vld [vmem:[%s363 + $0x1c38] sm:$0xff]
        %v2848 = vld [vmem:[%s363 + $0x1c40] sm:$0xff]
        %v2849 = vld [vmem:[%s363 + $0x1c48] sm:$0xff]
        %v2850 = vld [vmem:[%s363 + $0x1c50] sm:$0xff]
        %v2851 = vld [vmem:[%s363 + $0x1c58] sm:$0xff]
        %v2852 = vld [vmem:[%s363 + $0x1c60] sm:$0xff]
        %v2853 = vld [vmem:[%s363 + $0x1c68] sm:$0xff]
        %v2854 = vld [vmem:[%s363 + $0x1c70] sm:$0xff]
        %v2855 = vld [vmem:[%s363 + $0x1c78] sm:$0xff]
        %v2856 = vld [vmem:[%s363 + $0x1c80] sm:$0xff]
        %v2857 = vld [vmem:[%s363 + $0x1c88] sm:$0xff]
        %v2858 = vld [vmem:[%s363 + $0x1c90] sm:$0xff]
        %v2859 = vld [vmem:[%s363 + $0x1c98] sm:$0xff]
        %v2860 = vld [vmem:[%s363 + $0x1ca0] sm:$0xff]
        %v2861 = vld [vmem:[%s363 + $0x1ca8] sm:$0xff]
        %v2862 = vld [vmem:[%s363 + $0x1cb0] sm:$0xff]
        %v2863 = vld [vmem:[%s363 + $0x1cb8] sm:$0xff]
        %v2864 = vld [vmem:[%s363 + $0x1cc0] sm:$0xff]
        %v2865 = vld [vmem:[%s363 + $0x1cc8] sm:$0xff]
        %v2866 = vld [vmem:[%s363 + $0x1cd0] sm:$0xff]
        %v2867 = vld [vmem:[%s363 + $0x1cd8] sm:$0xff]
        %v2868 = vld [vmem:[%s363 + $0x1ce0] sm:$0xff]
        %v2869 = vld [vmem:[%s363 + $0x1ce8] sm:$0xff]
        %v2870 = vld [vmem:[%s363 + $0x1cf0] sm:$0xff]
        %v2871 = vld [vmem:[%s363 + $0x1cf8] sm:$0xff]
        %v2872 = vld [vmem:[%s363 + $0x1d00] sm:$0xff]
        %v2873 = vld [vmem:[%s363 + $0x1d08] sm:$0xff]
        %v2874 = vld [vmem:[%s363 + $0x1d10] sm:$0xff]
        %v2875 = vld [vmem:[%s363 + $0x1d18] sm:$0xff]
        %v2876 = vld [vmem:[%s363 + $0x1d20] sm:$0xff]
        %v2877 = vld [vmem:[%s363 + $0x1d28] sm:$0xff]
        %v2878 = vld [vmem:[%s363 + $0x1d30] sm:$0xff]
        %v2879 = vld [vmem:[%s363 + $0x1d38] sm:$0xff]
        %v2880 = vld [vmem:[%s363 + $0x1d40] sm:$0xff]
        %v2881 = vld [vmem:[%s363 + $0x1d48] sm:$0xff]
        %v2882 = vld [vmem:[%s363 + $0x1d50] sm:$0xff]
        %v2883 = vld [vmem:[%s363 + $0x1d58] sm:$0xff]
        %v2884 = vld [vmem:[%s363 + $0x1d60] sm:$0xff]
        %v2885 = vld [vmem:[%s363 + $0x1d68] sm:$0xff]
        %v2886 = vld [vmem:[%s363 + $0x1d70] sm:$0xff]
        %v2887 = vld [vmem:[%s363 + $0x1d78] sm:$0xff]
        %v2888 = vld [vmem:[%s363 + $0x1d80] sm:$0xff]
        %v2889 = vld [vmem:[%s363 + $0x1d88] sm:$0xff]
        %v2890 = vld [vmem:[%s363 + $0x1d90] sm:$0xff]
        %v2891 = vld [vmem:[%s363 + $0x1d98] sm:$0xff]
        %v2892 = vld [vmem:[%s363 + $0x1da0] sm:$0xff]
        %v2893 = vld [vmem:[%s363 + $0x1da8] sm:$0xff]
        %v2894 = vld [vmem:[%s363 + $0x1db0] sm:$0xff]
        %v2895 = vld [vmem:[%s363 + $0x1db8] sm:$0xff]
        %v2896 = vld [vmem:[%s363 + $0x1dc0] sm:$0xff]
        %v2897 = vld [vmem:[%s363 + $0x1dc8] sm:$0xff]
        %v2898 = vld [vmem:[%s363 + $0x1dd0] sm:$0xff]
        %v2899 = vld [vmem:[%s363 + $0x1dd8] sm:$0xff]
        %v2900 = vld [vmem:[%s363 + $0x1de0] sm:$0xff]
        %v2901 = vld [vmem:[%s363 + $0x1de8] sm:$0xff]
        %v2902 = vld [vmem:[%s363 + $0x1df0] sm:$0xff]
        %v2903 = vld [vmem:[%s363 + $0x1df8] sm:$0xff]
        %v2904 = vld [vmem:[%s363 + $0x1e00] sm:$0xff]
        %v2905 = vld [vmem:[%s363 + $0x1e08] sm:$0xff]
        %v2906 = vld [vmem:[%s363 + $0x1e10] sm:$0xff]
        %v2907 = vld [vmem:[%s363 + $0x1e18] sm:$0xff]
        %v2908 = vld [vmem:[%s363 + $0x1e20] sm:$0xff]
        %v2909 = vld [vmem:[%s363 + $0x1e28] sm:$0xff]
        %v2910 = vld [vmem:[%s363 + $0x1e30] sm:$0xff]
        %v2911 = vld [vmem:[%s363 + $0x1e38] sm:$0xff]
        %v2912 = vld [vmem:[%s363 + $0x1e40] sm:$0xff]
        %v2913 = vld [vmem:[%s363 + $0x1e48] sm:$0xff]
        %v2914 = vld [vmem:[%s363 + $0x1e50] sm:$0xff]
        %v2915 = vld [vmem:[%s363 + $0x1e58] sm:$0xff]
        %v2916 = vld [vmem:[%s363 + $0x1e60] sm:$0xff]
        %v2917 = vld [vmem:[%s363 + $0x1e68] sm:$0xff]
        %v2918 = vld [vmem:[%s363 + $0x1e70] sm:$0xff]
        %v2919 = vld [vmem:[%s363 + $0x1e78] sm:$0xff]
        %v2920 = vld [vmem:[%s363 + $0x1e80] sm:$0xff]
        %v2921 = vld [vmem:[%s363 + $0x1e88] sm:$0xff]
        %v2922 = vld [vmem:[%s363 + $0x1e90] sm:$0xff]
        %v2923 = vld [vmem:[%s363 + $0x1e98] sm:$0xff]
        %v2924 = vld [vmem:[%s363 + $0x1ea0] sm:$0xff]
        %v2925 = vld [vmem:[%s363 + $0x1ea8] sm:$0xff]
        %v2926 = vld [vmem:[%s363 + $0x1eb0] sm:$0xff]
        %v2927 = vld [vmem:[%s363 + $0x1eb8] sm:$0xff]
        %v2928 = vld [vmem:[%s363 + $0x1ec0] sm:$0xff]
        %v2929 = vld [vmem:[%s363 + $0x1ec8] sm:$0xff]
        %v2930 = vld [vmem:[%s363 + $0x1ed0] sm:$0xff]
        %v2931 = vld [vmem:[%s363 + $0x1ed8] sm:$0xff]
        %v2932 = vld [vmem:[%s363 + $0x1ee0] sm:$0xff]
        %v2933 = vld [vmem:[%s363 + $0x1ee8] sm:$0xff]
        %v2934 = vld [vmem:[%s363 + $0x1ef0] sm:$0xff]
        %v2935 = vld [vmem:[%s363 + $0x1ef8] sm:$0xff]
        %v2936 = vld [vmem:[%s363 + $0x1f00] sm:$0xff]
        %v2937 = vld [vmem:[%s363 + $0x1f08] sm:$0xff]
        %v2938 = vld [vmem:[%s363 + $0x1f10] sm:$0xff]
        %v2939 = vld [vmem:[%s363 + $0x1f18] sm:$0xff]
        %v2940 = vld [vmem:[%s363 + $0x1f20] sm:$0xff]
        %v2941 = vld [vmem:[%s363 + $0x1f28] sm:$0xff]
        %v2942 = vld [vmem:[%s363 + $0x1f30] sm:$0xff]
        %v2943 = vld [vmem:[%s363 + $0x1f38] sm:$0xff]
        %v2944 = vld [vmem:[%s363 + $0x1f40] sm:$0xff]
        %v2945 = vld [vmem:[%s363 + $0x1f48] sm:$0xff]
        %v2946 = vld [vmem:[%s363 + $0x1f50] sm:$0xff]
        %v2947 = vld [vmem:[%s363 + $0x1f58] sm:$0xff]
        %v2948 = vld [vmem:[%s363 + $0x1f60] sm:$0xff]
        %v2949 = vld [vmem:[%s363 + $0x1f68] sm:$0xff]
        %v2950 = vld [vmem:[%s363 + $0x1f70] sm:$0xff]
        %v2951 = vld [vmem:[%s363 + $0x1f78] sm:$0xff]
        %v2952 = vld [vmem:[%s363 + $0x1f80] sm:$0xff]
        %v2953 = vld [vmem:[%s363 + $0x1f88] sm:$0xff]
        %v2954 = vld [vmem:[%s363 + $0x1f90] sm:$0xff]
        %v2955 = vld [vmem:[%s363 + $0x1f98] sm:$0xff]
        %v2956 = vld [vmem:[%s363 + $0x1fa0] sm:$0xff]
        %v2957 = vld [vmem:[%s363 + $0x1fa8] sm:$0xff]
        %v2958 = vld [vmem:[%s363 + $0x1fb0] sm:$0xff]
        %v2959 = vld [vmem:[%s363 + $0x1fb8] sm:$0xff]
        %v2960 = vld [vmem:[%s363 + $0x1fc0] sm:$0xff]
        %v2961 = vld [vmem:[%s363 + $0x1fc8] sm:$0xff]
        %v2962 = vld [vmem:[%s363 + $0x1fd0] sm:$0xff]
        %v2963 = vld [vmem:[%s363 + $0x1fd8] sm:$0xff]
        %v2964 = vld [vmem:[%s363 + $0x1fe0] sm:$0xff]
        %v2965 = vld [vmem:[%s363 + $0x1fe8] sm:$0xff]
        %v2966 = vld [vmem:[%s363 + $0x1ff0] sm:$0xff]
        %v2967 = vld [vmem:[%s363 + $0x1ff8] sm:$0xff]
        %v2968 = vld [vmem:[%s363 + $0x2000] sm:$0xff]
        %v2969 = vld [vmem:[%s363 + $0x2008] sm:$0xff]
        %v2970 = vld [vmem:[%s363 + $0x2010] sm:$0xff]
        %v2971 = vld [vmem:[%s363 + $0x2018] sm:$0xff]
        %v2972 = vld [vmem:[%s363 + $0x2020] sm:$0xff]
        %v2973 = vld [vmem:[%s363 + $0x2028] sm:$0xff]
        %v2974 = vld [vmem:[%s363 + $0x2030] sm:$0xff]
        %v2975 = vld [vmem:[%s363 + $0x2038] sm:$0xff]
        %v2976 = vld [vmem:[%s363 + $0x2040] sm:$0xff]
        %v2977 = vld [vmem:[%s363 + $0x2048] sm:$0xff]
        %v2978 = vld [vmem:[%s363 + $0x2050] sm:$0xff]
        %v2979 = vld [vmem:[%s363 + $0x2058] sm:$0xff]
        %v2980 = vld [vmem:[%s363 + $0x2060] sm:$0xff]
        %v2981 = vld [vmem:[%s363 + $0x2068] sm:$0xff]
        %v2982 = vld [vmem:[%s363 + $0x2070] sm:$0xff]
        %v2983 = vld [vmem:[%s363 + $0x2078] sm:$0xff]
        %v2984 = vld [vmem:[%s363 + $0x2080] sm:$0xff]
        %v2985 = vld [vmem:[%s363 + $0x2088] sm:$0xff]
        %v2986 = vld [vmem:[%s363 + $0x2090] sm:$0xff]
        %v2987 = vld [vmem:[%s363 + $0x2098] sm:$0xff]
        %v2988 = vld [vmem:[%s363 + $0x20a0] sm:$0xff]
        %v2989 = vld [vmem:[%s363 + $0x20a8] sm:$0xff]
        %v2990 = vld [vmem:[%s363 + $0x20b0] sm:$0xff]
        %v2991 = vld [vmem:[%s363 + $0x20b8] sm:$0xff]
        %v2992 = vld [vmem:[%s363 + $0x20c0] sm:$0xff]
        %v2993 = vld [vmem:[%s363 + $0x20c8] sm:$0xff]
        %v2994 = vld [vmem:[%s363 + $0x20d0] sm:$0xff]
        %v2995 = vld [vmem:[%s363 + $0x20d8] sm:$0xff]
        %v2996 = vld [vmem:[%s363 + $0x20e0] sm:$0xff]
        %v2997 = vld [vmem:[%s363 + $0x20e8] sm:$0xff]
        %v2998 = vld [vmem:[%s363 + $0x20f0] sm:$0xff]
        %v2999 = vld [vmem:[%s363 + $0x20f8] sm:$0xff]
        %v3000 = vld [vmem:[%s363 + $0x2100] sm:$0xff]
        %v3001 = vld [vmem:[%s363 + $0x2108] sm:$0xff]
        %v3002 = vld [vmem:[%s363 + $0x2110] sm:$0xff]
        %v3003 = vld [vmem:[%s363 + $0x2118] sm:$0xff]
        %v3004 = vld [vmem:[%s363 + $0x2120] sm:$0xff]
        %v3005 = vld [vmem:[%s363 + $0x2128] sm:$0xff]
        %v3006 = vld [vmem:[%s363 + $0x2130] sm:$0xff]
        %v3007 = vld [vmem:[%s363 + $0x2138] sm:$0xff]
        %v3008 = vld [vmem:[%s363 + $0x2140] sm:$0xff]
        %v3009 = vld [vmem:[%s363 + $0x2148] sm:$0xff]
        %v3010 = vld [vmem:[%s363 + $0x2150] sm:$0xff]
        %v3011 = vld [vmem:[%s363 + $0x2158] sm:$0xff]
        %v3012 = vld [vmem:[%s363 + $0x2160] sm:$0xff]
        %v3013 = vld [vmem:[%s363 + $0x2168] sm:$0xff]
        %v3014 = vld [vmem:[%s363 + $0x2170] sm:$0xff]
        %v3015 = vld [vmem:[%s363 + $0x2178] sm:$0xff]
        %v3016 = vld [vmem:[%s363 + $0x2180] sm:$0xff]
        %v3017 = vld [vmem:[%s363 + $0x2188] sm:$0xff]
        %v3018 = vld [vmem:[%s363 + $0x2190] sm:$0xff]
        %v3019 = vld [vmem:[%s363 + $0x2198] sm:$0xff]
        %v3020 = vld [vmem:[%s363 + $0x21a0] sm:$0xff]
        %v3021 = vld [vmem:[%s363 + $0x21a8] sm:$0xff]
        %v3022 = vld [vmem:[%s363 + $0x21b0] sm:$0xff]
        %v3023 = vld [vmem:[%s363 + $0x21b8] sm:$0xff]
        %v3024 = vld [vmem:[%s363 + $0x21c0] sm:$0xff]
        %v3025 = vld [vmem:[%s363 + $0x21c8] sm:$0xff]
        %v3026 = vld [vmem:[%s363 + $0x21d0] sm:$0xff]
        %v3027 = vld [vmem:[%s363 + $0x21d8] sm:$0xff]
        %v3028 = vld [vmem:[%s363 + $0x21e0] sm:$0xff]
        %v3029 = vld [vmem:[%s363 + $0x21e8] sm:$0xff]
        %v3030 = vld [vmem:[%s363 + $0x21f0] sm:$0xff]
        %v3031 = vld [vmem:[%s363 + $0x21f8] sm:$0xff]
        %v3032 = vld [vmem:[%s363 + $0x2200] sm:$0xff]
        %v3033 = vld [vmem:[%s363 + $0x2208] sm:$0xff]
        %v3034 = vld [vmem:[%s363 + $0x2210] sm:$0xff]
        %v3035 = vld [vmem:[%s363 + $0x2218] sm:$0xff]
        %v3036 = vld [vmem:[%s363 + $0x2220] sm:$0xff]
        %v3037 = vld [vmem:[%s363 + $0x2228] sm:$0xff]
        %v3038 = vld [vmem:[%s363 + $0x2230] sm:$0xff]
        %v3039 = vld [vmem:[%s363 + $0x2238] sm:$0xff]
        %v3040 = vld [vmem:[%s363 + $0x2240] sm:$0xff]
        %v3041 = vld [vmem:[%s363 + $0x2248] sm:$0xff]
        %v3042 = vld [vmem:[%s363 + $0x2250] sm:$0xff]
        %v3043 = vld [vmem:[%s363 + $0x2258] sm:$0xff]
        %v3044 = vld [vmem:[%s363 + $0x2260] sm:$0xff]
        %v3045 = vld [vmem:[%s363 + $0x2268] sm:$0xff]
        %v3046 = vld [vmem:[%s363 + $0x2270] sm:$0xff]
        %v3047 = vld [vmem:[%s363 + $0x2278] sm:$0xff]
        %v3048 = vld [vmem:[%s363 + $0x2280] sm:$0xff]
        %v3049 = vld [vmem:[%s363 + $0x2288] sm:$0xff]
        %v3050 = vld [vmem:[%s363 + $0x2290] sm:$0xff]
        %v3051 = vld [vmem:[%s363 + $0x2298] sm:$0xff]
        %v3052 = vld [vmem:[%s363 + $0x22a0] sm:$0xff]
        %v3053 = vld [vmem:[%s363 + $0x22a8] sm:$0xff]
        %v3054 = vld [vmem:[%s363 + $0x22b0] sm:$0xff]
        %v3055 = vld [vmem:[%s363 + $0x22b8] sm:$0xff]
        %v3056 = vld [vmem:[%s363 + $0x22c0] sm:$0xff]
        %v3057 = vld [vmem:[%s363 + $0x22c8] sm:$0xff]
        %v3058 = vld [vmem:[%s363 + $0x22d0] sm:$0xff]
        %v3059 = vld [vmem:[%s363 + $0x22d8] sm:$0xff]
        %v3060 = vld [vmem:[%s363 + $0x22e0] sm:$0xff]
        %v3061 = vld [vmem:[%s363 + $0x22e8] sm:$0xff]
        %v3062 = vld [vmem:[%s363 + $0x22f0] sm:$0xff]
        %v3063 = vld [vmem:[%s363 + $0x22f8] sm:$0xff]
        %v3064 = vld [vmem:[%s363 + $0x2300] sm:$0xff]
        %v3065 = vld [vmem:[%s363 + $0x2308] sm:$0xff]
        %v3066 = vld [vmem:[%s363 + $0x2310] sm:$0xff]
        %v3067 = vld [vmem:[%s363 + $0x2318] sm:$0xff]
        %v3068 = vld [vmem:[%s363 + $0x2320] sm:$0xff]
        %v3069 = vld [vmem:[%s363 + $0x2328] sm:$0xff]
        %v3070 = vld [vmem:[%s363 + $0x2330] sm:$0xff]
        %v3071 = vld [vmem:[%s363 + $0x2338] sm:$0xff]
        %v3072 = vld [vmem:[%s363 + $0x2340] sm:$0xff]
        %v3073 = vld [vmem:[%s363 + $0x2348] sm:$0xff]
        %v3074 = vld [vmem:[%s363 + $0x2350] sm:$0xff]
        %v3075 = vld [vmem:[%s363 + $0x2358] sm:$0xff]
        %v3076 = vld [vmem:[%s363 + $0x2360] sm:$0xff]
        %v3077 = vld [vmem:[%s363 + $0x2368] sm:$0xff]
        %v3078 = vld [vmem:[%s363 + $0x2370] sm:$0xff]
        %v3079 = vld [vmem:[%s363 + $0x2378] sm:$0xff]
        %v3080 = vld [vmem:[%s363 + $0x2380] sm:$0xff]
        %v3081 = vld [vmem:[%s363 + $0x2388] sm:$0xff]
        %v3082 = vld [vmem:[%s363 + $0x2390] sm:$0xff]
        %v3083 = vld [vmem:[%s363 + $0x2398] sm:$0xff]
        %v3084 = vld [vmem:[%s363 + $0x23a0] sm:$0xff]
        %v3085 = vld [vmem:[%s363 + $0x23a8] sm:$0xff]
        %v3086 = vld [vmem:[%s363 + $0x23b0] sm:$0xff]
        %v3087 = vld [vmem:[%s363 + $0x23b8] sm:$0xff]
        %v3088 = vld [vmem:[%s363 + $0x23c0] sm:$0xff]
        %v3089 = vld [vmem:[%s363 + $0x23c8] sm:$0xff]
        %v3090 = vld [vmem:[%s363 + $0x23d0] sm:$0xff]
        %v3091 = vld [vmem:[%s363 + $0x23d8] sm:$0xff]
        %v3092 = vld [vmem:[%s363 + $0x23e0] sm:$0xff]
        %v3093 = vld [vmem:[%s363 + $0x23e8] sm:$0xff]
        %v3094 = vld [vmem:[%s363 + $0x23f0] sm:$0xff]
        %v3095 = vld [vmem:[%s363 + $0x23f8] sm:$0xff]
        %3097 = vst [vmem:[#allocation1] ss:$4 sm:$0xff] %v1943
        %v3098 = vld.sshfl [vmem:[#allocation1] sm:$0xff pattern:$0x73625140]
        %v3099 = vld.sshfl [vmem:[#allocation1 + $0x8] sm:$0xff pattern:$0x73625140]
        %v3100 = vld.sshfl [vmem:[#allocation1 + $0x10] sm:$0xff pattern:$0x73625140]
        %v3101 = vld.sshfl [vmem:[#allocation1 + $0x18] sm:$0xff pattern:$0x73625140]
        %3106 = vmatpush.msra.mxu0 %v2214
        %3107 = vmatpush.msra.mxu0 %v2196
        %3108 = vmatpush.msra.mxu0 %v2178
        %3109 = vmatpush.msra.mxu0 %v2160
        %3110 = vmatpush.msra.mxu0 %v2142
        %3111 = vmatpush.msra.mxu0 %v2124
        %3112 = vmatpush.msra.mxu0 %v2106
        %3113 = vmatpush.msra.mxu0 %v2088
        %3114 = vmatpush.msra.mxu0 %v2070
        %3115 = vmatpush.msra.mxu0 %v2052
        %3116 = vmatpush.msra.mxu0 %v2034
        %3117 = vmatpush.msra.mxu0 %v2016
        %3118 = vmatpush.msra.mxu0 %v1998
        %3119 = vmatpush.msra.mxu0 %v1980
        %3120 = vmatpush.msra.mxu0 %v1962
        %3121 = vmatpush.msra.mxu0 %v1944
        %3122 = vmatmul.f32.gmra.mxu0 %v3098
        %v3123 = vpop.f32.mrf.mxu0
        %v3124 = vadd.f32 0.0, %v3123
        %3125 = vdwg.mxu0
        %3126 = vmatpush.msra.mxu0 %v2502
        %3127 = vmatpush.msra.mxu0 %v2484
        %3128 = vmatpush.msra.mxu0 %v2466
        %3129 = vmatpush.msra.mxu0 %v2448
        %3130 = vmatpush.msra.mxu0 %v2430
        %3131 = vmatpush.msra.mxu0 %v2412
        %3132 = vmatpush.msra.mxu0 %v2394
        %3133 = vmatpush.msra.mxu0 %v2376
        %3134 = vmatpush.msra.mxu0 %v2358
        %3135 = vmatpush.msra.mxu0 %v2340
        %3136 = vmatpush.msra.mxu0 %v2322
        %3137 = vmatpush.msra.mxu0 %v2304
        %3138 = vmatpush.msra.mxu0 %v2286
        %3139 = vmatpush.msra.mxu0 %v2268
        %3140 = vmatpush.msra.mxu0 %v2250
        %3141 = vmatpush.msra.mxu0 %v2232
        %3142 = vmatmul.f32.gmra.mxu0 %v3099
        %v3143 = vpop.f32.mrf.mxu0
        %v3144 = vadd.f32 %v3124, %v3143
        %3145 = vdwg.mxu0
        %3146 = vmatpush.msra.mxu0 %v2790
        %3147 = vmatpush.msra.mxu0 %v2772
        %3148 = vmatpush.msra.mxu0 %v2754
        %3149 = vmatpush.msra.mxu0 %v2736
        %3150 = vmatpush.msra.mxu0 %v2718
        %3151 = vmatpush.msra.mxu0 %v2700
        %3152 = vmatpush.msra.mxu0 %v2682
        %3153 = vmatpush.msra.mxu0 %v2664
        %3154 = vmatpush.msra.mxu0 %v2646
        %3155 = vmatpush.msra.mxu0 %v2628
        %3156 = vmatpush.msra.mxu0 %v2610
        %3157 = vmatpush.msra.mxu0 %v2592
        %3158 = vmatpush.msra.mxu0 %v2574
        %3159 = vmatpush.msra.mxu0 %v2556
        %3160 = vmatpush.msra.mxu0 %v2538
        %3161 = vmatpush.msra.mxu0 %v2520
        %3162 = vmatmul.f32.gmra.mxu0 %v3100
        %v3163 = vpop.f32.mrf.mxu0
        %v3164 = vadd.f32 %v3144, %v3163
        %3165 = vdwg.mxu0
        %3166 = vmatpush.msra.mxu0 %v3078
        %3167 = vmatpush.msra.mxu0 %v3060
        %3168 = vmatpush.msra.mxu0 %v3042
        %3169 = vmatpush.msra.mxu0 %v3024
        %3170 = vmatpush.msra.mxu0 %v3006
        %3171 = vmatpush.msra.mxu0 %v2988
        %3172 = vmatpush.msra.mxu0 %v2970
        %3173 = vmatpush.msra.mxu0 %v2952
        %3174 = vmatpush.msra.mxu0 %v2934
        %3175 = vmatpush.msra.mxu0 %v2916
        %3176 = vmatpush.msra.mxu0 %v2898
        %3177 = vmatpush.msra.mxu0 %v2880
        %3178 = vmatpush.msra.mxu0 %v2862
        %3179 = vmatpush.msra.mxu0 %v2844
        %3180 = vmatpush.msra.mxu0 %v2826
        %3181 = vmatpush.msra.mxu0 %v2808
        %3182 = vmatmul.f32.gmra.mxu0 %v3101
        %v3183 = vpop.f32.mrf.mxu0
        %v3184 = vadd.f32 %v3164, %v3183
        %3185 = vdwg.mxu0
        %3186 = vmatpush.msra.mxu0 %v2215
        %3187 = vmatpush.msra.mxu0 %v2197
        %3188 = vmatpush.msra.mxu0 %v2179
        %3189 = vmatpush.msra.mxu0 %v2161
        %3190 = vmatpush.msra.mxu0 %v2143
        %3191 = vmatpush.msra.mxu0 %v2125
        %3192 = vmatpush.msra.mxu0 %v2107
        %3193 = vmatpush.msra.mxu0 %v2089
        %3194 = vmatpush.msra.mxu0 %v2071
        %3195 = vmatpush.msra.mxu0 %v2053
        %3196 = vmatpush.msra.mxu0 %v2035
        %3197 = vmatpush.msra.mxu0 %v2017
        %3198 = vmatpush.msra.mxu0 %v1999
        %3199 = vmatpush.msra.mxu0 %v1981
        %3200 = vmatpush.msra.mxu0 %v1963
        %3201 = vmatpush.msra.mxu0 %v1945
        %3202 = vmatmul.f32.gmra.mxu0 %v3098
        %v3203 = vpop.f32.mrf.mxu0
        %v3204 = vadd.f32 0.0, %v3203
        %3205 = vdwg.mxu0
        %3206 = vmatpush.msra.mxu0 %v2503
        %3207 = vmatpush.msra.mxu0 %v2485
        %3208 = vmatpush.msra.mxu0 %v2467
        %3209 = vmatpush.msra.mxu0 %v2449
        %3210 = vmatpush.msra.mxu0 %v2431
        %3211 = vmatpush.msra.mxu0 %v2413
        %3212 = vmatpush.msra.mxu0 %v2395
        %3213 = vmatpush.msra.mxu0 %v2377
        %3214 = vmatpush.msra.mxu0 %v2359
        %3215 = vmatpush.msra.mxu0 %v2341
        %3216 = vmatpush.msra.mxu0 %v2323
        %3217 = vmatpush.msra.mxu0 %v2305
        %3218 = vmatpush.msra.mxu0 %v2287
        %3219 = vmatpush.msra.mxu0 %v2269
        %3220 = vmatpush.msra.mxu0 %v2251
        %3221 = vmatpush.msra.mxu0 %v2233
        %3222 = vmatmul.f32.gmra.mxu0 %v3099
        %v3223 = vpop.f32.mrf.mxu0
        %v3224 = vadd.f32 %v3204, %v3223
        %3225 = vdwg.mxu0
        %3226 = vmatpush.msra.mxu0 %v2791
        %3227 = vmatpush.msra.mxu0 %v2773
        %3228 = vmatpush.msra.mxu0 %v2755
        %3229 = vmatpush.msra.mxu0 %v2737
        %3230 = vmatpush.msra.mxu0 %v2719
        %3231 = vmatpush.msra.mxu0 %v2701
        %3232 = vmatpush.msra.mxu0 %v2683
        %3233 = vmatpush.msra.mxu0 %v2665
        %3234 = vmatpush.msra.mxu0 %v2647
        %3235 = vmatpush.msra.mxu0 %v2629
        %3236 = vmatpush.msra.mxu0 %v2611
        %3237 = vmatpush.msra.mxu0 %v2593
        %3238 = vmatpush.msra.mxu0 %v2575
        %3239 = vmatpush.msra.mxu0 %v2557
        %3240 = vmatpush.msra.mxu0 %v2539
        %3241 = vmatpush.msra.mxu0 %v2521
        %3242 = vmatmul.f32.gmra.mxu0 %v3100
        %v3243 = vpop.f32.mrf.mxu0
        %v3244 = vadd.f32 %v3224, %v3243
        %3245 = vdwg.mxu0
        %3246 = vmatpush.msra.mxu0 %v3079
        %3247 = vmatpush.msra.mxu0 %v3061
        %3248 = vmatpush.msra.mxu0 %v3043
        %3249 = vmatpush.msra.mxu0 %v3025
        %3250 = vmatpush.msra.mxu0 %v3007
        %3251 = vmatpush.msra.mxu0 %v2989
        %3252 = vmatpush.msra.mxu0 %v2971
        %3253 = vmatpush.msra.mxu0 %v2953
        %3254 = vmatpush.msra.mxu0 %v2935
        %3255 = vmatpush.msra.mxu0 %v2917
        %3256 = vmatpush.msra.mxu0 %v2899
        %3257 = vmatpush.msra.mxu0 %v2881
        %3258 = vmatpush.msra.mxu0 %v2863
        %3259 = vmatpush.msra.mxu0 %v2845
        %3260 = vmatpush.msra.mxu0 %v2827
        %3261 = vmatpush.msra.mxu0 %v2809
        %3262 = vmatmul.f32.gmra.mxu0 %v3101
        %v3263 = vpop.f32.mrf.mxu0
        %v3264 = vadd.f32 %v3244, %v3263
        %3265 = vdwg.mxu0
        %3266 = vmatpush.msra.mxu0 %v2216
        %3267 = vmatpush.msra.mxu0 %v2198
        %3268 = vmatpush.msra.mxu0 %v2180
        %3269 = vmatpush.msra.mxu0 %v2162
        %3270 = vmatpush.msra.mxu0 %v2144
        %3271 = vmatpush.msra.mxu0 %v2126
        %3272 = vmatpush.msra.mxu0 %v2108
        %3273 = vmatpush.msra.mxu0 %v2090
        %3274 = vmatpush.msra.mxu0 %v2072
        %3275 = vmatpush.msra.mxu0 %v2054
        %3276 = vmatpush.msra.mxu0 %v2036
        %3277 = vmatpush.msra.mxu0 %v2018
        %3278 = vmatpush.msra.mxu0 %v2000
        %3279 = vmatpush.msra.mxu0 %v1982
        %3280 = vmatpush.msra.mxu0 %v1964
        %3281 = vmatpush.msra.mxu0 %v1946
        %3282 = vmatmul.f32.gmra.mxu0 %v3098
        %v3283 = vpop.f32.mrf.mxu0
        %v3284 = vadd.f32 0.0, %v3283
        %3285 = vdwg.mxu0
        %3286 = vmatpush.msra.mxu0 %v2504
        %3287 = vmatpush.msra.mxu0 %v2486
        %3288 = vmatpush.msra.mxu0 %v2468
        %3289 = vmatpush.msra.mxu0 %v2450
        %3290 = vmatpush.msra.mxu0 %v2432
        %3291 = vmatpush.msra.mxu0 %v2414
        %3292 = vmatpush.msra.mxu0 %v2396
        %3293 = vmatpush.msra.mxu0 %v2378
        %3294 = vmatpush.msra.mxu0 %v2360
        %3295 = vmatpush.msra.mxu0 %v2342
        %3296 = vmatpush.msra.mxu0 %v2324
        %3297 = vmatpush.msra.mxu0 %v2306
        %3298 = vmatpush.msra.mxu0 %v2288
        %3299 = vmatpush.msra.mxu0 %v2270
        %3300 = vmatpush.msra.mxu0 %v2252
        %3301 = vmatpush.msra.mxu0 %v2234
        %3302 = vmatmul.f32.gmra.mxu0 %v3099
        %v3303 = vpop.f32.mrf.mxu0
        %v3304 = vadd.f32 %v3284, %v3303
        %3305 = vdwg.mxu0
        %3306 = vmatpush.msra.mxu0 %v2792
        %3307 = vmatpush.msra.mxu0 %v2774
        %3308 = vmatpush.msra.mxu0 %v2756
        %3309 = vmatpush.msra.mxu0 %v2738
        %3310 = vmatpush.msra.mxu0 %v2720
        %3311 = vmatpush.msra.mxu0 %v2702
        %3312 = vmatpush.msra.mxu0 %v2684
        %3313 = vmatpush.msra.mxu0 %v2666
        %3314 = vmatpush.msra.mxu0 %v2648
        %3315 = vmatpush.msra.mxu0 %v2630
        %3316 = vmatpush.msra.mxu0 %v2612
        %3317 = vmatpush.msra.mxu0 %v2594
        %3318 = vmatpush.msra.mxu0 %v2576
        %3319 = vmatpush.msra.mxu0 %v2558
        %3320 = vmatpush.msra.mxu0 %v2540
        %3321 = vmatpush.msra.mxu0 %v2522
        %3322 = vmatmul.f32.gmra.mxu0 %v3100
        %v3323 = vpop.f32.mrf.mxu0
        %v3324 = vadd.f32 %v3304, %v3323
        %3325 = vdwg.mxu0
        %3326 = vmatpush.msra.mxu0 %v3080
        %3327 = vmatpush.msra.mxu0 %v3062
        %3328 = vmatpush.msra.mxu0 %v3044
        %3329 = vmatpush.msra.mxu0 %v3026
        %3330 = vmatpush.msra.mxu0 %v3008
        %3331 = vmatpush.msra.mxu0 %v2990
        %3332 = vmatpush.msra.mxu0 %v2972
        %3333 = vmatpush.msra.mxu0 %v2954
        %3334 = vmatpush.msra.mxu0 %v2936
        %3335 = vmatpush.msra.mxu0 %v2918
        %3336 = vmatpush.msra.mxu0 %v2900
        %3337 = vmatpush.msra.mxu0 %v2882
        %3338 = vmatpush.msra.mxu0 %v2864
        %3339 = vmatpush.msra.mxu0 %v2846
        %3340 = vmatpush.msra.mxu0 %v2828
        %3341 = vmatpush.msra.mxu0 %v2810
        %3342 = vmatmul.f32.gmra.mxu0 %v3101
        %v3343 = vpop.f32.mrf.mxu0
        %v3344 = vadd.f32 %v3324, %v3343
        %3345 = vdwg.mxu0
        %3346 = vmatpush.msra.mxu0 %v2217
        %3347 = vmatpush.msra.mxu0 %v2199
        %3348 = vmatpush.msra.mxu0 %v2181
        %3349 = vmatpush.msra.mxu0 %v2163
        %3350 = vmatpush.msra.mxu0 %v2145
        %3351 = vmatpush.msra.mxu0 %v2127
        %3352 = vmatpush.msra.mxu0 %v2109
        %3353 = vmatpush.msra.mxu0 %v2091
        %3354 = vmatpush.msra.mxu0 %v2073
        %3355 = vmatpush.msra.mxu0 %v2055
        %3356 = vmatpush.msra.mxu0 %v2037
        %3357 = vmatpush.msra.mxu0 %v2019
        %3358 = vmatpush.msra.mxu0 %v2001
        %3359 = vmatpush.msra.mxu0 %v1983
        %3360 = vmatpush.msra.mxu0 %v1965
        %3361 = vmatpush.msra.mxu0 %v1947
        %3362 = vmatmul.f32.gmra.mxu0 %v3098
        %v3363 = vpop.f32.mrf.mxu0
        %v3364 = vadd.f32 0.0, %v3363
        %3365 = vdwg.mxu0
        %3366 = vmatpush.msra.mxu0 %v2505
        %3367 = vmatpush.msra.mxu0 %v2487
        %3368 = vmatpush.msra.mxu0 %v2469
        %3369 = vmatpush.msra.mxu0 %v2451
        %3370 = vmatpush.msra.mxu0 %v2433
        %3371 = vmatpush.msra.mxu0 %v2415
        %3372 = vmatpush.msra.mxu0 %v2397
        %3373 = vmatpush.msra.mxu0 %v2379
        %3374 = vmatpush.msra.mxu0 %v2361
        %3375 = vmatpush.msra.mxu0 %v2343
        %3376 = vmatpush.msra.mxu0 %v2325
        %3377 = vmatpush.msra.mxu0 %v2307
        %3378 = vmatpush.msra.mxu0 %v2289
        %3379 = vmatpush.msra.mxu0 %v2271
        %3380 = vmatpush.msra.mxu0 %v2253
        %3381 = vmatpush.msra.mxu0 %v2235
        %3382 = vmatmul.f32.gmra.mxu0 %v3099
        %v3383 = vpop.f32.mrf.mxu0
        %v3384 = vadd.f32 %v3364, %v3383
        %3385 = vdwg.mxu0
        %3386 = vmatpush.msra.mxu0 %v2793
        %3387 = vmatpush.msra.mxu0 %v2775
        %3388 = vmatpush.msra.mxu0 %v2757
        %3389 = vmatpush.msra.mxu0 %v2739
        %3390 = vmatpush.msra.mxu0 %v2721
        %3391 = vmatpush.msra.mxu0 %v2703
        %3392 = vmatpush.msra.mxu0 %v2685
        %3393 = vmatpush.msra.mxu0 %v2667
        %3394 = vmatpush.msra.mxu0 %v2649
        %3395 = vmatpush.msra.mxu0 %v2631
        %3396 = vmatpush.msra.mxu0 %v2613
        %3397 = vmatpush.msra.mxu0 %v2595
        %3398 = vmatpush.msra.mxu0 %v2577
        %3399 = vmatpush.msra.mxu0 %v2559
        %3400 = vmatpush.msra.mxu0 %v2541
        %3401 = vmatpush.msra.mxu0 %v2523
        %3402 = vmatmul.f32.gmra.mxu0 %v3100
        %v3403 = vpop.f32.mrf.mxu0
        %v3404 = vadd.f32 %v3384, %v3403
        %3405 = vdwg.mxu0
        %3406 = vmatpush.msra.mxu0 %v3081
        %3407 = vmatpush.msra.mxu0 %v3063
        %3408 = vmatpush.msra.mxu0 %v3045
        %3409 = vmatpush.msra.mxu0 %v3027
        %3410 = vmatpush.msra.mxu0 %v3009
        %3411 = vmatpush.msra.mxu0 %v2991
        %3412 = vmatpush.msra.mxu0 %v2973
        %3413 = vmatpush.msra.mxu0 %v2955
        %3414 = vmatpush.msra.mxu0 %v2937
        %3415 = vmatpush.msra.mxu0 %v2919
        %3416 = vmatpush.msra.mxu0 %v2901
        %3417 = vmatpush.msra.mxu0 %v2883
        %3418 = vmatpush.msra.mxu0 %v2865
        %3419 = vmatpush.msra.mxu0 %v2847
        %3420 = vmatpush.msra.mxu0 %v2829
        %3421 = vmatpush.msra.mxu0 %v2811
        %3422 = vmatmul.f32.gmra.mxu0 %v3101
        %v3423 = vpop.f32.mrf.mxu0
        %v3424 = vadd.f32 %v3404, %v3423
        %3425 = vdwg.mxu0
        %3426 = vmatpush.msra.mxu0 %v2218
        %3427 = vmatpush.msra.mxu0 %v2200
        %3428 = vmatpush.msra.mxu0 %v2182
        %3429 = vmatpush.msra.mxu0 %v2164
        %3430 = vmatpush.msra.mxu0 %v2146
        %3431 = vmatpush.msra.mxu0 %v2128
        %3432 = vmatpush.msra.mxu0 %v2110
        %3433 = vmatpush.msra.mxu0 %v2092
        %3434 = vmatpush.msra.mxu0 %v2074
        %3435 = vmatpush.msra.mxu0 %v2056
        %3436 = vmatpush.msra.mxu0 %v2038
        %3437 = vmatpush.msra.mxu0 %v2020
        %3438 = vmatpush.msra.mxu0 %v2002
        %3439 = vmatpush.msra.mxu0 %v1984
        %3440 = vmatpush.msra.mxu0 %v1966
        %3441 = vmatpush.msra.mxu0 %v1948
        %3442 = vmatmul.f32.gmra.mxu0 %v3098
        %v3443 = vpop.f32.mrf.mxu0
        %v3444 = vadd.f32 0.0, %v3443
        %3445 = vdwg.mxu0
        %3446 = vmatpush.msra.mxu0 %v2506
        %3447 = vmatpush.msra.mxu0 %v2488
        %3448 = vmatpush.msra.mxu0 %v2470
        %3449 = vmatpush.msra.mxu0 %v2452
        %3450 = vmatpush.msra.mxu0 %v2434
        %3451 = vmatpush.msra.mxu0 %v2416
        %3452 = vmatpush.msra.mxu0 %v2398
        %3453 = vmatpush.msra.mxu0 %v2380
        %3454 = vmatpush.msra.mxu0 %v2362
        %3455 = vmatpush.msra.mxu0 %v2344
        %3456 = vmatpush.msra.mxu0 %v2326
        %3457 = vmatpush.msra.mxu0 %v2308
        %3458 = vmatpush.msra.mxu0 %v2290
        %3459 = vmatpush.msra.mxu0 %v2272
        %3460 = vmatpush.msra.mxu0 %v2254
        %3461 = vmatpush.msra.mxu0 %v2236
        %3462 = vmatmul.f32.gmra.mxu0 %v3099
        %v3463 = vpop.f32.mrf.mxu0
        %v3464 = vadd.f32 %v3444, %v3463
        %3465 = vdwg.mxu0
        %3466 = vmatpush.msra.mxu0 %v2794
        %3467 = vmatpush.msra.mxu0 %v2776
        %3468 = vmatpush.msra.mxu0 %v2758
        %3469 = vmatpush.msra.mxu0 %v2740
        %3470 = vmatpush.msra.mxu0 %v2722
        %3471 = vmatpush.msra.mxu0 %v2704
        %3472 = vmatpush.msra.mxu0 %v2686
        %3473 = vmatpush.msra.mxu0 %v2668
        %3474 = vmatpush.msra.mxu0 %v2650
        %3475 = vmatpush.msra.mxu0 %v2632
        %3476 = vmatpush.msra.mxu0 %v2614
        %3477 = vmatpush.msra.mxu0 %v2596
        %3478 = vmatpush.msra.mxu0 %v2578
        %3479 = vmatpush.msra.mxu0 %v2560
        %3480 = vmatpush.msra.mxu0 %v2542
        %3481 = vmatpush.msra.mxu0 %v2524
        %3482 = vmatmul.f32.gmra.mxu0 %v3100
        %v3483 = vpop.f32.mrf.mxu0
        %v3484 = vadd.f32 %v3464, %v3483
        %3485 = vdwg.mxu0
        %3486 = vmatpush.msra.mxu0 %v3082
        %3487 = vmatpush.msra.mxu0 %v3064
        %3488 = vmatpush.msra.mxu0 %v3046
        %3489 = vmatpush.msra.mxu0 %v3028
        %3490 = vmatpush.msra.mxu0 %v3010
        %3491 = vmatpush.msra.mxu0 %v2992
        %3492 = vmatpush.msra.mxu0 %v2974
        %3493 = vmatpush.msra.mxu0 %v2956
        %3494 = vmatpush.msra.mxu0 %v2938
        %3495 = vmatpush.msra.mxu0 %v2920
        %3496 = vmatpush.msra.mxu0 %v2902
        %3497 = vmatpush.msra.mxu0 %v2884
        %3498 = vmatpush.msra.mxu0 %v2866
        %3499 = vmatpush.msra.mxu0 %v2848
        %3500 = vmatpush.msra.mxu0 %v2830
        %3501 = vmatpush.msra.mxu0 %v2812
        %3502 = vmatmul.f32.gmra.mxu0 %v3101
        %v3503 = vpop.f32.mrf.mxu0
        %v3504 = vadd.f32 %v3484, %v3503
        %3505 = vdwg.mxu0
        %3506 = vmatpush.msra.mxu0 %v2219
        %3507 = vmatpush.msra.mxu0 %v2201
        %3508 = vmatpush.msra.mxu0 %v2183
        %3509 = vmatpush.msra.mxu0 %v2165
        %3510 = vmatpush.msra.mxu0 %v2147
        %3511 = vmatpush.msra.mxu0 %v2129
        %3512 = vmatpush.msra.mxu0 %v2111
        %3513 = vmatpush.msra.mxu0 %v2093
        %3514 = vmatpush.msra.mxu0 %v2075
        %3515 = vmatpush.msra.mxu0 %v2057
        %3516 = vmatpush.msra.mxu0 %v2039
        %3517 = vmatpush.msra.mxu0 %v2021
        %3518 = vmatpush.msra.mxu0 %v2003
        %3519 = vmatpush.msra.mxu0 %v1985
        %3520 = vmatpush.msra.mxu0 %v1967
        %3521 = vmatpush.msra.mxu0 %v1949
        %3522 = vmatmul.f32.gmra.mxu0 %v3098
        %v3523 = vpop.f32.mrf.mxu0
        %v3524 = vadd.f32 0.0, %v3523
        %3525 = vdwg.mxu0
        %3526 = vmatpush.msra.mxu0 %v2507
        %3527 = vmatpush.msra.mxu0 %v2489
        %3528 = vmatpush.msra.mxu0 %v2471
        %3529 = vmatpush.msra.mxu0 %v2453
        %3530 = vmatpush.msra.mxu0 %v2435
        %3531 = vmatpush.msra.mxu0 %v2417
        %3532 = vmatpush.msra.mxu0 %v2399
        %3533 = vmatpush.msra.mxu0 %v2381
        %3534 = vmatpush.msra.mxu0 %v2363
        %3535 = vmatpush.msra.mxu0 %v2345
        %3536 = vmatpush.msra.mxu0 %v2327
        %3537 = vmatpush.msra.mxu0 %v2309
        %3538 = vmatpush.msra.mxu0 %v2291
        %3539 = vmatpush.msra.mxu0 %v2273
        %3540 = vmatpush.msra.mxu0 %v2255
        %3541 = vmatpush.msra.mxu0 %v2237
        %3542 = vmatmul.f32.gmra.mxu0 %v3099
        %v3543 = vpop.f32.mrf.mxu0
        %v3544 = vadd.f32 %v3524, %v3543
        %3545 = vdwg.mxu0
        %3546 = vmatpush.msra.mxu0 %v2795
        %3547 = vmatpush.msra.mxu0 %v2777
        %3548 = vmatpush.msra.mxu0 %v2759
        %3549 = vmatpush.msra.mxu0 %v2741
        %3550 = vmatpush.msra.mxu0 %v2723
        %3551 = vmatpush.msra.mxu0 %v2705
        %3552 = vmatpush.msra.mxu0 %v2687
        %3553 = vmatpush.msra.mxu0 %v2669
        %3554 = vmatpush.msra.mxu0 %v2651
        %3555 = vmatpush.msra.mxu0 %v2633
        %3556 = vmatpush.msra.mxu0 %v2615
        %3557 = vmatpush.msra.mxu0 %v2597
        %3558 = vmatpush.msra.mxu0 %v2579
        %3559 = vmatpush.msra.mxu0 %v2561
        %3560 = vmatpush.msra.mxu0 %v2543
        %3561 = vmatpush.msra.mxu0 %v2525
        %3562 = vmatmul.f32.gmra.mxu0 %v3100
        %v3563 = vpop.f32.mrf.mxu0
        %v3564 = vadd.f32 %v3544, %v3563
        %3565 = vdwg.mxu0
        %3566 = vmatpush.msra.mxu0 %v3083
        %3567 = vmatpush.msra.mxu0 %v3065
        %3568 = vmatpush.msra.mxu0 %v3047
        %3569 = vmatpush.msra.mxu0 %v3029
        %3570 = vmatpush.msra.mxu0 %v3011
        %3571 = vmatpush.msra.mxu0 %v2993
        %3572 = vmatpush.msra.mxu0 %v2975
        %3573 = vmatpush.msra.mxu0 %v2957
        %3574 = vmatpush.msra.mxu0 %v2939
        %3575 = vmatpush.msra.mxu0 %v2921
        %3576 = vmatpush.msra.mxu0 %v2903
        %3577 = vmatpush.msra.mxu0 %v2885
        %3578 = vmatpush.msra.mxu0 %v2867
        %3579 = vmatpush.msra.mxu0 %v2849
        %3580 = vmatpush.msra.mxu0 %v2831
        %3581 = vmatpush.msra.mxu0 %v2813
        %3582 = vmatmul.f32.gmra.mxu0 %v3101
        %v3583 = vpop.f32.mrf.mxu0
        %v3584 = vadd.f32 %v3564, %v3583
        %3585 = vdwg.mxu0
        %3586 = vmatpush.msra.mxu0 %v2220
        %3587 = vmatpush.msra.mxu0 %v2202
        %3588 = vmatpush.msra.mxu0 %v2184
        %3589 = vmatpush.msra.mxu0 %v2166
        %3590 = vmatpush.msra.mxu0 %v2148
        %3591 = vmatpush.msra.mxu0 %v2130
        %3592 = vmatpush.msra.mxu0 %v2112
        %3593 = vmatpush.msra.mxu0 %v2094
        %3594 = vmatpush.msra.mxu0 %v2076
        %3595 = vmatpush.msra.mxu0 %v2058
        %3596 = vmatpush.msra.mxu0 %v2040
        %3597 = vmatpush.msra.mxu0 %v2022
        %3598 = vmatpush.msra.mxu0 %v2004
        %3599 = vmatpush.msra.mxu0 %v1986
        %3600 = vmatpush.msra.mxu0 %v1968
        %3601 = vmatpush.msra.mxu0 %v1950
        %3602 = vmatmul.f32.gmra.mxu0 %v3098
        %v3603 = vpop.f32.mrf.mxu0
        %v3604 = vadd.f32 0.0, %v3603
        %3605 = vdwg.mxu0
        %3606 = vmatpush.msra.mxu0 %v2508
        %3607 = vmatpush.msra.mxu0 %v2490
        %3608 = vmatpush.msra.mxu0 %v2472
        %3609 = vmatpush.msra.mxu0 %v2454
        %3610 = vmatpush.msra.mxu0 %v2436
        %3611 = vmatpush.msra.mxu0 %v2418
        %3612 = vmatpush.msra.mxu0 %v2400
        %3613 = vmatpush.msra.mxu0 %v2382
        %3614 = vmatpush.msra.mxu0 %v2364
        %3615 = vmatpush.msra.mxu0 %v2346
        %3616 = vmatpush.msra.mxu0 %v2328
        %3617 = vmatpush.msra.mxu0 %v2310
        %3618 = vmatpush.msra.mxu0 %v2292
        %3619 = vmatpush.msra.mxu0 %v2274
        %3620 = vmatpush.msra.mxu0 %v2256
        %3621 = vmatpush.msra.mxu0 %v2238
        %3622 = vmatmul.f32.gmra.mxu0 %v3099
        %v3623 = vpop.f32.mrf.mxu0
        %v3624 = vadd.f32 %v3604, %v3623
        %3625 = vdwg.mxu0
        %3626 = vmatpush.msra.mxu0 %v2796
        %3627 = vmatpush.msra.mxu0 %v2778
        %3628 = vmatpush.msra.mxu0 %v2760
        %3629 = vmatpush.msra.mxu0 %v2742
        %3630 = vmatpush.msra.mxu0 %v2724
        %3631 = vmatpush.msra.mxu0 %v2706
        %3632 = vmatpush.msra.mxu0 %v2688
        %3633 = vmatpush.msra.mxu0 %v2670
        %3634 = vmatpush.msra.mxu0 %v2652
        %3635 = vmatpush.msra.mxu0 %v2634
        %3636 = vmatpush.msra.mxu0 %v2616
        %3637 = vmatpush.msra.mxu0 %v2598
        %3638 = vmatpush.msra.mxu0 %v2580
        %3639 = vmatpush.msra.mxu0 %v2562
        %3640 = vmatpush.msra.mxu0 %v2544
        %3641 = vmatpush.msra.mxu0 %v2526
        %3642 = vmatmul.f32.gmra.mxu0 %v3100
        %v3643 = vpop.f32.mrf.mxu0
        %v3644 = vadd.f32 %v3624, %v3643
        %3645 = vdwg.mxu0
        %3646 = vmatpush.msra.mxu0 %v3084
        %3647 = vmatpush.msra.mxu0 %v3066
        %3648 = vmatpush.msra.mxu0 %v3048
        %3649 = vmatpush.msra.mxu0 %v3030
        %3650 = vmatpush.msra.mxu0 %v3012
        %3651 = vmatpush.msra.mxu0 %v2994
        %3652 = vmatpush.msra.mxu0 %v2976
        %3653 = vmatpush.msra.mxu0 %v2958
        %3654 = vmatpush.msra.mxu0 %v2940
        %3655 = vmatpush.msra.mxu0 %v2922
        %3656 = vmatpush.msra.mxu0 %v2904
        %3657 = vmatpush.msra.mxu0 %v2886
        %3658 = vmatpush.msra.mxu0 %v2868
        %3659 = vmatpush.msra.mxu0 %v2850
        %3660 = vmatpush.msra.mxu0 %v2832
        %3661 = vmatpush.msra.mxu0 %v2814
        %3662 = vmatmul.f32.gmra.mxu0 %v3101
        %v3663 = vpop.f32.mrf.mxu0
        %v3664 = vadd.f32 %v3644, %v3663
        %3665 = vdwg.mxu0
        %3666 = vmatpush.msra.mxu0 %v2221
        %3667 = vmatpush.msra.mxu0 %v2203
        %3668 = vmatpush.msra.mxu0 %v2185
        %3669 = vmatpush.msra.mxu0 %v2167
        %3670 = vmatpush.msra.mxu0 %v2149
        %3671 = vmatpush.msra.mxu0 %v2131
        %3672 = vmatpush.msra.mxu0 %v2113
        %3673 = vmatpush.msra.mxu0 %v2095
        %3674 = vmatpush.msra.mxu0 %v2077
        %3675 = vmatpush.msra.mxu0 %v2059
        %3676 = vmatpush.msra.mxu0 %v2041
        %3677 = vmatpush.msra.mxu0 %v2023
        %3678 = vmatpush.msra.mxu0 %v2005
        %3679 = vmatpush.msra.mxu0 %v1987
        %3680 = vmatpush.msra.mxu0 %v1969
        %3681 = vmatpush.msra.mxu0 %v1951
        %3682 = vmatmul.f32.gmra.mxu0 %v3098
        %v3683 = vpop.f32.mrf.mxu0
        %v3684 = vadd.f32 0.0, %v3683
        %3685 = vdwg.mxu0
        %3686 = vmatpush.msra.mxu0 %v2509
        %3687 = vmatpush.msra.mxu0 %v2491
        %3688 = vmatpush.msra.mxu0 %v2473
        %3689 = vmatpush.msra.mxu0 %v2455
        %3690 = vmatpush.msra.mxu0 %v2437
        %3691 = vmatpush.msra.mxu0 %v2419
        %3692 = vmatpush.msra.mxu0 %v2401
        %3693 = vmatpush.msra.mxu0 %v2383
        %3694 = vmatpush.msra.mxu0 %v2365
        %3695 = vmatpush.msra.mxu0 %v2347
        %3696 = vmatpush.msra.mxu0 %v2329
        %3697 = vmatpush.msra.mxu0 %v2311
        %3698 = vmatpush.msra.mxu0 %v2293
        %3699 = vmatpush.msra.mxu0 %v2275
        %3700 = vmatpush.msra.mxu0 %v2257
        %3701 = vmatpush.msra.mxu0 %v2239
        %3702 = vmatmul.f32.gmra.mxu0 %v3099
        %v3703 = vpop.f32.mrf.mxu0
        %v3704 = vadd.f32 %v3684, %v3703
        %3705 = vdwg.mxu0
        %3706 = vmatpush.msra.mxu0 %v2797
        %3707 = vmatpush.msra.mxu0 %v2779
        %3708 = vmatpush.msra.mxu0 %v2761
        %3709 = vmatpush.msra.mxu0 %v2743
        %3710 = vmatpush.msra.mxu0 %v2725
        %3711 = vmatpush.msra.mxu0 %v2707
        %3712 = vmatpush.msra.mxu0 %v2689
        %3713 = vmatpush.msra.mxu0 %v2671
        %3714 = vmatpush.msra.mxu0 %v2653
        %3715 = vmatpush.msra.mxu0 %v2635
        %3716 = vmatpush.msra.mxu0 %v2617
        %3717 = vmatpush.msra.mxu0 %v2599
        %3718 = vmatpush.msra.mxu0 %v2581
        %3719 = vmatpush.msra.mxu0 %v2563
        %3720 = vmatpush.msra.mxu0 %v2545
        %3721 = vmatpush.msra.mxu0 %v2527
        %3722 = vmatmul.f32.gmra.mxu0 %v3100
        %v3723 = vpop.f32.mrf.mxu0
        %v3724 = vadd.f32 %v3704, %v3723
        %3725 = vdwg.mxu0
        %3726 = vmatpush.msra.mxu0 %v3085
        %3727 = vmatpush.msra.mxu0 %v3067
        %3728 = vmatpush.msra.mxu0 %v3049
        %3729 = vmatpush.msra.mxu0 %v3031
        %3730 = vmatpush.msra.mxu0 %v3013
        %3731 = vmatpush.msra.mxu0 %v2995
        %3732 = vmatpush.msra.mxu0 %v2977
        %3733 = vmatpush.msra.mxu0 %v2959
        %3734 = vmatpush.msra.mxu0 %v2941
        %3735 = vmatpush.msra.mxu0 %v2923
        %3736 = vmatpush.msra.mxu0 %v2905
        %3737 = vmatpush.msra.mxu0 %v2887
        %3738 = vmatpush.msra.mxu0 %v2869
        %3739 = vmatpush.msra.mxu0 %v2851
        %3740 = vmatpush.msra.mxu0 %v2833
        %3741 = vmatpush.msra.mxu0 %v2815
        %3742 = vmatmul.f32.gmra.mxu0 %v3101
        %v3743 = vpop.f32.mrf.mxu0
        %v3744 = vadd.f32 %v3724, %v3743
        %3745 = vdwg.mxu0
        %3746 = vmatpush.msra.mxu0 %v2222
        %3747 = vmatpush.msra.mxu0 %v2204
        %3748 = vmatpush.msra.mxu0 %v2186
        %3749 = vmatpush.msra.mxu0 %v2168
        %3750 = vmatpush.msra.mxu0 %v2150
        %3751 = vmatpush.msra.mxu0 %v2132
        %3752 = vmatpush.msra.mxu0 %v2114
        %3753 = vmatpush.msra.mxu0 %v2096
        %3754 = vmatpush.msra.mxu0 %v2078
        %3755 = vmatpush.msra.mxu0 %v2060
        %3756 = vmatpush.msra.mxu0 %v2042
        %3757 = vmatpush.msra.mxu0 %v2024
        %3758 = vmatpush.msra.mxu0 %v2006
        %3759 = vmatpush.msra.mxu0 %v1988
        %3760 = vmatpush.msra.mxu0 %v1970
        %3761 = vmatpush.msra.mxu0 %v1952
        %3762 = vmatmul.f32.gmra.mxu0 %v3098
        %v3763 = vpop.f32.mrf.mxu0
        %v3764 = vadd.f32 0.0, %v3763
        %3765 = vdwg.mxu0
        %3766 = vmatpush.msra.mxu0 %v2510
        %3767 = vmatpush.msra.mxu0 %v2492
        %3768 = vmatpush.msra.mxu0 %v2474
        %3769 = vmatpush.msra.mxu0 %v2456
        %3770 = vmatpush.msra.mxu0 %v2438
        %3771 = vmatpush.msra.mxu0 %v2420
        %3772 = vmatpush.msra.mxu0 %v2402
        %3773 = vmatpush.msra.mxu0 %v2384
        %3774 = vmatpush.msra.mxu0 %v2366
        %3775 = vmatpush.msra.mxu0 %v2348
        %3776 = vmatpush.msra.mxu0 %v2330
        %3777 = vmatpush.msra.mxu0 %v2312
        %3778 = vmatpush.msra.mxu0 %v2294
        %3779 = vmatpush.msra.mxu0 %v2276
        %3780 = vmatpush.msra.mxu0 %v2258
        %3781 = vmatpush.msra.mxu0 %v2240
        %3782 = vmatmul.f32.gmra.mxu0 %v3099
        %v3783 = vpop.f32.mrf.mxu0
        %v3784 = vadd.f32 %v3764, %v3783
        %3785 = vdwg.mxu0
        %3786 = vmatpush.msra.mxu0 %v2798
        %3787 = vmatpush.msra.mxu0 %v2780
        %3788 = vmatpush.msra.mxu0 %v2762
        %3789 = vmatpush.msra.mxu0 %v2744
        %3790 = vmatpush.msra.mxu0 %v2726
        %3791 = vmatpush.msra.mxu0 %v2708
        %3792 = vmatpush.msra.mxu0 %v2690
        %3793 = vmatpush.msra.mxu0 %v2672
        %3794 = vmatpush.msra.mxu0 %v2654
        %3795 = vmatpush.msra.mxu0 %v2636
        %3796 = vmatpush.msra.mxu0 %v2618
        %3797 = vmatpush.msra.mxu0 %v2600
        %3798 = vmatpush.msra.mxu0 %v2582
        %3799 = vmatpush.msra.mxu0 %v2564
        %3800 = vmatpush.msra.mxu0 %v2546
        %3801 = vmatpush.msra.mxu0 %v2528
        %3802 = vmatmul.f32.gmra.mxu0 %v3100
        %v3803 = vpop.f32.mrf.mxu0
        %v3804 = vadd.f32 %v3784, %v3803
        %3805 = vdwg.mxu0
        %3806 = vmatpush.msra.mxu0 %v3086
        %3807 = vmatpush.msra.mxu0 %v3068
        %3808 = vmatpush.msra.mxu0 %v3050
        %3809 = vmatpush.msra.mxu0 %v3032
        %3810 = vmatpush.msra.mxu0 %v3014
        %3811 = vmatpush.msra.mxu0 %v2996
        %3812 = vmatpush.msra.mxu0 %v2978
        %3813 = vmatpush.msra.mxu0 %v2960
        %3814 = vmatpush.msra.mxu0 %v2942
        %3815 = vmatpush.msra.mxu0 %v2924
        %3816 = vmatpush.msra.mxu0 %v2906
        %3817 = vmatpush.msra.mxu0 %v2888
        %3818 = vmatpush.msra.mxu0 %v2870
        %3819 = vmatpush.msra.mxu0 %v2852
        %3820 = vmatpush.msra.mxu0 %v2834
        %3821 = vmatpush.msra.mxu0 %v2816
        %3822 = vmatmul.f32.gmra.mxu0 %v3101
        %v3823 = vpop.f32.mrf.mxu0
        %v3824 = vadd.f32 %v3804, %v3823
        %3825 = vdwg.mxu0
        %3826 = vmatpush.msra.mxu0 %v2223
        %3827 = vmatpush.msra.mxu0 %v2205
        %3828 = vmatpush.msra.mxu0 %v2187
        %3829 = vmatpush.msra.mxu0 %v2169
        %3830 = vmatpush.msra.mxu0 %v2151
        %3831 = vmatpush.msra.mxu0 %v2133
        %3832 = vmatpush.msra.mxu0 %v2115
        %3833 = vmatpush.msra.mxu0 %v2097
        %3834 = vmatpush.msra.mxu0 %v2079
        %3835 = vmatpush.msra.mxu0 %v2061
        %3836 = vmatpush.msra.mxu0 %v2043
        %3837 = vmatpush.msra.mxu0 %v2025
        %3838 = vmatpush.msra.mxu0 %v2007
        %3839 = vmatpush.msra.mxu0 %v1989
        %3840 = vmatpush.msra.mxu0 %v1971
        %3841 = vmatpush.msra.mxu0 %v1953
        %3842 = vmatmul.f32.gmra.mxu0 %v3098
        %v3843 = vpop.f32.mrf.mxu0
        %v3844 = vadd.f32 0.0, %v3843
        %3845 = vdwg.mxu0
        %3846 = vmatpush.msra.mxu0 %v2511
        %3847 = vmatpush.msra.mxu0 %v2493
        %3848 = vmatpush.msra.mxu0 %v2475
        %3849 = vmatpush.msra.mxu0 %v2457
        %3850 = vmatpush.msra.mxu0 %v2439
        %3851 = vmatpush.msra.mxu0 %v2421
        %3852 = vmatpush.msra.mxu0 %v2403
        %3853 = vmatpush.msra.mxu0 %v2385
        %3854 = vmatpush.msra.mxu0 %v2367
        %3855 = vmatpush.msra.mxu0 %v2349
        %3856 = vmatpush.msra.mxu0 %v2331
        %3857 = vmatpush.msra.mxu0 %v2313
        %3858 = vmatpush.msra.mxu0 %v2295
        %3859 = vmatpush.msra.mxu0 %v2277
        %3860 = vmatpush.msra.mxu0 %v2259
        %3861 = vmatpush.msra.mxu0 %v2241
        %3862 = vmatmul.f32.gmra.mxu0 %v3099
        %v3863 = vpop.f32.mrf.mxu0
        %v3864 = vadd.f32 %v3844, %v3863
        %3865 = vdwg.mxu0
        %3866 = vmatpush.msra.mxu0 %v2799
        %3867 = vmatpush.msra.mxu0 %v2781
        %3868 = vmatpush.msra.mxu0 %v2763
        %3869 = vmatpush.msra.mxu0 %v2745
        %3870 = vmatpush.msra.mxu0 %v2727
        %3871 = vmatpush.msra.mxu0 %v2709
        %3872 = vmatpush.msra.mxu0 %v2691
        %3873 = vmatpush.msra.mxu0 %v2673
        %3874 = vmatpush.msra.mxu0 %v2655
        %3875 = vmatpush.msra.mxu0 %v2637
        %3876 = vmatpush.msra.mxu0 %v2619
        %3877 = vmatpush.msra.mxu0 %v2601
        %3878 = vmatpush.msra.mxu0 %v2583
        %3879 = vmatpush.msra.mxu0 %v2565
        %3880 = vmatpush.msra.mxu0 %v2547
        %3881 = vmatpush.msra.mxu0 %v2529
        %3882 = vmatmul.f32.gmra.mxu0 %v3100
        %v3883 = vpop.f32.mrf.mxu0
        %v3884 = vadd.f32 %v3864, %v3883
        %3885 = vdwg.mxu0
        %3886 = vmatpush.msra.mxu0 %v3087
        %3887 = vmatpush.msra.mxu0 %v3069
        %3888 = vmatpush.msra.mxu0 %v3051
        %3889 = vmatpush.msra.mxu0 %v3033
        %3890 = vmatpush.msra.mxu0 %v3015
        %3891 = vmatpush.msra.mxu0 %v2997
        %3892 = vmatpush.msra.mxu0 %v2979
        %3893 = vmatpush.msra.mxu0 %v2961
        %3894 = vmatpush.msra.mxu0 %v2943
        %3895 = vmatpush.msra.mxu0 %v2925
        %3896 = vmatpush.msra.mxu0 %v2907
        %3897 = vmatpush.msra.mxu0 %v2889
        %3898 = vmatpush.msra.mxu0 %v2871
        %3899 = vmatpush.msra.mxu0 %v2853
        %3900 = vmatpush.msra.mxu0 %v2835
        %3901 = vmatpush.msra.mxu0 %v2817
        %3902 = vmatmul.f32.gmra.mxu0 %v3101
        %v3903 = vpop.f32.mrf.mxu0
        %v3904 = vadd.f32 %v3884, %v3903
        %3905 = vdwg.mxu0
        %3906 = vmatpush.msra.mxu0 %v2224
        %3907 = vmatpush.msra.mxu0 %v2206
        %3908 = vmatpush.msra.mxu0 %v2188
        %3909 = vmatpush.msra.mxu0 %v2170
        %3910 = vmatpush.msra.mxu0 %v2152
        %3911 = vmatpush.msra.mxu0 %v2134
        %3912 = vmatpush.msra.mxu0 %v2116
        %3913 = vmatpush.msra.mxu0 %v2098
        %3914 = vmatpush.msra.mxu0 %v2080
        %3915 = vmatpush.msra.mxu0 %v2062
        %3916 = vmatpush.msra.mxu0 %v2044
        %3917 = vmatpush.msra.mxu0 %v2026
        %3918 = vmatpush.msra.mxu0 %v2008
        %3919 = vmatpush.msra.mxu0 %v1990
        %3920 = vmatpush.msra.mxu0 %v1972
        %3921 = vmatpush.msra.mxu0 %v1954
        %3922 = vmatmul.f32.gmra.mxu0 %v3098
        %v3923 = vpop.f32.mrf.mxu0
        %v3924 = vadd.f32 0.0, %v3923
        %3925 = vdwg.mxu0
        %3926 = vmatpush.msra.mxu0 %v2512
        %3927 = vmatpush.msra.mxu0 %v2494
        %3928 = vmatpush.msra.mxu0 %v2476
        %3929 = vmatpush.msra.mxu0 %v2458
        %3930 = vmatpush.msra.mxu0 %v2440
        %3931 = vmatpush.msra.mxu0 %v2422
        %3932 = vmatpush.msra.mxu0 %v2404
        %3933 = vmatpush.msra.mxu0 %v2386
        %3934 = vmatpush.msra.mxu0 %v2368
        %3935 = vmatpush.msra.mxu0 %v2350
        %3936 = vmatpush.msra.mxu0 %v2332
        %3937 = vmatpush.msra.mxu0 %v2314
        %3938 = vmatpush.msra.mxu0 %v2296
        %3939 = vmatpush.msra.mxu0 %v2278
        %3940 = vmatpush.msra.mxu0 %v2260
        %3941 = vmatpush.msra.mxu0 %v2242
        %3942 = vmatmul.f32.gmra.mxu0 %v3099
        %v3943 = vpop.f32.mrf.mxu0
        %v3944 = vadd.f32 %v3924, %v3943
        %3945 = vdwg.mxu0
        %3946 = vmatpush.msra.mxu0 %v2800
        %3947 = vmatpush.msra.mxu0 %v2782
        %3948 = vmatpush.msra.mxu0 %v2764
        %3949 = vmatpush.msra.mxu0 %v2746
        %3950 = vmatpush.msra.mxu0 %v2728
        %3951 = vmatpush.msra.mxu0 %v2710
        %3952 = vmatpush.msra.mxu0 %v2692
        %3953 = vmatpush.msra.mxu0 %v2674
        %3954 = vmatpush.msra.mxu0 %v2656
        %3955 = vmatpush.msra.mxu0 %v2638
        %3956 = vmatpush.msra.mxu0 %v2620
        %3957 = vmatpush.msra.mxu0 %v2602
        %3958 = vmatpush.msra.mxu0 %v2584
        %3959 = vmatpush.msra.mxu0 %v2566
        %3960 = vmatpush.msra.mxu0 %v2548
        %3961 = vmatpush.msra.mxu0 %v2530
        %3962 = vmatmul.f32.gmra.mxu0 %v3100
        %v3963 = vpop.f32.mrf.mxu0
        %v3964 = vadd.f32 %v3944, %v3963
        %3965 = vdwg.mxu0
        %3966 = vmatpush.msra.mxu0 %v3088
        %3967 = vmatpush.msra.mxu0 %v3070
        %3968 = vmatpush.msra.mxu0 %v3052
        %3969 = vmatpush.msra.mxu0 %v3034
        %3970 = vmatpush.msra.mxu0 %v3016
        %3971 = vmatpush.msra.mxu0 %v2998
        %3972 = vmatpush.msra.mxu0 %v2980
        %3973 = vmatpush.msra.mxu0 %v2962
        %3974 = vmatpush.msra.mxu0 %v2944
        %3975 = vmatpush.msra.mxu0 %v2926
        %3976 = vmatpush.msra.mxu0 %v2908
        %3977 = vmatpush.msra.mxu0 %v2890
        %3978 = vmatpush.msra.mxu0 %v2872
        %3979 = vmatpush.msra.mxu0 %v2854
        %3980 = vmatpush.msra.mxu0 %v2836
        %3981 = vmatpush.msra.mxu0 %v2818
        %3982 = vmatmul.f32.gmra.mxu0 %v3101
        %v3983 = vpop.f32.mrf.mxu0
        %v3984 = vadd.f32 %v3964, %v3983
        %3985 = vdwg.mxu0
        %3986 = vmatpush.msra.mxu0 %v2225
        %3987 = vmatpush.msra.mxu0 %v2207
        %3988 = vmatpush.msra.mxu0 %v2189
        %3989 = vmatpush.msra.mxu0 %v2171
        %3990 = vmatpush.msra.mxu0 %v2153
        %3991 = vmatpush.msra.mxu0 %v2135
        %3992 = vmatpush.msra.mxu0 %v2117
        %3993 = vmatpush.msra.mxu0 %v2099
        %3994 = vmatpush.msra.mxu0 %v2081
        %3995 = vmatpush.msra.mxu0 %v2063
        %3996 = vmatpush.msra.mxu0 %v2045
        %3997 = vmatpush.msra.mxu0 %v2027
        %3998 = vmatpush.msra.mxu0 %v2009
        %3999 = vmatpush.msra.mxu0 %v1991
        %4000 = vmatpush.msra.mxu0 %v1973
        %4001 = vmatpush.msra.mxu0 %v1955
        %4002 = vmatmul.f32.gmra.mxu0 %v3098
        %v4003 = vpop.f32.mrf.mxu0
        %v4004 = vadd.f32 0.0, %v4003
        %4005 = vdwg.mxu0
        %4006 = vmatpush.msra.mxu0 %v2513
        %4007 = vmatpush.msra.mxu0 %v2495
        %4008 = vmatpush.msra.mxu0 %v2477
        %4009 = vmatpush.msra.mxu0 %v2459
        %4010 = vmatpush.msra.mxu0 %v2441
        %4011 = vmatpush.msra.mxu0 %v2423
        %4012 = vmatpush.msra.mxu0 %v2405
        %4013 = vmatpush.msra.mxu0 %v2387
        %4014 = vmatpush.msra.mxu0 %v2369
        %4015 = vmatpush.msra.mxu0 %v2351
        %4016 = vmatpush.msra.mxu0 %v2333
        %4017 = vmatpush.msra.mxu0 %v2315
        %4018 = vmatpush.msra.mxu0 %v2297
        %4019 = vmatpush.msra.mxu0 %v2279
        %4020 = vmatpush.msra.mxu0 %v2261
        %4021 = vmatpush.msra.mxu0 %v2243
        %4022 = vmatmul.f32.gmra.mxu0 %v3099
        %v4023 = vpop.f32.mrf.mxu0
        %v4024 = vadd.f32 %v4004, %v4023
        %4025 = vdwg.mxu0
        %4026 = vmatpush.msra.mxu0 %v2801
        %4027 = vmatpush.msra.mxu0 %v2783
        %4028 = vmatpush.msra.mxu0 %v2765
        %4029 = vmatpush.msra.mxu0 %v2747
        %4030 = vmatpush.msra.mxu0 %v2729
        %4031 = vmatpush.msra.mxu0 %v2711
        %4032 = vmatpush.msra.mxu0 %v2693
        %4033 = vmatpush.msra.mxu0 %v2675
        %4034 = vmatpush.msra.mxu0 %v2657
        %4035 = vmatpush.msra.mxu0 %v2639
        %4036 = vmatpush.msra.mxu0 %v2621
        %4037 = vmatpush.msra.mxu0 %v2603
        %4038 = vmatpush.msra.mxu0 %v2585
        %4039 = vmatpush.msra.mxu0 %v2567
        %4040 = vmatpush.msra.mxu0 %v2549
        %4041 = vmatpush.msra.mxu0 %v2531
        %4042 = vmatmul.f32.gmra.mxu0 %v3100
        %v4043 = vpop.f32.mrf.mxu0
        %v4044 = vadd.f32 %v4024, %v4043
        %4045 = vdwg.mxu0
        %4046 = vmatpush.msra.mxu0 %v3089
        %4047 = vmatpush.msra.mxu0 %v3071
        %4048 = vmatpush.msra.mxu0 %v3053
        %4049 = vmatpush.msra.mxu0 %v3035
        %4050 = vmatpush.msra.mxu0 %v3017
        %4051 = vmatpush.msra.mxu0 %v2999
        %4052 = vmatpush.msra.mxu0 %v2981
        %4053 = vmatpush.msra.mxu0 %v2963
        %4054 = vmatpush.msra.mxu0 %v2945
        %4055 = vmatpush.msra.mxu0 %v2927
        %4056 = vmatpush.msra.mxu0 %v2909
        %4057 = vmatpush.msra.mxu0 %v2891
        %4058 = vmatpush.msra.mxu0 %v2873
        %4059 = vmatpush.msra.mxu0 %v2855
        %4060 = vmatpush.msra.mxu0 %v2837
        %4061 = vmatpush.msra.mxu0 %v2819
        %4062 = vmatmul.f32.gmra.mxu0 %v3101
        %v4063 = vpop.f32.mrf.mxu0
        %v4064 = vadd.f32 %v4044, %v4063
        %4065 = vdwg.mxu0
        %4066 = vmatpush.msra.mxu0 %v2226
        %4067 = vmatpush.msra.mxu0 %v2208
        %4068 = vmatpush.msra.mxu0 %v2190
        %4069 = vmatpush.msra.mxu0 %v2172
        %4070 = vmatpush.msra.mxu0 %v2154
        %4071 = vmatpush.msra.mxu0 %v2136
        %4072 = vmatpush.msra.mxu0 %v2118
        %4073 = vmatpush.msra.mxu0 %v2100
        %4074 = vmatpush.msra.mxu0 %v2082
        %4075 = vmatpush.msra.mxu0 %v2064
        %4076 = vmatpush.msra.mxu0 %v2046
        %4077 = vmatpush.msra.mxu0 %v2028
        %4078 = vmatpush.msra.mxu0 %v2010
        %4079 = vmatpush.msra.mxu0 %v1992
        %4080 = vmatpush.msra.mxu0 %v1974
        %4081 = vmatpush.msra.mxu0 %v1956
        %4082 = vmatmul.f32.gmra.mxu0 %v3098
        %v4083 = vpop.f32.mrf.mxu0
        %v4084 = vadd.f32 0.0, %v4083
        %4085 = vdwg.mxu0
        %4086 = vmatpush.msra.mxu0 %v2514
        %4087 = vmatpush.msra.mxu0 %v2496
        %4088 = vmatpush.msra.mxu0 %v2478
        %4089 = vmatpush.msra.mxu0 %v2460
        %4090 = vmatpush.msra.mxu0 %v2442
        %4091 = vmatpush.msra.mxu0 %v2424
        %4092 = vmatpush.msra.mxu0 %v2406
        %4093 = vmatpush.msra.mxu0 %v2388
        %4094 = vmatpush.msra.mxu0 %v2370
        %4095 = vmatpush.msra.mxu0 %v2352
        %4096 = vmatpush.msra.mxu0 %v2334
        %4097 = vmatpush.msra.mxu0 %v2316
        %4098 = vmatpush.msra.mxu0 %v2298
        %4099 = vmatpush.msra.mxu0 %v2280
        %4100 = vmatpush.msra.mxu0 %v2262
        %4101 = vmatpush.msra.mxu0 %v2244
        %4102 = vmatmul.f32.gmra.mxu0 %v3099
        %v4103 = vpop.f32.mrf.mxu0
        %v4104 = vadd.f32 %v4084, %v4103
        %4105 = vdwg.mxu0
        %4106 = vmatpush.msra.mxu0 %v2802
        %4107 = vmatpush.msra.mxu0 %v2784
        %4108 = vmatpush.msra.mxu0 %v2766
        %4109 = vmatpush.msra.mxu0 %v2748
        %4110 = vmatpush.msra.mxu0 %v2730
        %4111 = vmatpush.msra.mxu0 %v2712
        %4112 = vmatpush.msra.mxu0 %v2694
        %4113 = vmatpush.msra.mxu0 %v2676
        %4114 = vmatpush.msra.mxu0 %v2658
        %4115 = vmatpush.msra.mxu0 %v2640
        %4116 = vmatpush.msra.mxu0 %v2622
        %4117 = vmatpush.msra.mxu0 %v2604
        %4118 = vmatpush.msra.mxu0 %v2586
        %4119 = vmatpush.msra.mxu0 %v2568
        %4120 = vmatpush.msra.mxu0 %v2550
        %4121 = vmatpush.msra.mxu0 %v2532
        %4122 = vmatmul.f32.gmra.mxu0 %v3100
        %v4123 = vpop.f32.mrf.mxu0
        %v4124 = vadd.f32 %v4104, %v4123
        %4125 = vdwg.mxu0
        %4126 = vmatpush.msra.mxu0 %v3090
        %4127 = vmatpush.msra.mxu0 %v3072
        %4128 = vmatpush.msra.mxu0 %v3054
        %4129 = vmatpush.msra.mxu0 %v3036
        %4130 = vmatpush.msra.mxu0 %v3018
        %4131 = vmatpush.msra.mxu0 %v3000
        %4132 = vmatpush.msra.mxu0 %v2982
        %4133 = vmatpush.msra.mxu0 %v2964
        %4134 = vmatpush.msra.mxu0 %v2946
        %4135 = vmatpush.msra.mxu0 %v2928
        %4136 = vmatpush.msra.mxu0 %v2910
        %4137 = vmatpush.msra.mxu0 %v2892
        %4138 = vmatpush.msra.mxu0 %v2874
        %4139 = vmatpush.msra.mxu0 %v2856
        %4140 = vmatpush.msra.mxu0 %v2838
        %4141 = vmatpush.msra.mxu0 %v2820
        %4142 = vmatmul.f32.gmra.mxu0 %v3101
        %v4143 = vpop.f32.mrf.mxu0
        %v4144 = vadd.f32 %v4124, %v4143
        %4145 = vdwg.mxu0
        %4146 = vmatpush.msra.mxu0 %v2227
        %4147 = vmatpush.msra.mxu0 %v2209
        %4148 = vmatpush.msra.mxu0 %v2191
        %4149 = vmatpush.msra.mxu0 %v2173
        %4150 = vmatpush.msra.mxu0 %v2155
        %4151 = vmatpush.msra.mxu0 %v2137
        %4152 = vmatpush.msra.mxu0 %v2119
        %4153 = vmatpush.msra.mxu0 %v2101
        %4154 = vmatpush.msra.mxu0 %v2083
        %4155 = vmatpush.msra.mxu0 %v2065
        %4156 = vmatpush.msra.mxu0 %v2047
        %4157 = vmatpush.msra.mxu0 %v2029
        %4158 = vmatpush.msra.mxu0 %v2011
        %4159 = vmatpush.msra.mxu0 %v1993
        %4160 = vmatpush.msra.mxu0 %v1975
        %4161 = vmatpush.msra.mxu0 %v1957
        %4162 = vmatmul.f32.gmra.mxu0 %v3098
        %v4163 = vpop.f32.mrf.mxu0
        %v4164 = vadd.f32 0.0, %v4163
        %4165 = vdwg.mxu0
        %4166 = vmatpush.msra.mxu0 %v2515
        %4167 = vmatpush.msra.mxu0 %v2497
        %4168 = vmatpush.msra.mxu0 %v2479
        %4169 = vmatpush.msra.mxu0 %v2461
        %4170 = vmatpush.msra.mxu0 %v2443
        %4171 = vmatpush.msra.mxu0 %v2425
        %4172 = vmatpush.msra.mxu0 %v2407
        %4173 = vmatpush.msra.mxu0 %v2389
        %4174 = vmatpush.msra.mxu0 %v2371
        %4175 = vmatpush.msra.mxu0 %v2353
        %4176 = vmatpush.msra.mxu0 %v2335
        %4177 = vmatpush.msra.mxu0 %v2317
        %4178 = vmatpush.msra.mxu0 %v2299
        %4179 = vmatpush.msra.mxu0 %v2281
        %4180 = vmatpush.msra.mxu0 %v2263
        %4181 = vmatpush.msra.mxu0 %v2245
        %4182 = vmatmul.f32.gmra.mxu0 %v3099
        %v4183 = vpop.f32.mrf.mxu0
        %v4184 = vadd.f32 %v4164, %v4183
        %4185 = vdwg.mxu0
        %4186 = vmatpush.msra.mxu0 %v2803
        %4187 = vmatpush.msra.mxu0 %v2785
        %4188 = vmatpush.msra.mxu0 %v2767
        %4189 = vmatpush.msra.mxu0 %v2749
        %4190 = vmatpush.msra.mxu0 %v2731
        %4191 = vmatpush.msra.mxu0 %v2713
        %4192 = vmatpush.msra.mxu0 %v2695
        %4193 = vmatpush.msra.mxu0 %v2677
        %4194 = vmatpush.msra.mxu0 %v2659
        %4195 = vmatpush.msra.mxu0 %v2641
        %4196 = vmatpush.msra.mxu0 %v2623
        %4197 = vmatpush.msra.mxu0 %v2605
        %4198 = vmatpush.msra.mxu0 %v2587
        %4199 = vmatpush.msra.mxu0 %v2569
        %4200 = vmatpush.msra.mxu0 %v2551
        %4201 = vmatpush.msra.mxu0 %v2533
        %4202 = vmatmul.f32.gmra.mxu0 %v3100
        %v4203 = vpop.f32.mrf.mxu0
        %v4204 = vadd.f32 %v4184, %v4203
        %4205 = vdwg.mxu0
        %4206 = vmatpush.msra.mxu0 %v3091
        %4207 = vmatpush.msra.mxu0 %v3073
        %4208 = vmatpush.msra.mxu0 %v3055
        %4209 = vmatpush.msra.mxu0 %v3037
        %4210 = vmatpush.msra.mxu0 %v3019
        %4211 = vmatpush.msra.mxu0 %v3001
        %4212 = vmatpush.msra.mxu0 %v2983
        %4213 = vmatpush.msra.mxu0 %v2965
        %4214 = vmatpush.msra.mxu0 %v2947
        %4215 = vmatpush.msra.mxu0 %v2929
        %4216 = vmatpush.msra.mxu0 %v2911
        %4217 = vmatpush.msra.mxu0 %v2893
        %4218 = vmatpush.msra.mxu0 %v2875
        %4219 = vmatpush.msra.mxu0 %v2857
        %4220 = vmatpush.msra.mxu0 %v2839
        %4221 = vmatpush.msra.mxu0 %v2821
        %4222 = vmatmul.f32.gmra.mxu0 %v3101
        %v4223 = vpop.f32.mrf.mxu0
        %v4224 = vadd.f32 %v4204, %v4223
        %4225 = vdwg.mxu0
        %4226 = vmatpush.msra.mxu0 %v2228
        %4227 = vmatpush.msra.mxu0 %v2210
        %4228 = vmatpush.msra.mxu0 %v2192
        %4229 = vmatpush.msra.mxu0 %v2174
        %4230 = vmatpush.msra.mxu0 %v2156
        %4231 = vmatpush.msra.mxu0 %v2138
        %4232 = vmatpush.msra.mxu0 %v2120
        %4233 = vmatpush.msra.mxu0 %v2102
        %4234 = vmatpush.msra.mxu0 %v2084
        %4235 = vmatpush.msra.mxu0 %v2066
        %4236 = vmatpush.msra.mxu0 %v2048
        %4237 = vmatpush.msra.mxu0 %v2030
        %4238 = vmatpush.msra.mxu0 %v2012
        %4239 = vmatpush.msra.mxu0 %v1994
        %4240 = vmatpush.msra.mxu0 %v1976
        %4241 = vmatpush.msra.mxu0 %v1958
        %4242 = vmatmul.f32.gmra.mxu0 %v3098
        %v4243 = vpop.f32.mrf.mxu0
        %v4244 = vadd.f32 0.0, %v4243
        %4245 = vdwg.mxu0
        %4246 = vmatpush.msra.mxu0 %v2516
        %4247 = vmatpush.msra.mxu0 %v2498
        %4248 = vmatpush.msra.mxu0 %v2480
        %4249 = vmatpush.msra.mxu0 %v2462
        %4250 = vmatpush.msra.mxu0 %v2444
        %4251 = vmatpush.msra.mxu0 %v2426
        %4252 = vmatpush.msra.mxu0 %v2408
        %4253 = vmatpush.msra.mxu0 %v2390
        %4254 = vmatpush.msra.mxu0 %v2372
        %4255 = vmatpush.msra.mxu0 %v2354
        %4256 = vmatpush.msra.mxu0 %v2336
        %4257 = vmatpush.msra.mxu0 %v2318
        %4258 = vmatpush.msra.mxu0 %v2300
        %4259 = vmatpush.msra.mxu0 %v2282
        %4260 = vmatpush.msra.mxu0 %v2264
        %4261 = vmatpush.msra.mxu0 %v2246
        %4262 = vmatmul.f32.gmra.mxu0 %v3099
        %v4263 = vpop.f32.mrf.mxu0
        %v4264 = vadd.f32 %v4244, %v4263
        %4265 = vdwg.mxu0
        %4266 = vmatpush.msra.mxu0 %v2804
        %4267 = vmatpush.msra.mxu0 %v2786
        %4268 = vmatpush.msra.mxu0 %v2768
        %4269 = vmatpush.msra.mxu0 %v2750
        %4270 = vmatpush.msra.mxu0 %v2732
        %4271 = vmatpush.msra.mxu0 %v2714
        %4272 = vmatpush.msra.mxu0 %v2696
        %4273 = vmatpush.msra.mxu0 %v2678
        %4274 = vmatpush.msra.mxu0 %v2660
        %4275 = vmatpush.msra.mxu0 %v2642
        %4276 = vmatpush.msra.mxu0 %v2624
        %4277 = vmatpush.msra.mxu0 %v2606
        %4278 = vmatpush.msra.mxu0 %v2588
        %4279 = vmatpush.msra.mxu0 %v2570
        %4280 = vmatpush.msra.mxu0 %v2552
        %4281 = vmatpush.msra.mxu0 %v2534
        %4282 = vmatmul.f32.gmra.mxu0 %v3100
        %v4283 = vpop.f32.mrf.mxu0
        %v4284 = vadd.f32 %v4264, %v4283
        %4285 = vdwg.mxu0
        %4286 = vmatpush.msra.mxu0 %v3092
        %4287 = vmatpush.msra.mxu0 %v3074
        %4288 = vmatpush.msra.mxu0 %v3056
        %4289 = vmatpush.msra.mxu0 %v3038
        %4290 = vmatpush.msra.mxu0 %v3020
        %4291 = vmatpush.msra.mxu0 %v3002
        %4292 = vmatpush.msra.mxu0 %v2984
        %4293 = vmatpush.msra.mxu0 %v2966
        %4294 = vmatpush.msra.mxu0 %v2948
        %4295 = vmatpush.msra.mxu0 %v2930
        %4296 = vmatpush.msra.mxu0 %v2912
        %4297 = vmatpush.msra.mxu0 %v2894
        %4298 = vmatpush.msra.mxu0 %v2876
        %4299 = vmatpush.msra.mxu0 %v2858
        %4300 = vmatpush.msra.mxu0 %v2840
        %4301 = vmatpush.msra.mxu0 %v2822
        %4302 = vmatmul.f32.gmra.mxu0 %v3101
        %v4303 = vpop.f32.mrf.mxu0
        %v4304 = vadd.f32 %v4284, %v4303
        %4305 = vdwg.mxu0
        %4306 = vmatpush.msra.mxu0 %v2229
        %4307 = vmatpush.msra.mxu0 %v2211
        %4308 = vmatpush.msra.mxu0 %v2193
        %4309 = vmatpush.msra.mxu0 %v2175
        %4310 = vmatpush.msra.mxu0 %v2157
        %4311 = vmatpush.msra.mxu0 %v2139
        %4312 = vmatpush.msra.mxu0 %v2121
        %4313 = vmatpush.msra.mxu0 %v2103
        %4314 = vmatpush.msra.mxu0 %v2085
        %4315 = vmatpush.msra.mxu0 %v2067
        %4316 = vmatpush.msra.mxu0 %v2049
        %4317 = vmatpush.msra.mxu0 %v2031
        %4318 = vmatpush.msra.mxu0 %v2013
        %4319 = vmatpush.msra.mxu0 %v1995
        %4320 = vmatpush.msra.mxu0 %v1977
        %4321 = vmatpush.msra.mxu0 %v1959
        %4322 = vmatmul.f32.gmra.mxu0 %v3098
        %v4323 = vpop.f32.mrf.mxu0
        %v4324 = vadd.f32 0.0, %v4323
        %4325 = vdwg.mxu0
        %4326 = vmatpush.msra.mxu0 %v2517
        %4327 = vmatpush.msra.mxu0 %v2499
        %4328 = vmatpush.msra.mxu0 %v2481
        %4329 = vmatpush.msra.mxu0 %v2463
        %4330 = vmatpush.msra.mxu0 %v2445
        %4331 = vmatpush.msra.mxu0 %v2427
        %4332 = vmatpush.msra.mxu0 %v2409
        %4333 = vmatpush.msra.mxu0 %v2391
        %4334 = vmatpush.msra.mxu0 %v2373
        %4335 = vmatpush.msra.mxu0 %v2355
        %4336 = vmatpush.msra.mxu0 %v2337
        %4337 = vmatpush.msra.mxu0 %v2319
        %4338 = vmatpush.msra.mxu0 %v2301
        %4339 = vmatpush.msra.mxu0 %v2283
        %4340 = vmatpush.msra.mxu0 %v2265
        %4341 = vmatpush.msra.mxu0 %v2247
        %4342 = vmatmul.f32.gmra.mxu0 %v3099
        %v4343 = vpop.f32.mrf.mxu0
        %v4344 = vadd.f32 %v4324, %v4343
        %4345 = vdwg.mxu0
        %4346 = vmatpush.msra.mxu0 %v2805
        %4347 = vmatpush.msra.mxu0 %v2787
        %4348 = vmatpush.msra.mxu0 %v2769
        %4349 = vmatpush.msra.mxu0 %v2751
        %4350 = vmatpush.msra.mxu0 %v2733
        %4351 = vmatpush.msra.mxu0 %v2715
        %4352 = vmatpush.msra.mxu0 %v2697
        %4353 = vmatpush.msra.mxu0 %v2679
        %4354 = vmatpush.msra.mxu0 %v2661
        %4355 = vmatpush.msra.mxu0 %v2643
        %4356 = vmatpush.msra.mxu0 %v2625
        %4357 = vmatpush.msra.mxu0 %v2607
        %4358 = vmatpush.msra.mxu0 %v2589
        %4359 = vmatpush.msra.mxu0 %v2571
        %4360 = vmatpush.msra.mxu0 %v2553
        %4361 = vmatpush.msra.mxu0 %v2535
        %4362 = vmatmul.f32.gmra.mxu0 %v3100
        %v4363 = vpop.f32.mrf.mxu0
        %v4364 = vadd.f32 %v4344, %v4363
        %4365 = vdwg.mxu0
        %4366 = vmatpush.msra.mxu0 %v3093
        %4367 = vmatpush.msra.mxu0 %v3075
        %4368 = vmatpush.msra.mxu0 %v3057
        %4369 = vmatpush.msra.mxu0 %v3039
        %4370 = vmatpush.msra.mxu0 %v3021
        %4371 = vmatpush.msra.mxu0 %v3003
        %4372 = vmatpush.msra.mxu0 %v2985
        %4373 = vmatpush.msra.mxu0 %v2967
        %4374 = vmatpush.msra.mxu0 %v2949
        %4375 = vmatpush.msra.mxu0 %v2931
        %4376 = vmatpush.msra.mxu0 %v2913
        %4377 = vmatpush.msra.mxu0 %v2895
        %4378 = vmatpush.msra.mxu0 %v2877
        %4379 = vmatpush.msra.mxu0 %v2859
        %4380 = vmatpush.msra.mxu0 %v2841
        %4381 = vmatpush.msra.mxu0 %v2823
        %4382 = vmatmul.f32.gmra.mxu0 %v3101
        %v4383 = vpop.f32.mrf.mxu0
        %v4384 = vadd.f32 %v4364, %v4383
        %4385 = vdwg.mxu0
        %4386 = vmatpush.msra.mxu0 %v2230
        %4387 = vmatpush.msra.mxu0 %v2212
        %4388 = vmatpush.msra.mxu0 %v2194
        %4389 = vmatpush.msra.mxu0 %v2176
        %4390 = vmatpush.msra.mxu0 %v2158
        %4391 = vmatpush.msra.mxu0 %v2140
        %4392 = vmatpush.msra.mxu0 %v2122
        %4393 = vmatpush.msra.mxu0 %v2104
        %4394 = vmatpush.msra.mxu0 %v2086
        %4395 = vmatpush.msra.mxu0 %v2068
        %4396 = vmatpush.msra.mxu0 %v2050
        %4397 = vmatpush.msra.mxu0 %v2032
        %4398 = vmatpush.msra.mxu0 %v2014
        %4399 = vmatpush.msra.mxu0 %v1996
        %4400 = vmatpush.msra.mxu0 %v1978
        %4401 = vmatpush.msra.mxu0 %v1960
        %4402 = vmatmul.f32.gmra.mxu0 %v3098
        %v4403 = vpop.f32.mrf.mxu0
        %v4404 = vadd.f32 0.0, %v4403
        %4405 = vdwg.mxu0
        %4406 = vmatpush.msra.mxu0 %v2518
        %4407 = vmatpush.msra.mxu0 %v2500
        %4408 = vmatpush.msra.mxu0 %v2482
        %4409 = vmatpush.msra.mxu0 %v2464
        %4410 = vmatpush.msra.mxu0 %v2446
        %4411 = vmatpush.msra.mxu0 %v2428
        %4412 = vmatpush.msra.mxu0 %v2410
        %4413 = vmatpush.msra.mxu0 %v2392
        %4414 = vmatpush.msra.mxu0 %v2374
        %4415 = vmatpush.msra.mxu0 %v2356
        %4416 = vmatpush.msra.mxu0 %v2338
        %4417 = vmatpush.msra.mxu0 %v2320
        %4418 = vmatpush.msra.mxu0 %v2302
        %4419 = vmatpush.msra.mxu0 %v2284
        %4420 = vmatpush.msra.mxu0 %v2266
        %4421 = vmatpush.msra.mxu0 %v2248
        %4422 = vmatmul.f32.gmra.mxu0 %v3099
        %v4423 = vpop.f32.mrf.mxu0
        %v4424 = vadd.f32 %v4404, %v4423
        %4425 = vdwg.mxu0
        %4426 = vmatpush.msra.mxu0 %v2806
        %4427 = vmatpush.msra.mxu0 %v2788
        %4428 = vmatpush.msra.mxu0 %v2770
        %4429 = vmatpush.msra.mxu0 %v2752
        %4430 = vmatpush.msra.mxu0 %v2734
        %4431 = vmatpush.msra.mxu0 %v2716
        %4432 = vmatpush.msra.mxu0 %v2698
        %4433 = vmatpush.msra.mxu0 %v2680
        %4434 = vmatpush.msra.mxu0 %v2662
        %4435 = vmatpush.msra.mxu0 %v2644
        %4436 = vmatpush.msra.mxu0 %v2626
        %4437 = vmatpush.msra.mxu0 %v2608
        %4438 = vmatpush.msra.mxu0 %v2590
        %4439 = vmatpush.msra.mxu0 %v2572
        %4440 = vmatpush.msra.mxu0 %v2554
        %4441 = vmatpush.msra.mxu0 %v2536
        %4442 = vmatmul.f32.gmra.mxu0 %v3100
        %v4443 = vpop.f32.mrf.mxu0
        %v4444 = vadd.f32 %v4424, %v4443
        %4445 = vdwg.mxu0
        %4446 = vmatpush.msra.mxu0 %v3094
        %4447 = vmatpush.msra.mxu0 %v3076
        %4448 = vmatpush.msra.mxu0 %v3058
        %4449 = vmatpush.msra.mxu0 %v3040
        %4450 = vmatpush.msra.mxu0 %v3022
        %4451 = vmatpush.msra.mxu0 %v3004
        %4452 = vmatpush.msra.mxu0 %v2986
        %4453 = vmatpush.msra.mxu0 %v2968
        %4454 = vmatpush.msra.mxu0 %v2950
        %4455 = vmatpush.msra.mxu0 %v2932
        %4456 = vmatpush.msra.mxu0 %v2914
        %4457 = vmatpush.msra.mxu0 %v2896
        %4458 = vmatpush.msra.mxu0 %v2878
        %4459 = vmatpush.msra.mxu0 %v2860
        %4460 = vmatpush.msra.mxu0 %v2842
        %4461 = vmatpush.msra.mxu0 %v2824
        %4462 = vmatmul.f32.gmra.mxu0 %v3101
        %v4463 = vpop.f32.mrf.mxu0
        %v4464 = vadd.f32 %v4444, %v4463
        %4465 = vdwg.mxu0
        %4466 = vmatpush.msra.mxu0 %v2231
        %4467 = vmatpush.msra.mxu0 %v2213
        %4468 = vmatpush.msra.mxu0 %v2195
        %4469 = vmatpush.msra.mxu0 %v2177
        %4470 = vmatpush.msra.mxu0 %v2159
        %4471 = vmatpush.msra.mxu0 %v2141
        %4472 = vmatpush.msra.mxu0 %v2123
        %4473 = vmatpush.msra.mxu0 %v2105
        %4474 = vmatpush.msra.mxu0 %v2087
        %4475 = vmatpush.msra.mxu0 %v2069
        %4476 = vmatpush.msra.mxu0 %v2051
        %4477 = vmatpush.msra.mxu0 %v2033
        %4478 = vmatpush.msra.mxu0 %v2015
        %4479 = vmatpush.msra.mxu0 %v1997
        %4480 = vmatpush.msra.mxu0 %v1979
        %4481 = vmatpush.msra.mxu0 %v1961
        %4482 = vmatmul.f32.gmra.mxu0 %v3098
        %v4483 = vpop.f32.mrf.mxu0
        %v4484 = vadd.f32 0.0, %v4483
        %4485 = vdwg.mxu0
        %4486 = vmatpush.msra.mxu0 %v2519
        %4487 = vmatpush.msra.mxu0 %v2501
        %4488 = vmatpush.msra.mxu0 %v2483
        %4489 = vmatpush.msra.mxu0 %v2465
        %4490 = vmatpush.msra.mxu0 %v2447
        %4491 = vmatpush.msra.mxu0 %v2429
        %4492 = vmatpush.msra.mxu0 %v2411
        %4493 = vmatpush.msra.mxu0 %v2393
        %4494 = vmatpush.msra.mxu0 %v2375
        %4495 = vmatpush.msra.mxu0 %v2357
        %4496 = vmatpush.msra.mxu0 %v2339
        %4497 = vmatpush.msra.mxu0 %v2321
        %4498 = vmatpush.msra.mxu0 %v2303
        %4499 = vmatpush.msra.mxu0 %v2285
        %4500 = vmatpush.msra.mxu0 %v2267
        %4501 = vmatpush.msra.mxu0 %v2249
        %4502 = vmatmul.f32.gmra.mxu0 %v3099
        %v4503 = vpop.f32.mrf.mxu0
        %v4504 = vadd.f32 %v4484, %v4503
        %4505 = vdwg.mxu0
        %4506 = vmatpush.msra.mxu0 %v2807
        %4507 = vmatpush.msra.mxu0 %v2789
        %4508 = vmatpush.msra.mxu0 %v2771
        %4509 = vmatpush.msra.mxu0 %v2753
        %4510 = vmatpush.msra.mxu0 %v2735
        %4511 = vmatpush.msra.mxu0 %v2717
        %4512 = vmatpush.msra.mxu0 %v2699
        %4513 = vmatpush.msra.mxu0 %v2681
        %4514 = vmatpush.msra.mxu0 %v2663
        %4515 = vmatpush.msra.mxu0 %v2645
        %4516 = vmatpush.msra.mxu0 %v2627
        %4517 = vmatpush.msra.mxu0 %v2609
        %4518 = vmatpush.msra.mxu0 %v2591
        %4519 = vmatpush.msra.mxu0 %v2573
        %4520 = vmatpush.msra.mxu0 %v2555
        %4521 = vmatpush.msra.mxu0 %v2537
        %4522 = vmatmul.f32.gmra.mxu0 %v3100
        %v4523 = vpop.f32.mrf.mxu0
        %v4524 = vadd.f32 %v4504, %v4523
        %4525 = vdwg.mxu0
        %4526 = vmatpush.msra.mxu0 %v3095
        %4527 = vmatpush.msra.mxu0 %v3077
        %4528 = vmatpush.msra.mxu0 %v3059
        %4529 = vmatpush.msra.mxu0 %v3041
        %4530 = vmatpush.msra.mxu0 %v3023
        %4531 = vmatpush.msra.mxu0 %v3005
        %4532 = vmatpush.msra.mxu0 %v2987
        %4533 = vmatpush.msra.mxu0 %v2969
        %4534 = vmatpush.msra.mxu0 %v2951
        %4535 = vmatpush.msra.mxu0 %v2933
        %4536 = vmatpush.msra.mxu0 %v2915
        %4537 = vmatpush.msra.mxu0 %v2897
        %4538 = vmatpush.msra.mxu0 %v2879
        %4539 = vmatpush.msra.mxu0 %v2861
        %4540 = vmatpush.msra.mxu0 %v2843
        %4541 = vmatpush.msra.mxu0 %v2825
        %4542 = vmatmul.f32.gmra.mxu0 %v3101
        %v4543 = vpop.f32.mrf.mxu0
        %v4544 = vadd.f32 %v4524, %v4543
        %4545 = vdwg.mxu0
        %v4546 = vmul.f32 %v3184, 0.044194173
        %v4547 = vmul.f32 %v3264, 0.044194173
        %v4548 = vmul.f32 %v3344, 0.044194173
        %v4549 = vmul.f32 %v3424, 0.044194173
        %v4550 = vmul.f32 %v3504, 0.044194173
        %v4551 = vmul.f32 %v3584, 0.044194173
        %v4552 = vmul.f32 %v3664, 0.044194173
        %v4553 = vmul.f32 %v3744, 0.044194173
        %v4554 = vmul.f32 %v3824, 0.044194173
        %v4555 = vmul.f32 %v3904, 0.044194173
        %v4556 = vmul.f32 %v3984, 0.044194173
        %v4557 = vmul.f32 %v4064, 0.044194173
        %v4558 = vmul.f32 %v4144, 0.044194173
        %v4559 = vmul.f32 %v4224, 0.044194173
        %v4560 = vmul.f32 %v4304, 0.044194173
        %v4561 = vmul.f32 %v4384, 0.044194173
        %v4562 = vmul.f32 %v4464, 0.044194173
        %v4563 = vmul.f32 %v4544, 0.044194173
        %v4564 = vld [vmem:[%s373] sm:$0xff]
        %v4565 = vld [vmem:[%s373 + $0x8] sm:$0xff]
        %v4566 = vld [vmem:[%s373 + $0x10] sm:$0x3]
        %v4570 = vperm.slane %v4564, 0
        %v4571 = vperm.slane %v4564, 1
        %v4572 = vperm.slane %v4564, 2
        %v4573 = vperm.slane %v4564, 3
        %v4574 = vperm.slane %v4564, 4
        %v4575 = vperm.slane %v4564, 5
        %v4576 = vperm.slane %v4564, 6
        %v4577 = vperm.slane %v4564, 7
        %v4578 = vperm.slane %v4565, 0
        %v4579 = vperm.slane %v4565, 1
        %v4580 = vperm.slane %v4565, 2
        %v4581 = vperm.slane %v4565, 3
        %v4582 = vperm.slane %v4565, 4
        %v4583 = vperm.slane %v4565, 5
        %v4584 = vperm.slane %v4565, 6
        %v4585 = vperm.slane %v4565, 7
        %v4586 = vperm.slane %v4566, 0
        %v4587 = vperm.slane %v4566, 1
        %v4606 = vadd.f32 %v4546, %v4570
        %v4607 = vadd.f32 %v4547, %v4571
        %v4608 = vadd.f32 %v4548, %v4572
        %v4609 = vadd.f32 %v4549, %v4573
        %v4610 = vadd.f32 %v4550, %v4574
        %v4611 = vadd.f32 %v4551, %v4575
        %v4612 = vadd.f32 %v4552, %v4576
        %v4613 = vadd.f32 %v4553, %v4577
        %v4614 = vadd.f32 %v4554, %v4578
        %v4615 = vadd.f32 %v4555, %v4579
        %v4616 = vadd.f32 %v4556, %v4580
        %v4617 = vadd.f32 %v4557, %v4581
        %v4618 = vadd.f32 %v4558, %v4582
        %v4619 = vadd.f32 %v4559, %v4583
        %v4620 = vadd.f32 %v4560, %v4584
        %v4621 = vadd.f32 %v4561, %v4585
        %v4622 = vadd.f32 %v4562, %v4586
        %v4623 = vadd.f32 %v4563, %v4587
        %v4642 = vrot.slane %v4607, 6
        %v4643 = vrot.slane %v4608, 4
        %v4644 = vrot.slane %v4609, 2
        %v4645 = vrot.slane %v4611, 6
        %v4646 = vrot.slane %v4612, 4
        %v4647 = vrot.slane %v4613, 2
        %v4648 = vrot.slane %v4615, 6
        %v4649 = vrot.slane %v4616, 4
        %v4650 = vrot.slane %v4617, 2
        %v4651 = vrot.slane %v4619, 6
        %v4652 = vrot.slane %v4620, 4
        %v4653 = vrot.slane %v4621, 2
        %v4654 = vrot.slane %v4623, 6
        %vm4655 = vcmask 1041408
        %v4656 = vsel %vm4655, %v4606, %v4642
        %vm4657 = vcmask 1045508
        %v4658 = vsel %vm4657, %v4643, %v4644
        %vm4659 = vcmask 1043456
        %v4660 = vsel %vm4659, %v4656, %v4658
        %v4661 = vsel %vm4655, %v4610, %v4645
        %v4662 = vsel %vm4657, %v4646, %v4647
        %v4663 = vsel %vm4659, %v4661, %v4662
        %v4664 = vsel %vm4655, %v4614, %v4648
        %v4665 = vsel %vm4657, %v4649, %v4650
        %v4666 = vsel %vm4659, %v4664, %v4665
        %v4667 = vsel %vm4655, %v4618, %v4651
        %v4668 = vsel %vm4657, %v4652, %v4653
        %v4669 = vsel %vm4659, %v4667, %v4668
        %v4670 = vsel %vm4655, %v4622, %v4654
        %4676 = vst [vmem:[%s420] sm:$0xff] %v4660
        %4677 = vst [vmem:[%s420 + $0x8] sm:$0xff] %v4663
        %4678 = vst [vmem:[%s420 + $0x10] sm:$0xff] %v4666
        %4679 = vst [vmem:[%s420 + $0x18] sm:$0xff] %v4669
        %4680 = vst [vmem:[%s420 + $0x20] sm:$0xf] %v4670
        %s4681 = sand.u32 %s184, 1
        %s4682 = scalar_lea.sflag [#allocation5], %s4681
        %s4683 = sand.u32 %s184, 1
        %s4684 = smul.addr %s4683, 36
        %s4685 = scalar_lea.vmem [#allocation12], %s4684
        // Predicated region
        $region65: #{tpu_custom_call.1} parent=39 // pred_check
          %p4686 = pneg %p194
        $region66: #{tpu_custom_call.1} parent=39 // pred_check_branch
          %4688 = sbr.rel (%p4686) target = $region68
        $region67: #{tpu_custom_call.1} parent=39 // pred_region
          %s4689 = smul.u32 18, %s33
          %4691 = vsyncadd %s4682, 0
          %s4692 = smul.addr %s32, 72
          %s4693 = sadd.s32 %s4689, %s4692
          %s4694 = smul.addr %s4693, 2
          %s4695 = scalar_lea.hbm %s5, %s4694
          %s4697 = sshll.u32 %s4685, 4
          %s4698 = int_to_ptr.vmem [resolvable:$true] %s4697
          %s4699 = sshll.u32 %s4695, 4
          %s4700 = int_to_ptr.hbm [resolvable:$true] %s4699
          %4702 = dma.vmem_to_hbm [thread:$0]  %s4698, 576, %s4700, %s4682
        $region68: #{tpu_custom_call.1} parent=39 // pred_fallthru
          _
      $region40: #{tpu_custom_call.1} parent=5 // pred_fallthru
        _
      %p4703 = scmp.le.s32.totalorder 2, %s23
      // Predicated region
      $region69: #{tpu_custom_call.1} parent=5 // pred_check
        %p4704 = pneg %p4703
      $region70: #{tpu_custom_call.1} parent=5 // pred_check_branch
        %4706 = sbr.rel (%p4704) target = $region72
      $region71: #{tpu_custom_call.1} parent=5 // pred_region
        %s4707 = ssub.s32 %s23, 2
        // Predicated region
        $region73: #{tpu_custom_call.1} parent=71 // pred_check
          %p4708 = pneg %p200
        $region74: #{tpu_custom_call.1} parent=71 // pred_check_branch
          %4710 = sbr.rel (%p4708) target = $region76
        $region75: #{tpu_custom_call.1} parent=71 // pred_region
          %s4711 = sand.u32 %s185, 1
          %s4712 = scalar_lea.sflag [#allocation5], %s4711
          %s4713 = sand.u32 %s185, 1
          %s4714 = smul.addr %s4713, 36
          %s4715 = scalar_lea.vmem [#allocation12], %s4714
          %4717 = dma.done %s4712, 576
        $region76: #{tpu_custom_call.1} parent=71 // pred_fallthru
          _
      $region72: #{tpu_custom_call.1} parent=5 // pred_fallthru
        _
    $region6: #{tpu_custom_call.1} parent=1 // loop_footer
      %s27 = sadd.s32 1, %s23
    $region7: #{tpu_custom_call.1} parent=1 // loop_footer_branch
      %22 = sbr.rel target = $region3
    $region8: #{tpu_custom_call.1} parent=1 // loop_exit
      _
    %4718 = vsyncpa [#allocation4], 1
    %s4719 = scalar_lea.sflag [#allocation4], 1
    %4720 = vsyncpa %s4719, 1
    %4721 = vsyncpa [#allocation7], 1
    %s4722 = scalar_lea.sflag [#allocation7], 1
    %4723 = vsyncpa %s4722, 1
    %4724 = vsyncpa [#allocation10], 1
    %s4725 = scalar_lea.sflag [#allocation10], 1
    %4726 = vsyncpa %s4725, 1
    %4727 = vsyncpa [#allocation5], 1
    %s4728 = scalar_lea.sflag [#allocation5], 1
    %4729 = vsyncpa %s4728, 1

</llo_original>
